<compile_context>
chip_gen: v6e
topology: v6e:2x2x1
jax: 0.10.0
libtpu: 0.0.40
codegen_flags: <defaults>
</compile_context>

<pallas_src>
import jax
import jax.numpy as jnp
from jax.experimental import pallas as pl
from jax.experimental.pallas import tpu as pltpu

_ANCHORS = [(10, 13), (16, 30), (33, 23), (30, 61), (62, 45), (59, 119),
            (116, 90), (156, 198), (373, 326)]
_MODEL_SIZE = (416, 416)
_NUM_CLASS = 80
_LANE = 128


def _make_kernel(*, P, t_hw, HW, W, box, s0, s1, anchors):
    """Build the fused conv + YOLO-decode kernel with static constants baked in."""
    a0x, a0y = anchors[0]
    a1x, a1y = anchors[1]
    a2x, a2y = anchors[2]
    inv_box = 1.0 / float(box)
    inv3 = 1.0 / 3.0
    invW = 1.0 / float(W)

    def kernel(x_ref, w_ref, b_ref, o_ref):
        # ---- 1x1 conv as an MXU matmul -------------------------------------
        x = x_ref[0]                                                  # (C, t_hw)
        y = jnp.dot(w_ref[...], x, preferred_element_type=jnp.float32)  # (P, t_hw)
        y = y + b_ref[...]

        # ---- decode parameters generated in-kernel (no HBM param streams) ---
        j = pl.program_id(1)
        p_idx = jax.lax.broadcasted_iota(jnp.int32, (P, t_hw), 0).astype(jnp.float32)
        h_loc = jax.lax.broadcasted_iota(jnp.int32, (P, t_hw), 1).astype(jnp.float32)
        h_idx = h_loc + (j * t_hw).astype(jnp.float32)
        # flat index in the torch `.view(-1, 3*H*W, 85)` layout.  All values are
        # < 2**24, so the (x + 0.5) * (1/d) -> floor trick below computes the
        # integer div/mod exactly in f32 (only iota/mul/add/floor/cmp on VPU).
        flat = p_idx * float(HW) + h_idx
        row = jnp.floor((flat + 0.5) * inv_box)      # viewed row  r = flat // 85
        col = flat - float(box) * row                # viewed col  c = flat %  85
        cell = jnp.floor((row + 0.5) * inv3)         # grid cell     = r // 3
        a = row - 3.0 * cell                         # anchor index  = r %  3
        xi = jnp.floor((cell + 0.5) * invW)          # x offset      = cell // W
        yj = cell - float(W) * xi                    # y offset      = cell %  W

        is0 = col == 0.0
        is1 = col == 1.0
        is2 = col == 2.0
        is3 = col == 3.0
        anc_x = jnp.where(a == 0.0, a0x, jnp.where(a == 1.0, a1x, a2x))
        anc_y = jnp.where(a == 0.0, a0y, jnp.where(a == 1.0, a1y, a2y))
        scale = jnp.where(is0, s0,
                jnp.where(is1, s1,
                jnp.where(is2, anc_x,
                jnp.where(is3, anc_y, 1.0))))
        add = jnp.where(is0, xi * s0, jnp.where(is1, yj * s1, 0.0))
        use_exp = is2 | is3                          # box_shapes columns -> exp

        # ---- single-exp epilogue --------------------------------------------
        # e = exp(-y);  exp(y) = 1/e,  sigmoid(y) = 1/(1+e)
        e = jnp.exp(-y)
        denom = jnp.where(use_exp, e, 1.0 + e)
        f = pl.reciprocal(denom)                     # exact (keeps 1e-4 rtol)
        o_ref[0] = f * scale + add

    return kernel


def yolo_layer_forward(x_nchw, weight, bias, num_branch):
    N, C, H, W = x_nchw.shape
    HW = H * W
    n_anchors = 3
    box = 5 + _NUM_CLASS                      # 85
    planes = n_anchors * box                  # 255
    P = 256                                   # planes padded (sublane multiple)

    anchors = [(float(ax), float(ay))
               for (ax, ay) in _ANCHORS[num_branch * 3:num_branch * 3 + 3]]
    s0 = float(_MODEL_SIZE[0] // H)
    s1 = float(_MODEL_SIZE[1] // W)

    # Lane-dense HW padding; HW tile = largest multiple of 128 (<= 1024) that
    # divides the padded extent (169->256, 676->768, 2704->2816, ...).
    HW_pad = ((HW + _LANE - 1) // _LANE) * _LANE
    t_hw = _LANE
    for cand in range(1024, _LANE - 1, -_LANE):
        if HW_pad % cand == 0:
            t_hw = cand
            break
    n_hw = HW_pad // t_hw

    x_flat = x_nchw.reshape(N, C, HW).astype(jnp.float32)
    if HW_pad != HW:
        x_flat = jnp.pad(x_flat, ((0, 0), (0, 0), (0, HW_pad - HW)))
    w2 = weight.reshape(planes, C).astype(jnp.float32)
    b2 = bias.reshape(planes, 1).astype(jnp.float32)
    if P != planes:
        w2 = jnp.pad(w2, ((0, P - planes), (0, 0)))
        b2 = jnp.pad(b2, ((0, P - planes), (0, 0)))

    kernel = _make_kernel(P=P, t_hw=t_hw, HW=HW, W=W, box=box,
                          s0=s0, s1=s1, anchors=anchors)

    cost = pl.CostEstimate(
        flops=2 * N * P * C * HW_pad,
        transcendentals=N * P * HW_pad,
        bytes_accessed=4 * (N * C * HW_pad + P * C + P + N * P * HW_pad))

    out = pl.pallas_call(
        kernel,
        out_shape=jax.ShapeDtypeStruct((N, P, HW_pad), jnp.float32),
        grid_spec=pltpu.PrefetchScalarGridSpec(
            num_scalar_prefetch=0,
            grid=(N, n_hw),
            in_specs=[
                pl.BlockSpec((1, C, t_hw), lambda n, j: (n, 0, j)),
                pl.BlockSpec((P, C), lambda n, j: (0, 0)),
                pl.BlockSpec((P, 1), lambda n, j: (0, 0)),
            ],
            out_specs=pl.BlockSpec((1, P, t_hw), lambda n, j: (n, 0, j)),
        ),
        compiler_params=pltpu.CompilerParams(
            dimension_semantics=("parallel", "parallel"),
            vmem_limit_bytes=32 * 1024 * 1024),
        cost_estimate=cost,
    )(x_flat, w2, b2)

    # Drop padding, then reproduce torch's .view on the NCHW conv output.
    out = out[:, :planes, :HW]
    return out.reshape(N, n_anchors * HW, box)


def yolo_layer_ref(x_nchw, weight, bias, num_branch):
    """Pure-JAX reference reproducing the PyTorch forward exactly."""
    N, C, H, W = x_nchw.shape
    HW = H * W
    planes = 3 * (5 + _NUM_CLASS)
    y = jnp.einsum('oc,nchw->nohw', weight.reshape(planes, C), x_nchw)
    y = y + bias.reshape(1, planes, 1, 1)
    v = y.reshape(N, 3 * HW, 5 + _NUM_CLASS)
    stride = jnp.asarray([_MODEL_SIZE[0] // H, _MODEL_SIZE[1] // W],
                         jnp.float32)
    anchors = jnp.asarray(_ANCHORS[num_branch * 3:num_branch * 3 + 3],
                          jnp.float32)
    r = jnp.arange(3 * HW)
    cell = r // 3
    xy = jnp.stack([cell // W, cell % W], -1).astype(jnp.float32)  # (3HW, 2)
    a = anchors[r % 3]                                             # (3HW, 2)
    bc = (jax.nn.sigmoid(v[..., 0:2]) + xy) * stride
    bs = jnp.exp(v[..., 2:4]) * a
    conf = jax.nn.sigmoid(v[..., 4:5])
    cls = jax.nn.sigmoid(v[..., 5:])
    return jnp.concatenate([bc, bs, conf, cls], axis=-1)


if __name__ == "__main__":
    key = jax.random.PRNGKey(0)
    k1, k2, k3 = jax.random.split(key, 3)
    N, C, H, W = 2, 4, 16, 16
    num_branch = 0
    planes = 3 * (5 + _NUM_CLASS)

    x = jax.random.normal(k1, (N, C, H, W), jnp.float32)
    # Deterministic synthetic conv params (the torch module creates a fresh
    # Conv2d(in_planes, 255, 1, bias=True) inside forward).
    weight = jax.random.normal(k2, (planes, C, 1, 1), jnp.float32) * 0.1
    bias = jax.random.normal(k3, (planes,), jnp.float32) * 0.1

    out = jax.block_until_ready(yolo_layer_forward(x, weight, bias, num_branch))
    ref = yolo_layer_ref(x, weight, bias, num_branch)

    assert out.shape == (N, 3 * H * W, 5 + _NUM_CLASS)
    assert jnp.allclose(out, ref, rtol=1e-4, atol=1e-3), "mismatch vs reference"
    # TODO(synk): target_processing is a pass-through in the reference (returns
    # targets unchanged and does not affect the output), so it is not kernelized.
    print("KERNEL_OK")
</pallas_src>

<mosaic_0001>
module attributes {stable_mosaic.version = 11 : i64} {
  func.func @kernel(%arg0: i32, %arg1: i32, %arg2: memref<1x4x256xf32, #tpu.memory_space<vmem>>, %arg3: memref<256x4xf32, #tpu.memory_space<vmem>>, %arg4: memref<256x1xf32, #tpu.memory_space<vmem>>, %arg5: memref<1x256x256xf32, #tpu.memory_space<vmem>>) attributes {dimension_semantics = [#tpu.dimension_semantics<parallel>, #tpu.dimension_semantics<parallel>], iteration_bounds = array<i64: 2, 1>, scalar_prefetch = 0 : i64, scratch_operands = 0 : i64, tpu.core_type = #tpu.core_type<tc>, window_params = [{transform_indices = @transform_0, window_bounds = array<i64: 1, 4, 256>}, {pipeline_mode = #tpu.pipeline_mode<synchronous>, transform_indices = @transform_1, window_bounds = array<i64: 256, 4>}, {pipeline_mode = #tpu.pipeline_mode<synchronous>, transform_indices = @transform_2, window_bounds = array<i64: 256, 1>}, {transform_indices = @transform_3, window_bounds = array<i64: 1, 256, 256>}]} {
    %c0 = arith.constant 0 : index
    %c0_0 = arith.constant 0 : index
    %c0_1 = arith.constant 0 : index
    %0 = vector.load %arg2[%c0, %c0_0, %c0_1] : memref<1x4x256xf32, #tpu.memory_space<vmem>>, vector<1x4x256xf32>
    %1 = vector.shape_cast %0 : vector<1x4x256xf32> to vector<4x256xf32>
    %c0_2 = arith.constant 0 : index
    %c0_3 = arith.constant 0 : index
    %2 = vector.load %arg3[%c0_2, %c0_3] : memref<256x4xf32, #tpu.memory_space<vmem>>, vector<256x4xf32>
    %cst = arith.constant dense<0.000000e+00> : vector<256x256xf32>
    %3 = tpu.matmul %2, %1, %cst {dimension_numbers = #tpu.dot_dimension_numbers<[1], [0], [0], [1], [0, 0, 1, 1], [], []>} : vector<256x4xf32>, vector<4x256xf32>, vector<256x256xf32> -> vector<256x256xf32>
    %c0_4 = arith.constant 0 : index
    %c0_5 = arith.constant 0 : index
    %4 = vector.load %arg4[%c0_4, %c0_5] : memref<256x1xf32, #tpu.memory_space<vmem>>, vector<256x1xf32>
    %5 = vector.broadcast %4 : vector<256x1xf32> to vector<256x256xf32>
    %6 = arith.addf %3, %5 : vector<256x256xf32>
    %7 = tpu.iota {dimensions = array<i32: 0>} : vector<256x256xi32>
    %8 = arith.sitofp %7 : vector<256x256xi32> to vector<256x256xf32>
    %9 = tpu.iota {dimensions = array<i32: 1>} : vector<256x256xi32>
    %10 = arith.sitofp %9 : vector<256x256xi32> to vector<256x256xf32>
    %c256_i32 = arith.constant 256 : i32
    %11 = arith.muli %arg1, %c256_i32 : i32
    %12 = arith.sitofp %11 : i32 to f32
    %13 = vector.broadcast %12 : f32 to vector<256x256xf32>
    %14 = arith.addf %10, %13 : vector<256x256xf32>
    %cst_6 = arith.constant 2.560000e+02 : f32
    %15 = vector.broadcast %cst_6 : f32 to vector<256x256xf32>
    %16 = arith.mulf %8, %15 : vector<256x256xf32>
    %17 = arith.addf %16, %14 : vector<256x256xf32>
    %cst_7 = arith.constant 5.000000e-01 : f32
    %18 = vector.broadcast %cst_7 : f32 to vector<256x256xf32>
    %19 = arith.addf %17, %18 : vector<256x256xf32>
    %cst_8 = arith.constant 0.0117647061 : f32
    %20 = vector.broadcast %cst_8 : f32 to vector<256x256xf32>
    %21 = arith.mulf %19, %20 : vector<256x256xf32>
    %22 = math.floor %21 : vector<256x256xf32>
    %cst_9 = arith.constant 8.500000e+01 : f32
    %23 = vector.broadcast %cst_9 : f32 to vector<256x256xf32>
    %24 = arith.mulf %23, %22 : vector<256x256xf32>
    %25 = arith.subf %17, %24 : vector<256x256xf32>
    %cst_10 = arith.constant 5.000000e-01 : f32
    %26 = vector.broadcast %cst_10 : f32 to vector<256x256xf32>
    %27 = arith.addf %22, %26 : vector<256x256xf32>
    %cst_11 = arith.constant 0.333333343 : f32
    %28 = vector.broadcast %cst_11 : f32 to vector<256x256xf32>
    %29 = arith.mulf %27, %28 : vector<256x256xf32>
    %30 = math.floor %29 : vector<256x256xf32>
    %cst_12 = arith.constant 3.000000e+00 : f32
    %31 = vector.broadcast %cst_12 : f32 to vector<256x256xf32>
    %32 = arith.mulf %31, %30 : vector<256x256xf32>
    %33 = arith.subf %22, %32 : vector<256x256xf32>
    %cst_13 = arith.constant 5.000000e-01 : f32
    %34 = vector.broadcast %cst_13 : f32 to vector<256x256xf32>
    %35 = arith.addf %30, %34 : vector<256x256xf32>
    %cst_14 = arith.constant 6.250000e-02 : f32
    %36 = vector.broadcast %cst_14 : f32 to vector<256x256xf32>
    %37 = arith.mulf %35, %36 : vector<256x256xf32>
    %38 = math.floor %37 : vector<256x256xf32>
    %cst_15 = arith.constant 1.600000e+01 : f32
    %39 = vector.broadcast %cst_15 : f32 to vector<256x256xf32>
    %40 = arith.mulf %39, %38 : vector<256x256xf32>
    %41 = arith.subf %30, %40 : vector<256x256xf32>
    %cst_16 = arith.constant 0.000000e+00 : f32
    %42 = vector.broadcast %cst_16 : f32 to vector<256x256xf32>
    %43 = arith.cmpf oeq, %25, %42 : vector<256x256xf32>
    %cst_17 = arith.constant 1.000000e+00 : f32
    %44 = vector.broadcast %cst_17 : f32 to vector<256x256xf32>
    %45 = arith.cmpf oeq, %25, %44 : vector<256x256xf32>
    %cst_18 = arith.constant 2.000000e+00 : f32
    %46 = vector.broadcast %cst_18 : f32 to vector<256x256xf32>
    %47 = arith.cmpf oeq, %25, %46 : vector<256x256xf32>
    %cst_19 = arith.constant 3.000000e+00 : f32
    %48 = vector.broadcast %cst_19 : f32 to vector<256x256xf32>
    %49 = arith.cmpf oeq, %25, %48 : vector<256x256xf32>
    %cst_20 = arith.constant 0.000000e+00 : f32
    %50 = vector.broadcast %cst_20 : f32 to vector<256x256xf32>
    %51 = arith.cmpf oeq, %33, %50 : vector<256x256xf32>
    %cst_21 = arith.constant 1.000000e+00 : f32
    %52 = vector.broadcast %cst_21 : f32 to vector<256x256xf32>
    %53 = arith.cmpf oeq, %33, %52 : vector<256x256xf32>
    %cst_22 = arith.constant 1.600000e+01 : f32
    %cst_23 = arith.constant 3.300000e+01 : f32
    %54 = vector.broadcast %cst_22 : f32 to vector<256x256xf32>
    %55 = vector.broadcast %cst_23 : f32 to vector<256x256xf32>
    %56 = arith.select %53, %54, %55 : vector<256x256xi1>, vector<256x256xf32>
    %cst_24 = arith.constant 1.000000e+01 : f32
    %57 = vector.broadcast %cst_24 : f32 to vector<256x256xf32>
    %58 = arith.select %51, %57, %56 : vector<256x256xi1>, vector<256x256xf32>
    %cst_25 = arith.constant 0.000000e+00 : f32
    %59 = vector.broadcast %cst_25 : f32 to vector<256x256xf32>
    %60 = arith.cmpf oeq, %33, %59 : vector<256x256xf32>
    %cst_26 = arith.constant 1.000000e+00 : f32
    %61 = vector.broadcast %cst_26 : f32 to vector<256x256xf32>
    %62 = arith.cmpf oeq, %33, %61 : vector<256x256xf32>
    %cst_27 = arith.constant 3.000000e+01 : f32
    %cst_28 = arith.constant 2.300000e+01 : f32
    %63 = vector.broadcast %cst_27 : f32 to vector<256x256xf32>
    %64 = vector.broadcast %cst_28 : f32 to vector<256x256xf32>
    %65 = arith.select %62, %63, %64 : vector<256x256xi1>, vector<256x256xf32>
    %cst_29 = arith.constant 1.300000e+01 : f32
    %66 = vector.broadcast %cst_29 : f32 to vector<256x256xf32>
    %67 = arith.select %60, %66, %65 : vector<256x256xi1>, vector<256x256xf32>
    %cst_30 = arith.constant 1.000000e+00 : f32
    %68 = vector.broadcast %cst_30 : f32 to vector<256x256xf32>
    %69 = arith.select %49, %67, %68 : vector<256x256xi1>, vector<256x256xf32>
    %70 = arith.select %47, %58, %69 : vector<256x256xi1>, vector<256x256xf32>
    %cst_31 = arith.constant 2.600000e+01 : f32
    %71 = vector.broadcast %cst_31 : f32 to vector<256x256xf32>
    %72 = arith.select %45, %71, %70 : vector<256x256xi1>, vector<256x256xf32>
    %cst_32 = arith.constant 2.600000e+01 : f32
    %73 = vector.broadcast %cst_32 : f32 to vector<256x256xf32>
    %74 = arith.select %43, %73, %72 : vector<256x256xi1>, vector<256x256xf32>
    %cst_33 = arith.constant 2.600000e+01 : f32
    %75 = vector.broadcast %cst_33 : f32 to vector<256x256xf32>
    %76 = arith.mulf %38, %75 : vector<256x256xf32>
    %cst_34 = arith.constant 2.600000e+01 : f32
    %77 = vector.broadcast %cst_34 : f32 to vector<256x256xf32>
    %78 = arith.mulf %41, %77 : vector<256x256xf32>
    %cst_35 = arith.constant 0.000000e+00 : f32
    %79 = vector.broadcast %cst_35 : f32 to vector<256x256xf32>
    %80 = arith.select %45, %78, %79 : vector<256x256xi1>, vector<256x256xf32>
    %81 = arith.select %43, %76, %80 : vector<256x256xi1>, vector<256x256xf32>
    %82 = arith.ori %47, %49 : vector<256x256xi1>
    %cst_36 = arith.constant 0.000000e+00 : f32
    %83 = vector.broadcast %cst_36 : f32 to vector<256x256xf32>
    %84 = arith.subf %83, %6 : vector<256x256xf32>
    %85 = math.exp %84 : vector<256x256xf32>
    %cst_37 = arith.constant 1.000000e+00 : f32
    %86 = vector.broadcast %cst_37 : f32 to vector<256x256xf32>
    %87 = arith.addf %86, %85 : vector<256x256xf32>
    %88 = arith.select %82, %85, %87 : vector<256x256xi1>, vector<256x256xf32>
    %89 = tpu.reciprocal %88 : vector<256x256xf32> -> vector<256x256xf32>
    %90 = arith.mulf %89, %74 : vector<256x256xf32>
    %91 = arith.addf %90, %81 : vector<256x256xf32>
    %c0_38 = arith.constant 0 : index
    %c0_39 = arith.constant 0 : index
    %c0_40 = arith.constant 0 : index
    %92 = vector.load %arg5[%c0_38, %c0_39, %c0_40] : memref<1x256x256xf32, #tpu.memory_space<vmem>>, vector<1x256x256xf32>
    %93 = vector.shape_cast %92 : vector<1x256x256xf32> to vector<256x256xf32>
    %94 = vector.shape_cast %91 : vector<256x256xf32> to vector<1x256x256xf32>
    tpu.vector_store %arg5[%c0_38, %c0_39, %c0_40], %94 {strides = array<i32>} : memref<1x256x256xf32, #tpu.memory_space<vmem>>, vector<1x256x256xf32>,
    return
  }
  func.func @transform_0(%arg0: i32, %arg1: i32) -> (i32, i32, i32) {
    %c0_i32 = arith.constant 0 : i32
    %c0_i32_0 = arith.constant 0 : i32
    return %arg0, %c0_i32, %arg1 : i32, i32, i32
  }
  func.func @transform_1(%arg0: i32, %arg1: i32) -> (i32, i32) {
    %c0_i32 = arith.constant 0 : i32
    %c0_i32_0 = arith.constant 0 : i32
    %c0_i32_1 = arith.constant 0 : i32
    return %c0_i32, %c0_i32_0 : i32, i32
  }
  func.func @transform_2(%arg0: i32, %arg1: i32) -> (i32, i32) {
    %c0_i32 = arith.constant 0 : i32
    %c0_i32_0 = arith.constant 0 : i32
    %c0_i32_1 = arith.constant 0 : i32
    return %c0_i32, %c0_i32_0 : i32, i32
  }
  func.func @transform_3(%arg0: i32, %arg1: i32) -> (i32, i32, i32) {
    %c0_i32 = arith.constant 0 : i32
    %c0_i32_0 = arith.constant 0 : i32
    return %arg0, %c0_i32, %arg1 : i32, i32, i32
  }
}

</mosaic_0001>

<llo_original>
// kernel: tpu_custom_call.1
$region0: #{tpu_custom_call.1}
  #allocation0 [shape = 'u32[]', space=smem, size = 0x4, offset = 0x4, fixed_abs, tag = 'smem constant byte address 0x4 - core index']
  #allocation1 [shape = 'u32[144,128]{1,0:T(1,128)}', space=vmem, size = 0x12000, scoped, tag = 'internal scratch']
  %s0 = inlined_call_operand.vmem [shape: f32[2,4,256], index: 0, kind: input, shape index: {}]
  %s1 = inlined_call_operand.vmem [shape: f32[256,4], index: 1, kind: input, shape index: {}]
  %s2 = inlined_call_operand.vmem [shape: f32[256,1], index: 2, kind: input, shape index: {}]
  %s3 = inlined_call_operand.hbm [shape: f32[2,256,256], index: 3, kind: output, shape index: {}]
  %s4 = sld [smem:[#allocation0]]
  $region45: #{tpu_custom_call.1} parent=0
    _
  %s6 = ssub.s32 1, %s4
  %s7 = scalar_select 0, %s6, %s4
  $region1: #{tpu_custom_call.1} parent=0
    #allocation2 [shape = 'u8[524288]{0}', space=vmem, size = 0x80000, scoped, tag = 'output window, operand 0']
    #allocation3 [shape = 's32[2]{0}', space=sflag, size = 0x8, scoped, tag = 'scoped memory for tpu_custom_call.1']
    %8 = vsyncpa [#allocation3], 0
    %s9 = scalar_lea.sflag [#allocation3], 1
    %10 = vsyncpa %s9, 0
    loop: start=0, step=1, limit=4
    $region2: #{tpu_custom_call.1} parent=1 // loop_pre_header
      _
    $region3: #{tpu_custom_call.1} parent=1 // loop_header
      %s12 = sphi 0, %s16
      %p13 = scmp.ge.s32.totalorder %s12, 4
      %s19 = sphi 0, %s31
      %s20 = sphi 0, %s27
      %s21 = sphi 0, %s19
      %s22 = sphi 0, %s20
      %s23 = sphi 0, %s21
      %s24 = sphi 0, %s22
      %s36 = sphi 0, %s38
      %s39 = sphi 0, %s36
      %s40 = sphi 0, %s39
      %s56 = sphi 0, %s40
      %s60 = sphi 0, %s60
      %s62 = sphi 0, %s60
      %s63 = sphi 0, %s62
      %s77 = sphi 0, %s63
      %s81 = sphi 0, %s81
      %s83 = sphi 0, %s81
      %s84 = sphi 0, %s83
      %s98 = sphi 0, %s84
      %s106 = sphi 0, %s108
      %s109 = sphi 0, %s106
      %s110 = sphi 0, %s109
      %s126 = sphi 0, %s110
    $region4: #{tpu_custom_call.1} parent=1 // loop_header_branch
      %15 = sbr.rel (%p13) target = $region8
    $region5: #{tpu_custom_call.1} parent=1 // loop_body
      %s17 = ssub.s32 %s12, 1
      %s18 = ssub.s32 %s12, 2
      %s25 = sadd.s32 1, %s20
      %p26 = scmp.ge.s32.totalorder %s25, 1
      %s27 = scalar_select %p26, 0, %s25
      %s28 = sadd.s32 1, %s19
      %s29 = scalar_select %p26, %s28, %s19
      %p30 = scmp.ge.s32.totalorder %s29, 2
      %s31 = scalar_select %p30, 0, %s29
      %s32 = ssub.s32 %s19, %s31
      %s33 = ssub.s32 %s20, %s27
      %s34 = sor.u32 %s32, %s33
      %p35 = scmp.eq.s32.totalorder %s34, 0
      %s37 = sadd.s32 %s36, 1
      %s38 = scalar_select %p35, %s36, %s37
      %p41 = pneg %p35
      %p42 = scmp.eq.s32.totalorder %s12, 1
      %p43 = por %p41, %p42
      %p44 = scmp.ne.s32.totalorder %s36, %s39
      %p45 = scmp.eq.s32.totalorder %s12, 0
      %p46 = por %p44, %p45
      %p47 = scmp.ne.s32.totalorder %s36, %s39
      %p48 = scmp.eq.s32.totalorder %s17, 1
      %p49 = por %p47, %p48
      %p50 = scmp.ne.s32.totalorder %s39, %s40
      %p51 = scmp.eq.s32.totalorder %s17, 0
      %p52 = por %p50, %p51
      %p53 = scmp.ne.s32.totalorder %s39, %s40
      %p54 = scmp.eq.s32.totalorder %s18, 1
      %p55 = por %p53, %p54
      %p57 = scmp.ne.s32.totalorder %s40, %s56
      %p58 = scmp.eq.s32.totalorder %s18, 0
      %p59 = por %p57, %p58
      %s61 = sadd.s32 %s60, 1
      %p64 = scmp.eq.s32.totalorder %s12, 1
      %p65 = scmp.ne.s32.totalorder %s60, %s62
      %p66 = scmp.eq.s32.totalorder %s12, 0
      %p67 = por %p65, %p66
      %p68 = scmp.ne.s32.totalorder %s60, %s62
      %p69 = scmp.eq.s32.totalorder %s17, 1
      %p70 = por %p68, %p69
      %p71 = scmp.ne.s32.totalorder %s62, %s63
      %p72 = scmp.eq.s32.totalorder %s17, 0
      %p73 = por %p71, %p72
      %p74 = scmp.ne.s32.totalorder %s62, %s63
      %p75 = scmp.eq.s32.totalorder %s18, 1
      %p76 = por %p74, %p75
      %p78 = scmp.ne.s32.totalorder %s63, %s77
      %p79 = scmp.eq.s32.totalorder %s18, 0
      %p80 = por %p78, %p79
      %s82 = sadd.s32 %s81, 1
      %p85 = scmp.eq.s32.totalorder %s12, 1
      %p86 = scmp.ne.s32.totalorder %s81, %s83
      %p87 = scmp.eq.s32.totalorder %s12, 0
      %p88 = por %p86, %p87
      %p89 = scmp.ne.s32.totalorder %s81, %s83
      %p90 = scmp.eq.s32.totalorder %s17, 1
      %p91 = por %p89, %p90
      %p92 = scmp.ne.s32.totalorder %s83, %s84
      %p93 = scmp.eq.s32.totalorder %s17, 0
      %p94 = por %p92, %p93
      %p95 = scmp.ne.s32.totalorder %s83, %s84
      %p96 = scmp.eq.s32.totalorder %s18, 1
      %p97 = por %p95, %p96
      %p99 = scmp.ne.s32.totalorder %s84, %s98
      %p100 = scmp.eq.s32.totalorder %s18, 0
      %p101 = por %p99, %p100
      %s102 = ssub.s32 %s19, %s31
      %s103 = ssub.s32 %s20, %s27
      %s104 = sor.u32 %s102, %s103
      %p105 = scmp.eq.s32.totalorder %s104, 0
      %s107 = sadd.s32 %s106, 1
      %s108 = scalar_select %p105, %s106, %s107
      %p111 = pneg %p105
      %p112 = scmp.eq.s32.totalorder %s12, 1
      %p113 = por %p111, %p112
      %p114 = scmp.ne.s32.totalorder %s106, %s109
      %p115 = scmp.eq.s32.totalorder %s12, 0
      %p116 = por %p114, %p115
      %p117 = scmp.ne.s32.totalorder %s106, %s109
      %p118 = scmp.eq.s32.totalorder %s17, 1
      %p119 = por %p117, %p118
      %p120 = scmp.ne.s32.totalorder %s109, %s110
      %p121 = scmp.eq.s32.totalorder %s17, 0
      %p122 = por %p120, %p121
      %p123 = scmp.ne.s32.totalorder %s109, %s110
      %p124 = scmp.eq.s32.totalorder %s18, 1
      %p125 = por %p123, %p124
      %p127 = scmp.ne.s32.totalorder %s110, %s126
      %p128 = scmp.eq.s32.totalorder %s18, 0
      %p129 = por %p127, %p128
      %p130 = scmp.le.s32.totalorder 1, %s12
      %p131 = scmp.lt.s32.totalorder %s12, 3
      %p132 = pnand %p130, %p131
      %p133 = pneg %p132
      // Predicated region
      $region9: #{tpu_custom_call.1} parent=5 // pred_check
        _
      $region10: #{tpu_custom_call.1} parent=5 // pred_check_branch
        %135 = sbr.rel (%p132) target = $region12
      $region11: #{tpu_custom_call.1} parent=5 // pred_region
        %s136 = ssub.s32 %s12, 1
        // Predicated region
        $region13: #{tpu_custom_call.1} parent=11 // pred_check
          %p137 = pneg %p73
        $region14: #{tpu_custom_call.1} parent=11 // pred_check_branch
          %139 = sbr.rel (%p137) target = $region16
        $region15: #{tpu_custom_call.1} parent=11 // pred_region
          _
        $region16: #{tpu_custom_call.1} parent=11 // pred_fallthru
          _
        // Predicated region
        $region17: #{tpu_custom_call.1} parent=11 // pred_check
          %p140 = pneg %p94
        $region18: #{tpu_custom_call.1} parent=11 // pred_check_branch
          %142 = sbr.rel (%p140) target = $region20
        $region19: #{tpu_custom_call.1} parent=11 // pred_region
          _
        $region20: #{tpu_custom_call.1} parent=11 // pred_fallthru
          _
      $region12: #{tpu_custom_call.1} parent=5 // pred_fallthru
        _
      %p143 = scmp.lt.s32.totalorder %s12, 2
      // Predicated region
      $region21: #{tpu_custom_call.1} parent=5 // pred_check
        %p144 = pneg %p143
      $region22: #{tpu_custom_call.1} parent=5 // pred_check_branch
        %146 = sbr.rel (%p144) target = $region24
      $region23: #{tpu_custom_call.1} parent=5 // pred_region
        // Predicated region
        $region25: #{tpu_custom_call.1} parent=23 // pred_check
          %p147 = pneg %p46
        $region26: #{tpu_custom_call.1} parent=23 // pred_check_branch
          %149 = sbr.rel (%p147) target = $region28
        $region27: #{tpu_custom_call.1} parent=23 // pred_region
          %s150 = smul.u32 2, %s20
          %p151 = scmp.lt.s32.totalorder %s19, 1
          %s152 = scalar_select %p151, %s19, 1
          %p153 = scmp.lt.s32.totalorder %s150, 1
          %s154 = scalar_select %p153, %s150, 1
          %s155 = smul.addr %s152, 2
          %s156 = sadd.s32 %s154, %s155
          %s157 = smul.addr %s156, 4
          %s158 = scalar_lea.vmem %s0, %s157
          %s159 = smul.u32 2, %s20
        $region28: #{tpu_custom_call.1} parent=23 // pred_fallthru
          _
      $region24: #{tpu_custom_call.1} parent=5 // pred_fallthru
        _
      %p160 = scmp.le.s32.totalorder 1, %s12
      %p161 = scmp.lt.s32.totalorder %s12, 3
      %p162 = pnand %p160, %p161
      %p163 = pneg %p162
      // Predicated region
      $region29: #{tpu_custom_call.1} parent=5 // pred_check
        _
      $region30: #{tpu_custom_call.1} parent=5 // pred_check_branch
        %165 = sbr.rel (%p162) target = $region32
      $region31: #{tpu_custom_call.1} parent=5 // pred_region
        %s166 = ssub.s32 %s12, 1
        %s167 = smul.u32 2, %s22
        %p168 = scmp.lt.s32.totalorder %s21, 1
        %s169 = scalar_select %p168, %s21, 1
        %p170 = scmp.lt.s32.totalorder %s167, 1
        %s171 = scalar_select %p170, %s167, 1
        %s172 = smul.addr %s169, 2
        %s173 = sadd.s32 %s171, %s172
        %s174 = smul.addr %s173, 4
        %s175 = scalar_lea.vmem %s0, %s174
        %p176 = pneg %p52
        %p177 = pneg %p49
        %p178 = pneg %p73
        %p179 = pneg %p70
        %p180 = pneg %p94
        %p181 = pneg %p91
        %p182 = pneg %p122
        %p183 = pneg %p119
        %s184 = sand.u32 %s109, 1
        %s185 = scalar_lea.sflag [#allocation3], %s184
        %s186 = sand.u32 %s109, 1
        %s187 = smul.addr %s186, 512
        %s188 = scalar_lea.vmem [#allocation2], %s187
        %s189 = smul.u32 2, %s22
        %p190 = scmp.lt.s32.totalorder %s21, 1
        %s191 = scalar_select %p190, %s21, 1
        %p192 = scmp.lt.s32.totalorder %s189, 1
        %s193 = scalar_select %p192, %s189, 1
        %s194 = smul.addr %s191, 2
        %s195 = sadd.s32 %s193, %s194
        %s196 = smul.addr %s195, 4
        %s197 = scalar_lea.vmem %s0, %s196
        %s198 = smul.u32 2, %s22
        %s199 = smul.u32 2, %s22
        %v200 = vld [vmem:[%s197] sm:$0xff]
        %v201 = vld [vmem:[%s1] sm:$0xff]
        %v202 = vld [vmem:[%s1 + $0x8] sm:$0xff]
        %v203 = vld [vmem:[%s1 + $0x10] sm:$0xff]
        %v204 = vld [vmem:[%s1 + $0x18] sm:$0xff]
        %v205 = vld [vmem:[%s1 + $0x20] sm:$0xff]
        %v206 = vld [vmem:[%s1 + $0x28] sm:$0xff]
        %v207 = vld [vmem:[%s1 + $0x30] sm:$0xff]
        %v208 = vld [vmem:[%s1 + $0x38] sm:$0xff]
        %v209 = vld [vmem:[%s1 + $0x40] sm:$0xff]
        %v210 = vld [vmem:[%s1 + $0x48] sm:$0xff]
        %v211 = vld [vmem:[%s1 + $0x50] sm:$0xff]
        %v212 = vld [vmem:[%s1 + $0x58] sm:$0xff]
        %v213 = vld [vmem:[%s1 + $0x60] sm:$0xff]
        %v214 = vld [vmem:[%s1 + $0x68] sm:$0xff]
        %v215 = vld [vmem:[%s1 + $0x70] sm:$0xff]
        %v216 = vld [vmem:[%s1 + $0x78] sm:$0xff]
        %v217 = vld [vmem:[%s1 + $0x80] sm:$0xff]
        %v218 = vld [vmem:[%s1 + $0x88] sm:$0xff]
        %v219 = vld [vmem:[%s1 + $0x90] sm:$0xff]
        %v220 = vld [vmem:[%s1 + $0x98] sm:$0xff]
        %v221 = vld [vmem:[%s1 + $0xa0] sm:$0xff]
        %v222 = vld [vmem:[%s1 + $0xa8] sm:$0xff]
        %v223 = vld [vmem:[%s1 + $0xb0] sm:$0xff]
        %v224 = vld [vmem:[%s1 + $0xb8] sm:$0xff]
        %v225 = vld [vmem:[%s1 + $0xc0] sm:$0xff]
        %v226 = vld [vmem:[%s1 + $0xc8] sm:$0xff]
        %v227 = vld [vmem:[%s1 + $0xd0] sm:$0xff]
        %v228 = vld [vmem:[%s1 + $0xd8] sm:$0xff]
        %v229 = vld [vmem:[%s1 + $0xe0] sm:$0xff]
        %v230 = vld [vmem:[%s1 + $0xe8] sm:$0xff]
        %v231 = vld [vmem:[%s1 + $0xf0] sm:$0xff]
        %v232 = vld [vmem:[%s1 + $0xf8] sm:$0xff]
        %v233 = vld [vmem:[%s2] sm:$0xff]
        %v234 = vld [vmem:[%s2 + $0x8] sm:$0xff]
        %v235 = vld [vmem:[%s2 + $0x10] sm:$0xff]
        %v236 = vld [vmem:[%s2 + $0x18] sm:$0xff]
        %v237 = vld [vmem:[%s2 + $0x20] sm:$0xff]
        %v238 = vld [vmem:[%s2 + $0x28] sm:$0xff]
        %v239 = vld [vmem:[%s2 + $0x30] sm:$0xff]
        %v240 = vld [vmem:[%s2 + $0x38] sm:$0xff]
        %v241 = vld [vmem:[%s2 + $0x40] sm:$0xff]
        %v242 = vld [vmem:[%s2 + $0x48] sm:$0xff]
        %v243 = vld [vmem:[%s2 + $0x50] sm:$0xff]
        %v244 = vld [vmem:[%s2 + $0x58] sm:$0xff]
        %v245 = vld [vmem:[%s2 + $0x60] sm:$0xff]
        %v246 = vld [vmem:[%s2 + $0x68] sm:$0xff]
        %v247 = vld [vmem:[%s2 + $0x70] sm:$0xff]
        %v248 = vld [vmem:[%s2 + $0x78] sm:$0xff]
        %v249 = vld [vmem:[%s2 + $0x80] sm:$0xff]
        %v250 = vld [vmem:[%s2 + $0x88] sm:$0xff]
        %v251 = vld [vmem:[%s2 + $0x90] sm:$0xff]
        %v252 = vld [vmem:[%s2 + $0x98] sm:$0xff]
        %v253 = vld [vmem:[%s2 + $0xa0] sm:$0xff]
        %v254 = vld [vmem:[%s2 + $0xa8] sm:$0xff]
        %v255 = vld [vmem:[%s2 + $0xb0] sm:$0xff]
        %v256 = vld [vmem:[%s2 + $0xb8] sm:$0xff]
        %v257 = vld [vmem:[%s2 + $0xc0] sm:$0xff]
        %v258 = vld [vmem:[%s2 + $0xc8] sm:$0xff]
        %v259 = vld [vmem:[%s2 + $0xd0] sm:$0xff]
        %v260 = vld [vmem:[%s2 + $0xd8] sm:$0xff]
        %v261 = vld [vmem:[%s2 + $0xe0] sm:$0xff]
        %v262 = vld [vmem:[%s2 + $0xe8] sm:$0xff]
        %v263 = vld [vmem:[%s2 + $0xf0] sm:$0xff]
        %v264 = vld [vmem:[%s2 + $0xf8] sm:$0xff]
        %266 = vset.pattern.permute.xlu0 0
        %267 = vperm.xlu0 %266, %v233
        %v268 = vpop.permute.xlu0 %267
        %271 = vset.pattern.permute.xlu0 0
        %272 = vperm.xlu0 %271, %v234
        %v273 = vpop.permute.xlu0 %272
        %276 = vset.pattern.permute.xlu0 0
        %277 = vperm.xlu0 %276, %v235
        %v278 = vpop.permute.xlu0 %277
        %281 = vset.pattern.permute.xlu0 0
        %282 = vperm.xlu0 %281, %v236
        %v283 = vpop.permute.xlu0 %282
        %286 = vset.pattern.permute.xlu0 0
        %287 = vperm.xlu0 %286, %v237
        %v288 = vpop.permute.xlu0 %287
        %291 = vset.pattern.permute.xlu0 0
        %292 = vperm.xlu0 %291, %v238
        %v293 = vpop.permute.xlu0 %292
        %296 = vset.pattern.permute.xlu0 0
        %297 = vperm.xlu0 %296, %v239
        %v298 = vpop.permute.xlu0 %297
        %301 = vset.pattern.permute.xlu0 0
        %302 = vperm.xlu0 %301, %v240
        %v303 = vpop.permute.xlu0 %302
        %306 = vset.pattern.permute.xlu0 0
        %307 = vperm.xlu0 %306, %v241
        %v308 = vpop.permute.xlu0 %307
        %311 = vset.pattern.permute.xlu0 0
        %312 = vperm.xlu0 %311, %v242
        %v313 = vpop.permute.xlu0 %312
        %316 = vset.pattern.permute.xlu0 0
        %317 = vperm.xlu0 %316, %v243
        %v318 = vpop.permute.xlu0 %317
        %321 = vset.pattern.permute.xlu0 0
        %322 = vperm.xlu0 %321, %v244
        %v323 = vpop.permute.xlu0 %322
        %326 = vset.pattern.permute.xlu0 0
        %327 = vperm.xlu0 %326, %v245
        %v328 = vpop.permute.xlu0 %327
        %331 = vset.pattern.permute.xlu0 0
        %332 = vperm.xlu0 %331, %v246
        %v333 = vpop.permute.xlu0 %332
        %336 = vset.pattern.permute.xlu0 0
        %337 = vperm.xlu0 %336, %v247
        %v338 = vpop.permute.xlu0 %337
        %341 = vset.pattern.permute.xlu0 0
        %342 = vperm.xlu0 %341, %v248
        %v343 = vpop.permute.xlu0 %342
        %346 = vset.pattern.permute.xlu0 0
        %347 = vperm.xlu0 %346, %v249
        %v348 = vpop.permute.xlu0 %347
        %351 = vset.pattern.permute.xlu0 0
        %352 = vperm.xlu0 %351, %v250
        %v353 = vpop.permute.xlu0 %352
        %356 = vset.pattern.permute.xlu0 0
        %357 = vperm.xlu0 %356, %v251
        %v358 = vpop.permute.xlu0 %357
        %361 = vset.pattern.permute.xlu0 0
        %362 = vperm.xlu0 %361, %v252
        %v363 = vpop.permute.xlu0 %362
        %366 = vset.pattern.permute.xlu0 0
        %367 = vperm.xlu0 %366, %v253
        %v368 = vpop.permute.xlu0 %367
        %371 = vset.pattern.permute.xlu0 0
        %372 = vperm.xlu0 %371, %v254
        %v373 = vpop.permute.xlu0 %372
        %376 = vset.pattern.permute.xlu0 0
        %377 = vperm.xlu0 %376, %v255
        %v378 = vpop.permute.xlu0 %377
        %381 = vset.pattern.permute.xlu0 0
        %382 = vperm.xlu0 %381, %v256
        %v383 = vpop.permute.xlu0 %382
        %386 = vset.pattern.permute.xlu0 0
        %387 = vperm.xlu0 %386, %v257
        %v388 = vpop.permute.xlu0 %387
        %391 = vset.pattern.permute.xlu0 0
        %392 = vperm.xlu0 %391, %v258
        %v393 = vpop.permute.xlu0 %392
        %396 = vset.pattern.permute.xlu0 0
        %397 = vperm.xlu0 %396, %v259
        %v398 = vpop.permute.xlu0 %397
        %401 = vset.pattern.permute.xlu0 0
        %402 = vperm.xlu0 %401, %v260
        %v403 = vpop.permute.xlu0 %402
        %406 = vset.pattern.permute.xlu0 0
        %407 = vperm.xlu0 %406, %v261
        %v408 = vpop.permute.xlu0 %407
        %411 = vset.pattern.permute.xlu0 0
        %412 = vperm.xlu0 %411, %v262
        %v413 = vpop.permute.xlu0 %412
        %416 = vset.pattern.permute.xlu0 0
        %417 = vperm.xlu0 %416, %v263
        %v418 = vpop.permute.xlu0 %417
        %421 = vset.pattern.permute.xlu0 0
        %422 = vperm.xlu0 %421, %v264
        %v423 = vpop.permute.xlu0 %422
        %v426 = vcombine.high %v200, %v200
        %vm427 = vcmask 31744
        %v429 = vsel %vm427, %v201, 0
        %v432 = vsel %vm427, %v202, 0
        %v435 = vsel %vm427, %v203, 0
        %v438 = vsel %vm427, %v204, 0
        %v441 = vsel %vm427, %v205, 0
        %v444 = vsel %vm427, %v206, 0
        %v447 = vsel %vm427, %v207, 0
        %v450 = vsel %vm427, %v208, 0
        %v453 = vsel %vm427, %v209, 0
        %v456 = vsel %vm427, %v210, 0
        %v459 = vsel %vm427, %v211, 0
        %v462 = vsel %vm427, %v212, 0
        %v465 = vsel %vm427, %v213, 0
        %v468 = vsel %vm427, %v214, 0
        %v471 = vsel %vm427, %v215, 0
        %v474 = vsel %vm427, %v216, 0
        %v477 = vsel %vm427, %v217, 0
        %v480 = vsel %vm427, %v218, 0
        %v483 = vsel %vm427, %v219, 0
        %v486 = vsel %vm427, %v220, 0
        %v489 = vsel %vm427, %v221, 0
        %v492 = vsel %vm427, %v222, 0
        %v495 = vsel %vm427, %v223, 0
        %v498 = vsel %vm427, %v224, 0
        %v501 = vsel %vm427, %v225, 0
        %v504 = vsel %vm427, %v226, 0
        %v507 = vsel %vm427, %v227, 0
        %v510 = vsel %vm427, %v228, 0
        %v513 = vsel %vm427, %v229, 0
        %v516 = vsel %vm427, %v230, 0
        %v519 = vsel %vm427, %v231, 0
        %v522 = vsel %vm427, %v232, 0
        %vm524 = vcmask 1043456
        %v525 = vsel %vm524, %v200, 0
        %v527 = vsel %vm524, %v426, 0
        %529 = vmatprep.subr.mxu0 0.0
        %530 = vmatpush1.msra.mxu0 0.0
        %531 = vmatprep.subr.mxu0 0.0
        %532 = vmatpush1.msra.mxu0 0.0
        %533 = vmatprep.subr.mxu0 0.0
        %534 = vmatpush1.msra.mxu0 0.0
        %535 = vmatprep.subr.mxu0 0.0
        %536 = vmatpush1.msra.mxu0 0.0
        %537 = vmatprep.subr.mxu0 0.0
        %538 = vmatpush1.msra.mxu0 0.0
        %539 = vmatprep.subr.mxu0 0.0
        %540 = vmatpush1.msra.mxu0 0.0
        %541 = vmatprep.subr.mxu0 0.0
        %542 = vmatpush1.msra.mxu0 0.0
        %543 = vmatprep.subr.mxu0 0.0
        %544 = vmatpush1.msra.mxu0 0.0
        %545 = vmatprep.subr.mxu0 0.0
        %546 = vmatpush1.msra.mxu0 0.0
        %547 = vmatprep.subr.mxu0 0.0
        %548 = vmatpush1.msra.mxu0 0.0
        %549 = vmatprep.subr.mxu0 0.0
        %550 = vmatpush1.msra.mxu0 0.0
        %551 = vmatprep.subr.mxu0 0.0
        %552 = vmatpush1.msra.mxu0 0.0
        %553 = vmatprep.subr.mxu0 0.0
        %554 = vmatpush1.msra.mxu0 0.0
        %555 = vmatprep.subr.mxu0 0.0
        %556 = vmatpush1.msra.mxu0 0.0
        %557 = vmatprep.subr.mxu0 0.0
        %558 = vmatpush1.msra.mxu0 0.0
        %559 = vmatprep.subr.mxu0 %v527
        %560 = vmatpush1.msra.mxu0 %v525
        %561 = vmatprep.subr.mxu0 0.0
        %562 = vmatpush2.msra.mxu0 0.0
        %563 = vmatprep.subr.mxu0 0.0
        %564 = vmatpush2.msra.mxu0 0.0
        %565 = vmatprep.subr.mxu0 0.0
        %566 = vmatpush2.msra.mxu0 0.0
        %567 = vmatprep.subr.mxu0 0.0
        %568 = vmatpush2.msra.mxu0 0.0
        %569 = vmatprep.subr.mxu0 0.0
        %570 = vmatpush2.msra.mxu0 0.0
        %571 = vmatprep.subr.mxu0 0.0
        %572 = vmatpush2.msra.mxu0 0.0
        %573 = vmatprep.subr.mxu0 0.0
        %574 = vmatpush2.msra.mxu0 0.0
        %575 = vmatprep.subr.mxu0 0.0
        %576 = vmatpush2.msra.mxu0 0.0
        %577 = vmatprep.subr.mxu0 0.0
        %578 = vmatpush2.msra.mxu0 0.0
        %579 = vmatprep.subr.mxu0 0.0
        %580 = vmatpush2.msra.mxu0 0.0
        %581 = vmatprep.subr.mxu0 0.0
        %582 = vmatpush2.msra.mxu0 0.0
        %583 = vmatprep.subr.mxu0 0.0
        %584 = vmatpush2.msra.mxu0 0.0
        %585 = vmatprep.subr.mxu0 0.0
        %586 = vmatpush2.msra.mxu0 0.0
        %587 = vmatprep.subr.mxu0 0.0
        %588 = vmatpush2.msra.mxu0 0.0
        %589 = vmatprep.subr.mxu0 0.0
        %590 = vmatpush2.msra.mxu0 0.0
        %591 = vmatprep.subr.mxu0 0.0
        %592 = vmatpush2.msra.mxu0 0.0
        %593 = vmatprep.mubr.f32.mxu0 0.0
        %594 = vmatmul.mubr.f32.gmra.mxu0 %v429
        %v595 = vpop.f32.mrf.mxu0
        %v596 = vadd.f32 %v268, %v595
        %v597 = vpop.f32.mrf.mxu0
        %v598 = vadd.f32 %v268, %v597
        %599 = vmatprep.mubr.f32.mxu0 0.0
        %600 = vmatmul.mubr.f32.gmra.mxu0 %v432
        %v601 = vpop.f32.mrf.mxu0
        %v602 = vadd.f32 %v273, %v601
        %v603 = vpop.f32.mrf.mxu0
        %v604 = vadd.f32 %v273, %v603
        %605 = vmatprep.mubr.f32.mxu0 0.0
        %606 = vmatmul.mubr.f32.gmra.mxu0 %v435
        %v607 = vpop.f32.mrf.mxu0
        %v608 = vadd.f32 %v278, %v607
        %v609 = vpop.f32.mrf.mxu0
        %v610 = vadd.f32 %v278, %v609
        %611 = vmatprep.mubr.f32.mxu0 0.0
        %612 = vmatmul.mubr.f32.gmra.mxu0 %v438
        %v613 = vpop.f32.mrf.mxu0
        %v614 = vadd.f32 %v283, %v613
        %v615 = vpop.f32.mrf.mxu0
        %v616 = vadd.f32 %v283, %v615
        %617 = vmatprep.mubr.f32.mxu0 0.0
        %618 = vmatmul.mubr.f32.gmra.mxu0 %v441
        %v619 = vpop.f32.mrf.mxu0
        %v620 = vadd.f32 %v288, %v619
        %v621 = vpop.f32.mrf.mxu0
        %v622 = vadd.f32 %v288, %v621
        %623 = vmatprep.mubr.f32.mxu0 0.0
        %624 = vmatmul.mubr.f32.gmra.mxu0 %v444
        %v625 = vpop.f32.mrf.mxu0
        %v626 = vadd.f32 %v293, %v625
        %v627 = vpop.f32.mrf.mxu0
        %v628 = vadd.f32 %v293, %v627
        %629 = vmatprep.mubr.f32.mxu0 0.0
        %630 = vmatmul.mubr.f32.gmra.mxu0 %v447
        %v631 = vpop.f32.mrf.mxu0
        %v632 = vadd.f32 %v298, %v631
        %v633 = vpop.f32.mrf.mxu0
        %v634 = vadd.f32 %v298, %v633
        %635 = vmatprep.mubr.f32.mxu0 0.0
        %636 = vmatmul.mubr.f32.gmra.mxu0 %v450
        %v637 = vpop.f32.mrf.mxu0
        %v638 = vadd.f32 %v303, %v637
        %v639 = vpop.f32.mrf.mxu0
        %v640 = vadd.f32 %v303, %v639
        %641 = vmatprep.mubr.f32.mxu0 0.0
        %642 = vmatmul.mubr.f32.gmra.mxu0 %v453
        %v643 = vpop.f32.mrf.mxu0
        %v644 = vadd.f32 %v308, %v643
        %v645 = vpop.f32.mrf.mxu0
        %v646 = vadd.f32 %v308, %v645
        %647 = vmatprep.mubr.f32.mxu0 0.0
        %648 = vmatmul.mubr.f32.gmra.mxu0 %v456
        %v649 = vpop.f32.mrf.mxu0
        %v650 = vadd.f32 %v313, %v649
        %v651 = vpop.f32.mrf.mxu0
        %v652 = vadd.f32 %v313, %v651
        %653 = vmatprep.mubr.f32.mxu0 0.0
        %654 = vmatmul.mubr.f32.gmra.mxu0 %v459
        %v655 = vpop.f32.mrf.mxu0
        %v656 = vadd.f32 %v318, %v655
        %v657 = vpop.f32.mrf.mxu0
        %v658 = vadd.f32 %v318, %v657
        %659 = vmatprep.mubr.f32.mxu0 0.0
        %660 = vmatmul.mubr.f32.gmra.mxu0 %v462
        %v661 = vpop.f32.mrf.mxu0
        %v662 = vadd.f32 %v323, %v661
        %v663 = vpop.f32.mrf.mxu0
        %v664 = vadd.f32 %v323, %v663
        %665 = vmatprep.mubr.f32.mxu0 0.0
        %666 = vmatmul.mubr.f32.gmra.mxu0 %v465
        %v667 = vpop.f32.mrf.mxu0
        %v668 = vadd.f32 %v328, %v667
        %v669 = vpop.f32.mrf.mxu0
        %v670 = vadd.f32 %v328, %v669
        %671 = vmatprep.mubr.f32.mxu0 0.0
        %672 = vmatmul.mubr.f32.gmra.mxu0 %v468
        %v673 = vpop.f32.mrf.mxu0
        %v674 = vadd.f32 %v333, %v673
        %v675 = vpop.f32.mrf.mxu0
        %v676 = vadd.f32 %v333, %v675
        %677 = vmatprep.mubr.f32.mxu0 0.0
        %678 = vmatmul.mubr.f32.gmra.mxu0 %v471
        %v679 = vpop.f32.mrf.mxu0
        %v680 = vadd.f32 %v338, %v679
        %v681 = vpop.f32.mrf.mxu0
        %v682 = vadd.f32 %v338, %v681
        %683 = vmatprep.mubr.f32.mxu0 0.0
        %684 = vmatmul.mubr.f32.gmra.mxu0 %v474
        %v685 = vpop.f32.mrf.mxu0
        %v686 = vadd.f32 %v343, %v685
        %v687 = vpop.f32.mrf.mxu0
        %v688 = vadd.f32 %v343, %v687
        %689 = vmatprep.mubr.f32.mxu0 0.0
        %690 = vmatmul.mubr.f32.gmra.mxu0 %v477
        %v691 = vpop.f32.mrf.mxu0
        %v692 = vadd.f32 %v348, %v691
        %v693 = vpop.f32.mrf.mxu0
        %v694 = vadd.f32 %v348, %v693
        %695 = vmatprep.mubr.f32.mxu0 0.0
        %696 = vmatmul.mubr.f32.gmra.mxu0 %v480
        %v697 = vpop.f32.mrf.mxu0
        %v698 = vadd.f32 %v353, %v697
        %v699 = vpop.f32.mrf.mxu0
        %v700 = vadd.f32 %v353, %v699
        %701 = vmatprep.mubr.f32.mxu0 0.0
        %702 = vmatmul.mubr.f32.gmra.mxu0 %v483
        %v703 = vpop.f32.mrf.mxu0
        %v704 = vadd.f32 %v358, %v703
        %v705 = vpop.f32.mrf.mxu0
        %v706 = vadd.f32 %v358, %v705
        %707 = vmatprep.mubr.f32.mxu0 0.0
        %708 = vmatmul.mubr.f32.gmra.mxu0 %v486
        %v709 = vpop.f32.mrf.mxu0
        %v710 = vadd.f32 %v363, %v709
        %v711 = vpop.f32.mrf.mxu0
        %v712 = vadd.f32 %v363, %v711
        %713 = vmatprep.mubr.f32.mxu0 0.0
        %714 = vmatmul.mubr.f32.gmra.mxu0 %v489
        %v715 = vpop.f32.mrf.mxu0
        %v716 = vadd.f32 %v368, %v715
        %v717 = vpop.f32.mrf.mxu0
        %v718 = vadd.f32 %v368, %v717
        %719 = vmatprep.mubr.f32.mxu0 0.0
        %720 = vmatmul.mubr.f32.gmra.mxu0 %v492
        %v721 = vpop.f32.mrf.mxu0
        %v722 = vadd.f32 %v373, %v721
        %v723 = vpop.f32.mrf.mxu0
        %v724 = vadd.f32 %v373, %v723
        %725 = vmatprep.mubr.f32.mxu0 0.0
        %726 = vmatmul.mubr.f32.gmra.mxu0 %v495
        %v727 = vpop.f32.mrf.mxu0
        %v728 = vadd.f32 %v378, %v727
        %v729 = vpop.f32.mrf.mxu0
        %v730 = vadd.f32 %v378, %v729
        %731 = vmatprep.mubr.f32.mxu0 0.0
        %732 = vmatmul.mubr.f32.gmra.mxu0 %v498
        %v733 = vpop.f32.mrf.mxu0
        %v734 = vadd.f32 %v383, %v733
        %v735 = vpop.f32.mrf.mxu0
        %v736 = vadd.f32 %v383, %v735
        %737 = vmatprep.mubr.f32.mxu0 0.0
        %738 = vmatmul.mubr.f32.gmra.mxu0 %v501
        %v739 = vpop.f32.mrf.mxu0
        %v740 = vadd.f32 %v388, %v739
        %v741 = vpop.f32.mrf.mxu0
        %v742 = vadd.f32 %v388, %v741
        %743 = vmatprep.mubr.f32.mxu0 0.0
        %744 = vmatmul.mubr.f32.gmra.mxu0 %v504
        %v745 = vpop.f32.mrf.mxu0
        %v746 = vadd.f32 %v393, %v745
        %v747 = vpop.f32.mrf.mxu0
        %v748 = vadd.f32 %v393, %v747
        %749 = vmatprep.mubr.f32.mxu0 0.0
        %750 = vmatmul.mubr.f32.gmra.mxu0 %v507
        %v751 = vpop.f32.mrf.mxu0
        %v752 = vadd.f32 %v398, %v751
        %v753 = vpop.f32.mrf.mxu0
        %v754 = vadd.f32 %v398, %v753
        %755 = vmatprep.mubr.f32.mxu0 0.0
        %756 = vmatmul.mubr.f32.gmra.mxu0 %v510
        %v757 = vpop.f32.mrf.mxu0
        %v758 = vadd.f32 %v403, %v757
        %v759 = vpop.f32.mrf.mxu0
        %v760 = vadd.f32 %v403, %v759
        %761 = vmatprep.mubr.f32.mxu0 0.0
        %762 = vmatmul.mubr.f32.gmra.mxu0 %v513
        %v763 = vpop.f32.mrf.mxu0
        %v764 = vadd.f32 %v408, %v763
        %v765 = vpop.f32.mrf.mxu0
        %v766 = vadd.f32 %v408, %v765
        %767 = vmatprep.mubr.f32.mxu0 0.0
        %768 = vmatmul.mubr.f32.gmra.mxu0 %v516
        %v769 = vpop.f32.mrf.mxu0
        %v770 = vadd.f32 %v413, %v769
        %v771 = vpop.f32.mrf.mxu0
        %v772 = vadd.f32 %v413, %v771
        %773 = vmatprep.mubr.f32.mxu0 0.0
        %774 = vmatmul.mubr.f32.gmra.mxu0 %v519
        %v775 = vpop.f32.mrf.mxu0
        %v776 = vadd.f32 %v418, %v775
        %v777 = vpop.f32.mrf.mxu0
        %v778 = vadd.f32 %v418, %v777
        %779 = vmatprep.mubr.f32.mxu0 0.0
        %780 = vmatmul.mubr.f32.gmra.mxu0 %v522
        %v781 = vpop.f32.mrf.mxu0
        %v782 = vadd.f32 %v423, %v781
        %v783 = vpop.f32.mrf.mxu0
        %v784 = vadd.f32 %v423, %v783
        %785 = vdwg.mxu0
        %v786 = vlaneseq
        %v787 = vshrl.u32 %v786, 7
        %v788 = vadd.s32 %v787, 8
        %v789 = vadd.s32 %v787, 16
        %v790 = vadd.s32 %v787, 24
        %v791 = vadd.s32 %v787, 32
        %v792 = vadd.s32 %v787, 40
        %v793 = vadd.s32 %v787, 48
        %v794 = vadd.s32 %v787, 56
        %v795 = vadd.s32 %v787, 64
        %v796 = vadd.s32 %v787, 72
        %v797 = vadd.s32 %v787, 80
        %v798 = vadd.s32 %v787, 88
        %v799 = vadd.s32 %v787, 96
        %v800 = vadd.s32 %v787, 104
        %v801 = vadd.s32 %v787, 112
        %v802 = vadd.s32 %v787, 120
        %v803 = vadd.s32 %v787, 128
        %v804 = vadd.s32 %v787, 136
        %v805 = vadd.s32 %v787, 144
        %v806 = vadd.s32 %v787, 152
        %v807 = vadd.s32 %v787, 160
        %v808 = vadd.s32 %v787, 168
        %v809 = vadd.s32 %v787, 176
        %v810 = vadd.s32 %v787, 184
        %v811 = vadd.s32 %v787, 192
        %v812 = vadd.s32 %v787, 200
        %v813 = vadd.s32 %v787, 208
        %v814 = vadd.s32 %v787, 216
        %v815 = vadd.s32 %v787, 224
        %v816 = vadd.s32 %v787, 232
        %v817 = vadd.s32 %v787, 240
        %v818 = vadd.s32 %v787, 248
        %v819 = vcvt.s32.f32 %v787
        %v820 = vcvt.s32.f32 %v788
        %v821 = vcvt.s32.f32 %v789
        %v822 = vcvt.s32.f32 %v790
        %v823 = vcvt.s32.f32 %v791
        %v824 = vcvt.s32.f32 %v792
        %v825 = vcvt.s32.f32 %v793
        %v826 = vcvt.s32.f32 %v794
        %v827 = vcvt.s32.f32 %v795
        %v828 = vcvt.s32.f32 %v796
        %v829 = vcvt.s32.f32 %v797
        %v830 = vcvt.s32.f32 %v798
        %v831 = vcvt.s32.f32 %v799
        %v832 = vcvt.s32.f32 %v800
        %v833 = vcvt.s32.f32 %v801
        %v834 = vcvt.s32.f32 %v802
        %v835 = vcvt.s32.f32 %v803
        %v836 = vcvt.s32.f32 %v804
        %v837 = vcvt.s32.f32 %v805
        %v838 = vcvt.s32.f32 %v806
        %v839 = vcvt.s32.f32 %v807
        %v840 = vcvt.s32.f32 %v808
        %v841 = vcvt.s32.f32 %v809
        %v842 = vcvt.s32.f32 %v810
        %v843 = vcvt.s32.f32 %v811
        %v844 = vcvt.s32.f32 %v812
        %v845 = vcvt.s32.f32 %v813
        %v846 = vcvt.s32.f32 %v814
        %v847 = vcvt.s32.f32 %v815
        %v848 = vcvt.s32.f32 %v816
        %v849 = vcvt.s32.f32 %v817
        %v850 = vcvt.s32.f32 %v818
        %v851 = vlaneseq
        %v852 = vand.u32 %v851, 127
        %v853 = vadd.s32 %v852, 128
        %v854 = vcvt.s32.f32 %v852
        %v855 = vcvt.s32.f32 %v853
        %s856 = smul.u32 %s22, 256
        %s857 = scvt.s32.f32 %s856
        %v858 = vstv %s857
        %v859 = vadd.f32 %v854, %v858
        %v860 = vadd.f32 %v855, %v858
        %v861 = vmul.f32 %v819, 256.0
        %v862 = vmul.f32 %v820, 256.0
        %v863 = vmul.f32 %v821, 256.0
        %v864 = vmul.f32 %v822, 256.0
        %v865 = vmul.f32 %v823, 256.0
        %v866 = vmul.f32 %v824, 256.0
        %v867 = vmul.f32 %v825, 256.0
        %v868 = vmul.f32 %v826, 256.0
        %v869 = vmul.f32 %v827, 256.0
        %v870 = vmul.f32 %v828, 256.0
        %v871 = vmul.f32 %v829, 256.0
        %v872 = vmul.f32 %v830, 256.0
        %v873 = vmul.f32 %v831, 256.0
        %v874 = vmul.f32 %v832, 256.0
        %v875 = vmul.f32 %v833, 256.0
        %v876 = vmul.f32 %v834, 256.0
        %v877 = vmul.f32 %v835, 256.0
        %v878 = vmul.f32 %v836, 256.0
        %v879 = vmul.f32 %v837, 256.0
        %v880 = vmul.f32 %v838, 256.0
        %v881 = vmul.f32 %v839, 256.0
        %v882 = vmul.f32 %v840, 256.0
        %v883 = vmul.f32 %v841, 256.0
        %v884 = vmul.f32 %v842, 256.0
        %v885 = vmul.f32 %v843, 256.0
        %v886 = vmul.f32 %v844, 256.0
        %v887 = vmul.f32 %v845, 256.0
        %v888 = vmul.f32 %v846, 256.0
        %v889 = vmul.f32 %v847, 256.0
        %v890 = vmul.f32 %v848, 256.0
        %v891 = vmul.f32 %v849, 256.0
        %v892 = vmul.f32 %v850, 256.0
        %v893 = vadd.f32 %v861, %v859
        %v894 = vadd.f32 %v861, %v860
        %v895 = vadd.f32 %v862, %v859
        %v896 = vadd.f32 %v862, %v860
        %v897 = vadd.f32 %v863, %v859
        %v898 = vadd.f32 %v863, %v860
        %v899 = vadd.f32 %v864, %v859
        %v900 = vadd.f32 %v864, %v860
        %v901 = vadd.f32 %v865, %v859
        %v902 = vadd.f32 %v865, %v860
        %v903 = vadd.f32 %v866, %v859
        %v904 = vadd.f32 %v866, %v860
        %v905 = vadd.f32 %v867, %v859
        %v906 = vadd.f32 %v867, %v860
        %v907 = vadd.f32 %v868, %v859
        %v908 = vadd.f32 %v868, %v860
        %v909 = vadd.f32 %v869, %v859
        %v910 = vadd.f32 %v869, %v860
        %v911 = vadd.f32 %v870, %v859
        %v912 = vadd.f32 %v870, %v860
        %v913 = vadd.f32 %v871, %v859
        %v914 = vadd.f32 %v871, %v860
        %v915 = vadd.f32 %v872, %v859
        %v916 = vadd.f32 %v872, %v860
        %v917 = vadd.f32 %v873, %v859
        %v918 = vadd.f32 %v873, %v860
        %v919 = vadd.f32 %v874, %v859
        %v920 = vadd.f32 %v874, %v860
        %v921 = vadd.f32 %v875, %v859
        %v922 = vadd.f32 %v875, %v860
        %v923 = vadd.f32 %v876, %v859
        %v924 = vadd.f32 %v876, %v860
        %v925 = vadd.f32 %v877, %v859
        %v926 = vadd.f32 %v877, %v860
        %v927 = vadd.f32 %v878, %v859
        %v928 = vadd.f32 %v878, %v860
        %v929 = vadd.f32 %v879, %v859
        %v930 = vadd.f32 %v879, %v860
        %v931 = vadd.f32 %v880, %v859
        %v932 = vadd.f32 %v880, %v860
        %v933 = vadd.f32 %v881, %v859
        %v934 = vadd.f32 %v881, %v860
        %v935 = vadd.f32 %v882, %v859
        %v936 = vadd.f32 %v882, %v860
        %v937 = vadd.f32 %v883, %v859
        %v938 = vadd.f32 %v883, %v860
        %v939 = vadd.f32 %v884, %v859
        %v940 = vadd.f32 %v884, %v860
        %v941 = vadd.f32 %v885, %v859
        %v942 = vadd.f32 %v885, %v860
        %v943 = vadd.f32 %v886, %v859
        %v944 = vadd.f32 %v886, %v860
        %v945 = vadd.f32 %v887, %v859
        %v946 = vadd.f32 %v887, %v860
        %v947 = vadd.f32 %v888, %v859
        %v948 = vadd.f32 %v888, %v860
        %v949 = vadd.f32 %v889, %v859
        %v950 = vadd.f32 %v889, %v860
        %v951 = vadd.f32 %v890, %v859
        %v952 = vadd.f32 %v890, %v860
        %v953 = vadd.f32 %v891, %v859
        %v954 = vadd.f32 %v891, %v860
        %v955 = vadd.f32 %v892, %v859
        %v956 = vadd.f32 %v892, %v860
        %v957 = vadd.f32 %v893, 0.5
        %v958 = vadd.f32 %v894, 0.5
        %v959 = vadd.f32 %v895, 0.5
        %v960 = vadd.f32 %v896, 0.5
        %v961 = vadd.f32 %v897, 0.5
        %v962 = vadd.f32 %v898, 0.5
        %v963 = vadd.f32 %v899, 0.5
        %v964 = vadd.f32 %v900, 0.5
        %v965 = vadd.f32 %v901, 0.5
        %v966 = vadd.f32 %v902, 0.5
        %v967 = vadd.f32 %v903, 0.5
        %v968 = vadd.f32 %v904, 0.5
        %v969 = vadd.f32 %v905, 0.5
        %v970 = vadd.f32 %v906, 0.5
        %v971 = vadd.f32 %v907, 0.5
        %v972 = vadd.f32 %v908, 0.5
        %v973 = vadd.f32 %v909, 0.5
        %v974 = vadd.f32 %v910, 0.5
        %v975 = vadd.f32 %v911, 0.5
        %v976 = vadd.f32 %v912, 0.5
        %v977 = vadd.f32 %v913, 0.5
        %v978 = vadd.f32 %v914, 0.5
        %v979 = vadd.f32 %v915, 0.5
        %v980 = vadd.f32 %v916, 0.5
        %v981 = vadd.f32 %v917, 0.5
        %v982 = vadd.f32 %v918, 0.5
        %v983 = vadd.f32 %v919, 0.5
        %v984 = vadd.f32 %v920, 0.5
        %v985 = vadd.f32 %v921, 0.5
        %v986 = vadd.f32 %v922, 0.5
        %v987 = vadd.f32 %v923, 0.5
        %v988 = vadd.f32 %v924, 0.5
        %v989 = vadd.f32 %v925, 0.5
        %v990 = vadd.f32 %v926, 0.5
        %v991 = vadd.f32 %v927, 0.5
        %v992 = vadd.f32 %v928, 0.5
        %v993 = vadd.f32 %v929, 0.5
        %v994 = vadd.f32 %v930, 0.5
        %v995 = vadd.f32 %v931, 0.5
        %v996 = vadd.f32 %v932, 0.5
        %v997 = vadd.f32 %v933, 0.5
        %v998 = vadd.f32 %v934, 0.5
        %v999 = vadd.f32 %v935, 0.5
        %v1000 = vadd.f32 %v936, 0.5
        %v1001 = vadd.f32 %v937, 0.5
        %v1002 = vadd.f32 %v938, 0.5
        %v1003 = vadd.f32 %v939, 0.5
        %v1004 = vadd.f32 %v940, 0.5
        %v1005 = vadd.f32 %v941, 0.5
        %v1006 = vadd.f32 %v942, 0.5
        %v1007 = vadd.f32 %v943, 0.5
        %v1008 = vadd.f32 %v944, 0.5
        %v1009 = vadd.f32 %v945, 0.5
        %v1010 = vadd.f32 %v946, 0.5
        %v1011 = vadd.f32 %v947, 0.5
        %v1012 = vadd.f32 %v948, 0.5
        %v1013 = vadd.f32 %v949, 0.5
        %v1014 = vadd.f32 %v950, 0.5
        %v1015 = vadd.f32 %v951, 0.5
        %v1016 = vadd.f32 %v952, 0.5
        %v1017 = vadd.f32 %v953, 0.5
        %v1018 = vadd.f32 %v954, 0.5
        %v1019 = vadd.f32 %v955, 0.5
        %v1020 = vadd.f32 %v956, 0.5
        %v1021 = vmul.f32 %v957, 0.011764706
        %v1022 = vmul.f32 %v958, 0.011764706
        %v1023 = vmul.f32 %v959, 0.011764706
        %v1024 = vmul.f32 %v960, 0.011764706
        %v1025 = vmul.f32 %v961, 0.011764706
        %v1026 = vmul.f32 %v962, 0.011764706
        %v1027 = vmul.f32 %v963, 0.011764706
        %v1028 = vmul.f32 %v964, 0.011764706
        %v1029 = vmul.f32 %v965, 0.011764706
        %v1030 = vmul.f32 %v966, 0.011764706
        %v1031 = vmul.f32 %v967, 0.011764706
        %v1032 = vmul.f32 %v968, 0.011764706
        %v1033 = vmul.f32 %v969, 0.011764706
        %v1034 = vmul.f32 %v970, 0.011764706
        %v1035 = vmul.f32 %v971, 0.011764706
        %v1036 = vmul.f32 %v972, 0.011764706
        %v1037 = vmul.f32 %v973, 0.011764706
        %v1038 = vmul.f32 %v974, 0.011764706
        %v1039 = vmul.f32 %v975, 0.011764706
        %v1040 = vmul.f32 %v976, 0.011764706
        %v1041 = vmul.f32 %v977, 0.011764706
        %v1042 = vmul.f32 %v978, 0.011764706
        %v1043 = vmul.f32 %v979, 0.011764706
        %v1044 = vmul.f32 %v980, 0.011764706
        %v1045 = vmul.f32 %v981, 0.011764706
        %v1046 = vmul.f32 %v982, 0.011764706
        %v1047 = vmul.f32 %v983, 0.011764706
        %v1048 = vmul.f32 %v984, 0.011764706
        %v1049 = vmul.f32 %v985, 0.011764706
        %v1050 = vmul.f32 %v986, 0.011764706
        %v1051 = vmul.f32 %v987, 0.011764706
        %v1052 = vmul.f32 %v988, 0.011764706
        %v1053 = vmul.f32 %v989, 0.011764706
        %v1054 = vmul.f32 %v990, 0.011764706
        %v1055 = vmul.f32 %v991, 0.011764706
        %v1056 = vmul.f32 %v992, 0.011764706
        %v1057 = vmul.f32 %v993, 0.011764706
        %v1058 = vmul.f32 %v994, 0.011764706
        %v1059 = vmul.f32 %v995, 0.011764706
        %v1060 = vmul.f32 %v996, 0.011764706
        %v1061 = vmul.f32 %v997, 0.011764706
        %v1062 = vmul.f32 %v998, 0.011764706
        %v1063 = vmul.f32 %v999, 0.011764706
        %v1064 = vmul.f32 %v1000, 0.011764706
        %v1065 = vmul.f32 %v1001, 0.011764706
        %v1066 = vmul.f32 %v1002, 0.011764706
        %v1067 = vmul.f32 %v1003, 0.011764706
        %v1068 = vmul.f32 %v1004, 0.011764706
        %v1069 = vmul.f32 %v1005, 0.011764706
        %v1070 = vmul.f32 %v1006, 0.011764706
        %v1071 = vmul.f32 %v1007, 0.011764706
        %v1072 = vmul.f32 %v1008, 0.011764706
        %v1073 = vmul.f32 %v1009, 0.011764706
        %v1074 = vmul.f32 %v1010, 0.011764706
        %v1075 = vmul.f32 %v1011, 0.011764706
        %v1076 = vmul.f32 %v1012, 0.011764706
        %v1077 = vmul.f32 %v1013, 0.011764706
        %v1078 = vmul.f32 %v1014, 0.011764706
        %v1079 = vmul.f32 %v1015, 0.011764706
        %v1080 = vmul.f32 %v1016, 0.011764706
        %v1081 = vmul.f32 %v1017, 0.011764706
        %v1082 = vmul.f32 %v1018, 0.011764706
        %v1083 = vmul.f32 %v1019, 0.011764706
        %v1084 = vmul.f32 %v1020, 0.011764706
        %v1085 = vfloor.f32 %v1021
        %v1086 = vfloor.f32 %v1022
        %v1087 = vfloor.f32 %v1023
        %v1088 = vfloor.f32 %v1024
        %v1089 = vfloor.f32 %v1025
        %v1090 = vfloor.f32 %v1026
        %v1091 = vfloor.f32 %v1027
        %v1092 = vfloor.f32 %v1028
        %v1093 = vfloor.f32 %v1029
        %v1094 = vfloor.f32 %v1030
        %v1095 = vfloor.f32 %v1031
        %v1096 = vfloor.f32 %v1032
        %v1097 = vfloor.f32 %v1033
        %v1098 = vfloor.f32 %v1034
        %v1099 = vfloor.f32 %v1035
        %v1100 = vfloor.f32 %v1036
        %v1101 = vfloor.f32 %v1037
        %v1102 = vfloor.f32 %v1038
        %v1103 = vfloor.f32 %v1039
        %v1104 = vfloor.f32 %v1040
        %v1105 = vfloor.f32 %v1041
        %v1106 = vfloor.f32 %v1042
        %v1107 = vfloor.f32 %v1043
        %v1108 = vfloor.f32 %v1044
        %v1109 = vfloor.f32 %v1045
        %v1110 = vfloor.f32 %v1046
        %v1111 = vfloor.f32 %v1047
        %v1112 = vfloor.f32 %v1048
        %v1113 = vfloor.f32 %v1049
        %v1114 = vfloor.f32 %v1050
        %v1115 = vfloor.f32 %v1051
        %v1116 = vfloor.f32 %v1052
        %v1117 = vfloor.f32 %v1053
        %v1118 = vfloor.f32 %v1054
        %v1119 = vfloor.f32 %v1055
        %v1120 = vfloor.f32 %v1056
        %v1121 = vfloor.f32 %v1057
        %v1122 = vfloor.f32 %v1058
        %v1123 = vfloor.f32 %v1059
        %v1124 = vfloor.f32 %v1060
        %v1125 = vfloor.f32 %v1061
        %v1126 = vfloor.f32 %v1062
        %v1127 = vfloor.f32 %v1063
        %v1128 = vfloor.f32 %v1064
        %v1129 = vfloor.f32 %v1065
        %v1130 = vfloor.f32 %v1066
        %v1131 = vfloor.f32 %v1067
        %v1132 = vfloor.f32 %v1068
        %v1133 = vfloor.f32 %v1069
        %v1134 = vfloor.f32 %v1070
        %v1135 = vfloor.f32 %v1071
        %v1136 = vfloor.f32 %v1072
        %v1137 = vfloor.f32 %v1073
        %v1138 = vfloor.f32 %v1074
        %v1139 = vfloor.f32 %v1075
        %v1140 = vfloor.f32 %v1076
        %v1141 = vfloor.f32 %v1077
        %v1142 = vfloor.f32 %v1078
        %v1143 = vfloor.f32 %v1079
        %v1144 = vfloor.f32 %v1080
        %v1145 = vfloor.f32 %v1081
        %v1146 = vfloor.f32 %v1082
        %v1147 = vfloor.f32 %v1083
        %v1148 = vfloor.f32 %v1084
        %v1149 = vmul.f32 %v1085, 85.0
        %v1150 = vmul.f32 %v1086, 85.0
        %v1151 = vmul.f32 %v1087, 85.0
        %v1152 = vmul.f32 %v1088, 85.0
        %v1153 = vmul.f32 %v1089, 85.0
        %v1154 = vmul.f32 %v1090, 85.0
        %v1155 = vmul.f32 %v1091, 85.0
        %v1156 = vmul.f32 %v1092, 85.0
        %v1157 = vmul.f32 %v1093, 85.0
        %v1158 = vmul.f32 %v1094, 85.0
        %v1159 = vmul.f32 %v1095, 85.0
        %v1160 = vmul.f32 %v1096, 85.0
        %v1161 = vmul.f32 %v1097, 85.0
        %v1162 = vmul.f32 %v1098, 85.0
        %v1163 = vmul.f32 %v1099, 85.0
        %v1164 = vmul.f32 %v1100, 85.0
        %v1165 = vmul.f32 %v1101, 85.0
        %v1166 = vmul.f32 %v1102, 85.0
        %v1167 = vmul.f32 %v1103, 85.0
        %v1168 = vmul.f32 %v1104, 85.0
        %v1169 = vmul.f32 %v1105, 85.0
        %v1170 = vmul.f32 %v1106, 85.0
        %v1171 = vmul.f32 %v1107, 85.0
        %v1172 = vmul.f32 %v1108, 85.0
        %v1173 = vmul.f32 %v1109, 85.0
        %v1174 = vmul.f32 %v1110, 85.0
        %v1175 = vmul.f32 %v1111, 85.0
        %v1176 = vmul.f32 %v1112, 85.0
        %v1177 = vmul.f32 %v1113, 85.0
        %v1178 = vmul.f32 %v1114, 85.0
        %v1179 = vmul.f32 %v1115, 85.0
        %v1180 = vmul.f32 %v1116, 85.0
        %v1181 = vmul.f32 %v1117, 85.0
        %v1182 = vmul.f32 %v1118, 85.0
        %v1183 = vmul.f32 %v1119, 85.0
        %v1184 = vmul.f32 %v1120, 85.0
        %v1185 = vmul.f32 %v1121, 85.0
        %v1186 = vmul.f32 %v1122, 85.0
        %v1187 = vmul.f32 %v1123, 85.0
        %v1188 = vmul.f32 %v1124, 85.0
        %v1189 = vmul.f32 %v1125, 85.0
        %v1190 = vmul.f32 %v1126, 85.0
        %v1191 = vmul.f32 %v1127, 85.0
        %v1192 = vmul.f32 %v1128, 85.0
        %v1193 = vmul.f32 %v1129, 85.0
        %v1194 = vmul.f32 %v1130, 85.0
        %v1195 = vmul.f32 %v1131, 85.0
        %v1196 = vmul.f32 %v1132, 85.0
        %v1197 = vmul.f32 %v1133, 85.0
        %v1198 = vmul.f32 %v1134, 85.0
        %v1199 = vmul.f32 %v1135, 85.0
        %v1200 = vmul.f32 %v1136, 85.0
        %v1201 = vmul.f32 %v1137, 85.0
        %v1202 = vmul.f32 %v1138, 85.0
        %v1203 = vmul.f32 %v1139, 85.0
        %v1204 = vmul.f32 %v1140, 85.0
        %v1205 = vmul.f32 %v1141, 85.0
        %v1206 = vmul.f32 %v1142, 85.0
        %v1207 = vmul.f32 %v1143, 85.0
        %v1208 = vmul.f32 %v1144, 85.0
        %v1209 = vmul.f32 %v1145, 85.0
        %v1210 = vmul.f32 %v1146, 85.0
        %v1211 = vmul.f32 %v1147, 85.0
        %v1212 = vmul.f32 %v1148, 85.0
        %v1213 = vsub.f32 %v893, %v1149
        %v1214 = vsub.f32 %v894, %v1150
        %v1215 = vsub.f32 %v895, %v1151
        %v1216 = vsub.f32 %v896, %v1152
        %v1217 = vsub.f32 %v897, %v1153
        %v1218 = vsub.f32 %v898, %v1154
        %v1219 = vsub.f32 %v899, %v1155
        %v1220 = vsub.f32 %v900, %v1156
        %v1221 = vsub.f32 %v901, %v1157
        %v1222 = vsub.f32 %v902, %v1158
        %v1223 = vsub.f32 %v903, %v1159
        %v1224 = vsub.f32 %v904, %v1160
        %v1225 = vsub.f32 %v905, %v1161
        %v1226 = vsub.f32 %v906, %v1162
        %v1227 = vsub.f32 %v907, %v1163
        %v1228 = vsub.f32 %v908, %v1164
        %v1229 = vsub.f32 %v909, %v1165
        %v1230 = vsub.f32 %v910, %v1166
        %v1231 = vsub.f32 %v911, %v1167
        %v1232 = vsub.f32 %v912, %v1168
        %v1233 = vsub.f32 %v913, %v1169
        %v1234 = vsub.f32 %v914, %v1170
        %v1235 = vsub.f32 %v915, %v1171
        %v1236 = vsub.f32 %v916, %v1172
        %v1237 = vsub.f32 %v917, %v1173
        %v1238 = vsub.f32 %v918, %v1174
        %v1239 = vsub.f32 %v919, %v1175
        %v1240 = vsub.f32 %v920, %v1176
        %v1241 = vsub.f32 %v921, %v1177
        %v1242 = vsub.f32 %v922, %v1178
        %v1243 = vsub.f32 %v923, %v1179
        %v1244 = vsub.f32 %v924, %v1180
        %v1245 = vsub.f32 %v925, %v1181
        %v1246 = vsub.f32 %v926, %v1182
        %v1247 = vsub.f32 %v927, %v1183
        %v1248 = vsub.f32 %v928, %v1184
        %v1249 = vsub.f32 %v929, %v1185
        %v1250 = vsub.f32 %v930, %v1186
        %v1251 = vsub.f32 %v931, %v1187
        %v1252 = vsub.f32 %v932, %v1188
        %v1253 = vsub.f32 %v933, %v1189
        %v1254 = vsub.f32 %v934, %v1190
        %v1255 = vsub.f32 %v935, %v1191
        %v1256 = vsub.f32 %v936, %v1192
        %v1257 = vsub.f32 %v937, %v1193
        %v1258 = vsub.f32 %v938, %v1194
        %v1259 = vsub.f32 %v939, %v1195
        %v1260 = vsub.f32 %v940, %v1196
        %v1261 = vsub.f32 %v941, %v1197
        %v1262 = vsub.f32 %v942, %v1198
        %v1263 = vsub.f32 %v943, %v1199
        %v1264 = vsub.f32 %v944, %v1200
        %v1265 = vsub.f32 %v945, %v1201
        %v1266 = vsub.f32 %v946, %v1202
        %v1267 = vsub.f32 %v947, %v1203
        %v1268 = vsub.f32 %v948, %v1204
        %v1269 = vsub.f32 %v949, %v1205
        %v1270 = vsub.f32 %v950, %v1206
        %v1271 = vsub.f32 %v951, %v1207
        %v1272 = vsub.f32 %v952, %v1208
        %v1273 = vsub.f32 %v953, %v1209
        %v1274 = vsub.f32 %v954, %v1210
        %v1275 = vsub.f32 %v955, %v1211
        %v1276 = vsub.f32 %v956, %v1212
        %v1277 = vadd.f32 %v1085, 0.5
        %v1278 = vadd.f32 %v1086, 0.5
        %v1279 = vadd.f32 %v1087, 0.5
        %v1280 = vadd.f32 %v1088, 0.5
        %v1281 = vadd.f32 %v1089, 0.5
        %v1282 = vadd.f32 %v1090, 0.5
        %v1283 = vadd.f32 %v1091, 0.5
        %v1284 = vadd.f32 %v1092, 0.5
        %v1285 = vadd.f32 %v1093, 0.5
        %v1286 = vadd.f32 %v1094, 0.5
        %v1287 = vadd.f32 %v1095, 0.5
        %v1288 = vadd.f32 %v1096, 0.5
        %v1289 = vadd.f32 %v1097, 0.5
        %v1290 = vadd.f32 %v1098, 0.5
        %v1291 = vadd.f32 %v1099, 0.5
        %v1292 = vadd.f32 %v1100, 0.5
        %v1293 = vadd.f32 %v1101, 0.5
        %v1294 = vadd.f32 %v1102, 0.5
        %v1295 = vadd.f32 %v1103, 0.5
        %v1296 = vadd.f32 %v1104, 0.5
        %v1297 = vadd.f32 %v1105, 0.5
        %v1298 = vadd.f32 %v1106, 0.5
        %v1299 = vadd.f32 %v1107, 0.5
        %v1300 = vadd.f32 %v1108, 0.5
        %v1301 = vadd.f32 %v1109, 0.5
        %v1302 = vadd.f32 %v1110, 0.5
        %v1303 = vadd.f32 %v1111, 0.5
        %v1304 = vadd.f32 %v1112, 0.5
        %v1305 = vadd.f32 %v1113, 0.5
        %v1306 = vadd.f32 %v1114, 0.5
        %v1307 = vadd.f32 %v1115, 0.5
        %v1308 = vadd.f32 %v1116, 0.5
        %v1309 = vadd.f32 %v1117, 0.5
        %v1310 = vadd.f32 %v1118, 0.5
        %v1311 = vadd.f32 %v1119, 0.5
        %v1312 = vadd.f32 %v1120, 0.5
        %v1313 = vadd.f32 %v1121, 0.5
        %v1314 = vadd.f32 %v1122, 0.5
        %v1315 = vadd.f32 %v1123, 0.5
        %v1316 = vadd.f32 %v1124, 0.5
        %v1317 = vadd.f32 %v1125, 0.5
        %v1318 = vadd.f32 %v1126, 0.5
        %v1319 = vadd.f32 %v1127, 0.5
        %v1320 = vadd.f32 %v1128, 0.5
        %v1321 = vadd.f32 %v1129, 0.5
        %v1322 = vadd.f32 %v1130, 0.5
        %v1323 = vadd.f32 %v1131, 0.5
        %v1324 = vadd.f32 %v1132, 0.5
        %v1325 = vadd.f32 %v1133, 0.5
        %v1326 = vadd.f32 %v1134, 0.5
        %v1327 = vadd.f32 %v1135, 0.5
        %v1328 = vadd.f32 %v1136, 0.5
        %v1329 = vadd.f32 %v1137, 0.5
        %v1330 = vadd.f32 %v1138, 0.5
        %v1331 = vadd.f32 %v1139, 0.5
        %v1332 = vadd.f32 %v1140, 0.5
        %v1333 = vadd.f32 %v1141, 0.5
        %v1334 = vadd.f32 %v1142, 0.5
        %v1335 = vadd.f32 %v1143, 0.5
        %v1336 = vadd.f32 %v1144, 0.5
        %v1337 = vadd.f32 %v1145, 0.5
        %v1338 = vadd.f32 %v1146, 0.5
        %v1339 = vadd.f32 %v1147, 0.5
        %v1340 = vadd.f32 %v1148, 0.5
        %v1341 = vmul.f32 %v1277, 0.33333334
        %v1342 = vmul.f32 %v1278, 0.33333334
        %v1343 = vmul.f32 %v1279, 0.33333334
        %v1344 = vmul.f32 %v1280, 0.33333334
        %v1345 = vmul.f32 %v1281, 0.33333334
        %v1346 = vmul.f32 %v1282, 0.33333334
        %v1347 = vmul.f32 %v1283, 0.33333334
        %v1348 = vmul.f32 %v1284, 0.33333334
        %v1349 = vmul.f32 %v1285, 0.33333334
        %v1350 = vmul.f32 %v1286, 0.33333334
        %v1351 = vmul.f32 %v1287, 0.33333334
        %v1352 = vmul.f32 %v1288, 0.33333334
        %v1353 = vmul.f32 %v1289, 0.33333334
        %v1354 = vmul.f32 %v1290, 0.33333334
        %v1355 = vmul.f32 %v1291, 0.33333334
        %v1356 = vmul.f32 %v1292, 0.33333334
        %v1357 = vmul.f32 %v1293, 0.33333334
        %v1358 = vmul.f32 %v1294, 0.33333334
        %v1359 = vmul.f32 %v1295, 0.33333334
        %v1360 = vmul.f32 %v1296, 0.33333334
        %v1361 = vmul.f32 %v1297, 0.33333334
        %v1362 = vmul.f32 %v1298, 0.33333334
        %v1363 = vmul.f32 %v1299, 0.33333334
        %v1364 = vmul.f32 %v1300, 0.33333334
        %v1365 = vmul.f32 %v1301, 0.33333334
        %v1366 = vmul.f32 %v1302, 0.33333334
        %v1367 = vmul.f32 %v1303, 0.33333334
        %v1368 = vmul.f32 %v1304, 0.33333334
        %v1369 = vmul.f32 %v1305, 0.33333334
        %v1370 = vmul.f32 %v1306, 0.33333334
        %v1371 = vmul.f32 %v1307, 0.33333334
        %v1372 = vmul.f32 %v1308, 0.33333334
        %v1373 = vmul.f32 %v1309, 0.33333334
        %v1374 = vmul.f32 %v1310, 0.33333334
        %v1375 = vmul.f32 %v1311, 0.33333334
        %v1376 = vmul.f32 %v1312, 0.33333334
        %v1377 = vmul.f32 %v1313, 0.33333334
        %v1378 = vmul.f32 %v1314, 0.33333334
        %v1379 = vmul.f32 %v1315, 0.33333334
        %v1380 = vmul.f32 %v1316, 0.33333334
        %v1381 = vmul.f32 %v1317, 0.33333334
        %v1382 = vmul.f32 %v1318, 0.33333334
        %v1383 = vmul.f32 %v1319, 0.33333334
        %v1384 = vmul.f32 %v1320, 0.33333334
        %v1385 = vmul.f32 %v1321, 0.33333334
        %v1386 = vmul.f32 %v1322, 0.33333334
        %v1387 = vmul.f32 %v1323, 0.33333334
        %v1388 = vmul.f32 %v1324, 0.33333334
        %v1389 = vmul.f32 %v1325, 0.33333334
        %v1390 = vmul.f32 %v1326, 0.33333334
        %v1391 = vmul.f32 %v1327, 0.33333334
        %v1392 = vmul.f32 %v1328, 0.33333334
        %v1393 = vmul.f32 %v1329, 0.33333334
        %v1394 = vmul.f32 %v1330, 0.33333334
        %v1395 = vmul.f32 %v1331, 0.33333334
        %v1396 = vmul.f32 %v1332, 0.33333334
        %v1397 = vmul.f32 %v1333, 0.33333334
        %v1398 = vmul.f32 %v1334, 0.33333334
        %v1399 = vmul.f32 %v1335, 0.33333334
        %v1400 = vmul.f32 %v1336, 0.33333334
        %v1401 = vmul.f32 %v1337, 0.33333334
        %v1402 = vmul.f32 %v1338, 0.33333334
        %v1403 = vmul.f32 %v1339, 0.33333334
        %v1404 = vmul.f32 %v1340, 0.33333334
        %v1405 = vfloor.f32 %v1341
        %v1406 = vfloor.f32 %v1342
        %v1407 = vfloor.f32 %v1343
        %v1408 = vfloor.f32 %v1344
        %v1409 = vfloor.f32 %v1345
        %v1410 = vfloor.f32 %v1346
        %v1411 = vfloor.f32 %v1347
        %v1412 = vfloor.f32 %v1348
        %v1413 = vfloor.f32 %v1349
        %v1414 = vfloor.f32 %v1350
        %v1415 = vfloor.f32 %v1351
        %v1416 = vfloor.f32 %v1352
        %v1417 = vfloor.f32 %v1353
        %v1418 = vfloor.f32 %v1354
        %v1419 = vfloor.f32 %v1355
        %v1420 = vfloor.f32 %v1356
        %v1421 = vfloor.f32 %v1357
        %v1422 = vfloor.f32 %v1358
        %v1423 = vfloor.f32 %v1359
        %v1424 = vfloor.f32 %v1360
        %v1425 = vfloor.f32 %v1361
        %v1426 = vfloor.f32 %v1362
        %v1427 = vfloor.f32 %v1363
        %v1428 = vfloor.f32 %v1364
        %v1429 = vfloor.f32 %v1365
        %v1430 = vfloor.f32 %v1366
        %v1431 = vfloor.f32 %v1367
        %v1432 = vfloor.f32 %v1368
        %v1433 = vfloor.f32 %v1369
        %v1434 = vfloor.f32 %v1370
        %v1435 = vfloor.f32 %v1371
        %v1436 = vfloor.f32 %v1372
        %v1437 = vfloor.f32 %v1373
        %v1438 = vfloor.f32 %v1374
        %v1439 = vfloor.f32 %v1375
        %v1440 = vfloor.f32 %v1376
        %v1441 = vfloor.f32 %v1377
        %v1442 = vfloor.f32 %v1378
        %v1443 = vfloor.f32 %v1379
        %v1444 = vfloor.f32 %v1380
        %v1445 = vfloor.f32 %v1381
        %v1446 = vfloor.f32 %v1382
        %v1447 = vfloor.f32 %v1383
        %v1448 = vfloor.f32 %v1384
        %v1449 = vfloor.f32 %v1385
        %v1450 = vfloor.f32 %v1386
        %v1451 = vfloor.f32 %v1387
        %v1452 = vfloor.f32 %v1388
        %v1453 = vfloor.f32 %v1389
        %v1454 = vfloor.f32 %v1390
        %v1455 = vfloor.f32 %v1391
        %v1456 = vfloor.f32 %v1392
        %v1457 = vfloor.f32 %v1393
        %v1458 = vfloor.f32 %v1394
        %v1459 = vfloor.f32 %v1395
        %v1460 = vfloor.f32 %v1396
        %v1461 = vfloor.f32 %v1397
        %v1462 = vfloor.f32 %v1398
        %v1463 = vfloor.f32 %v1399
        %v1464 = vfloor.f32 %v1400
        %v1465 = vfloor.f32 %v1401
        %v1466 = vfloor.f32 %v1402
        %v1467 = vfloor.f32 %v1403
        %v1468 = vfloor.f32 %v1404
        %v1469 = vmul.f32 %v1405, 3.0
        %v1470 = vmul.f32 %v1406, 3.0
        %v1471 = vmul.f32 %v1407, 3.0
        %v1472 = vmul.f32 %v1408, 3.0
        %v1473 = vmul.f32 %v1409, 3.0
        %v1474 = vmul.f32 %v1410, 3.0
        %v1475 = vmul.f32 %v1411, 3.0
        %v1476 = vmul.f32 %v1412, 3.0
        %v1477 = vmul.f32 %v1413, 3.0
        %v1478 = vmul.f32 %v1414, 3.0
        %v1479 = vmul.f32 %v1415, 3.0
        %v1480 = vmul.f32 %v1416, 3.0
        %v1481 = vmul.f32 %v1417, 3.0
        %v1482 = vmul.f32 %v1418, 3.0
        %v1483 = vmul.f32 %v1419, 3.0
        %v1484 = vmul.f32 %v1420, 3.0
        %v1485 = vmul.f32 %v1421, 3.0
        %v1486 = vmul.f32 %v1422, 3.0
        %v1487 = vmul.f32 %v1423, 3.0
        %v1488 = vmul.f32 %v1424, 3.0
        %v1489 = vmul.f32 %v1425, 3.0
        %v1490 = vmul.f32 %v1426, 3.0
        %v1491 = vmul.f32 %v1427, 3.0
        %v1492 = vmul.f32 %v1428, 3.0
        %v1493 = vmul.f32 %v1429, 3.0
        %v1494 = vmul.f32 %v1430, 3.0
        %v1495 = vmul.f32 %v1431, 3.0
        %v1496 = vmul.f32 %v1432, 3.0
        %v1497 = vmul.f32 %v1433, 3.0
        %v1498 = vmul.f32 %v1434, 3.0
        %v1499 = vmul.f32 %v1435, 3.0
        %v1500 = vmul.f32 %v1436, 3.0
        %v1501 = vmul.f32 %v1437, 3.0
        %v1502 = vmul.f32 %v1438, 3.0
        %v1503 = vmul.f32 %v1439, 3.0
        %v1504 = vmul.f32 %v1440, 3.0
        %v1505 = vmul.f32 %v1441, 3.0
        %v1506 = vmul.f32 %v1442, 3.0
        %v1507 = vmul.f32 %v1443, 3.0
        %v1508 = vmul.f32 %v1444, 3.0
        %v1509 = vmul.f32 %v1445, 3.0
        %v1510 = vmul.f32 %v1446, 3.0
        %v1511 = vmul.f32 %v1447, 3.0
        %v1512 = vmul.f32 %v1448, 3.0
        %v1513 = vmul.f32 %v1449, 3.0
        %v1514 = vmul.f32 %v1450, 3.0
        %v1515 = vmul.f32 %v1451, 3.0
        %v1516 = vmul.f32 %v1452, 3.0
        %v1517 = vmul.f32 %v1453, 3.0
        %v1518 = vmul.f32 %v1454, 3.0
        %v1519 = vmul.f32 %v1455, 3.0
        %v1520 = vmul.f32 %v1456, 3.0
        %v1521 = vmul.f32 %v1457, 3.0
        %v1522 = vmul.f32 %v1458, 3.0
        %v1523 = vmul.f32 %v1459, 3.0
        %v1524 = vmul.f32 %v1460, 3.0
        %v1525 = vmul.f32 %v1461, 3.0
        %v1526 = vmul.f32 %v1462, 3.0
        %v1527 = vmul.f32 %v1463, 3.0
        %v1528 = vmul.f32 %v1464, 3.0
        %v1529 = vmul.f32 %v1465, 3.0
        %v1530 = vmul.f32 %v1466, 3.0
        %v1531 = vmul.f32 %v1467, 3.0
        %v1532 = vmul.f32 %v1468, 3.0
        %v1533 = vsub.f32 %v1085, %v1469
        %v1534 = vsub.f32 %v1086, %v1470
        %v1535 = vsub.f32 %v1087, %v1471
        %v1536 = vsub.f32 %v1088, %v1472
        %v1537 = vsub.f32 %v1089, %v1473
        %v1538 = vsub.f32 %v1090, %v1474
        %v1539 = vsub.f32 %v1091, %v1475
        %v1540 = vsub.f32 %v1092, %v1476
        %v1541 = vsub.f32 %v1093, %v1477
        %v1542 = vsub.f32 %v1094, %v1478
        %v1543 = vsub.f32 %v1095, %v1479
        %v1544 = vsub.f32 %v1096, %v1480
        %v1545 = vsub.f32 %v1097, %v1481
        %v1546 = vsub.f32 %v1098, %v1482
        %v1547 = vsub.f32 %v1099, %v1483
        %v1548 = vsub.f32 %v1100, %v1484
        %v1549 = vsub.f32 %v1101, %v1485
        %v1550 = vsub.f32 %v1102, %v1486
        %v1551 = vsub.f32 %v1103, %v1487
        %v1552 = vsub.f32 %v1104, %v1488
        %v1553 = vsub.f32 %v1105, %v1489
        %v1554 = vsub.f32 %v1106, %v1490
        %v1555 = vsub.f32 %v1107, %v1491
        %v1556 = vsub.f32 %v1108, %v1492
        %v1557 = vsub.f32 %v1109, %v1493
        %v1558 = vsub.f32 %v1110, %v1494
        %v1559 = vsub.f32 %v1111, %v1495
        %v1560 = vsub.f32 %v1112, %v1496
        %v1561 = vsub.f32 %v1113, %v1497
        %v1562 = vsub.f32 %v1114, %v1498
        %v1563 = vsub.f32 %v1115, %v1499
        %v1564 = vsub.f32 %v1116, %v1500
        %v1565 = vsub.f32 %v1117, %v1501
        %v1566 = vsub.f32 %v1118, %v1502
        %v1567 = vsub.f32 %v1119, %v1503
        %v1568 = vsub.f32 %v1120, %v1504
        %v1569 = vsub.f32 %v1121, %v1505
        %v1570 = vsub.f32 %v1122, %v1506
        %v1571 = vsub.f32 %v1123, %v1507
        %v1572 = vsub.f32 %v1124, %v1508
        %v1573 = vsub.f32 %v1125, %v1509
        %v1574 = vsub.f32 %v1126, %v1510
        %v1575 = vsub.f32 %v1127, %v1511
        %v1576 = vsub.f32 %v1128, %v1512
        %v1577 = vsub.f32 %v1129, %v1513
        %v1578 = vsub.f32 %v1130, %v1514
        %v1579 = vsub.f32 %v1131, %v1515
        %v1580 = vsub.f32 %v1132, %v1516
        %v1581 = vsub.f32 %v1133, %v1517
        %v1582 = vsub.f32 %v1134, %v1518
        %v1583 = vsub.f32 %v1135, %v1519
        %v1584 = vsub.f32 %v1136, %v1520
        %v1585 = vsub.f32 %v1137, %v1521
        %v1586 = vsub.f32 %v1138, %v1522
        %v1587 = vsub.f32 %v1139, %v1523
        %v1588 = vsub.f32 %v1140, %v1524
        %v1589 = vsub.f32 %v1141, %v1525
        %v1590 = vsub.f32 %v1142, %v1526
        %v1591 = vsub.f32 %v1143, %v1527
        %v1592 = vsub.f32 %v1144, %v1528
        %v1593 = vsub.f32 %v1145, %v1529
        %v1594 = vsub.f32 %v1146, %v1530
        %v1595 = vsub.f32 %v1147, %v1531
        %v1596 = vsub.f32 %v1148, %v1532
        %v1597 = vadd.f32 %v1405, 0.5
        %v1598 = vadd.f32 %v1406, 0.5
        %v1599 = vadd.f32 %v1407, 0.5
        %v1600 = vadd.f32 %v1408, 0.5
        %v1601 = vadd.f32 %v1409, 0.5
        %v1602 = vadd.f32 %v1410, 0.5
        %v1603 = vadd.f32 %v1411, 0.5
        %v1604 = vadd.f32 %v1412, 0.5
        %v1605 = vadd.f32 %v1413, 0.5
        %v1606 = vadd.f32 %v1414, 0.5
        %v1607 = vadd.f32 %v1415, 0.5
        %v1608 = vadd.f32 %v1416, 0.5
        %v1609 = vadd.f32 %v1417, 0.5
        %v1610 = vadd.f32 %v1418, 0.5
        %v1611 = vadd.f32 %v1419, 0.5
        %v1612 = vadd.f32 %v1420, 0.5
        %v1613 = vadd.f32 %v1421, 0.5
        %v1614 = vadd.f32 %v1422, 0.5
        %v1615 = vadd.f32 %v1423, 0.5
        %v1616 = vadd.f32 %v1424, 0.5
        %v1617 = vadd.f32 %v1425, 0.5
        %v1618 = vadd.f32 %v1426, 0.5
        %v1619 = vadd.f32 %v1427, 0.5
        %v1620 = vadd.f32 %v1428, 0.5
        %v1621 = vadd.f32 %v1429, 0.5
        %v1622 = vadd.f32 %v1430, 0.5
        %v1623 = vadd.f32 %v1431, 0.5
        %v1624 = vadd.f32 %v1432, 0.5
        %v1625 = vadd.f32 %v1433, 0.5
        %v1626 = vadd.f32 %v1434, 0.5
        %v1627 = vadd.f32 %v1435, 0.5
        %v1628 = vadd.f32 %v1436, 0.5
        %v1629 = vadd.f32 %v1437, 0.5
        %v1630 = vadd.f32 %v1438, 0.5
        %v1631 = vadd.f32 %v1439, 0.5
        %v1632 = vadd.f32 %v1440, 0.5
        %v1633 = vadd.f32 %v1441, 0.5
        %v1634 = vadd.f32 %v1442, 0.5
        %v1635 = vadd.f32 %v1443, 0.5
        %v1636 = vadd.f32 %v1444, 0.5
        %v1637 = vadd.f32 %v1445, 0.5
        %v1638 = vadd.f32 %v1446, 0.5
        %v1639 = vadd.f32 %v1447, 0.5
        %v1640 = vadd.f32 %v1448, 0.5
        %v1641 = vadd.f32 %v1449, 0.5
        %v1642 = vadd.f32 %v1450, 0.5
        %v1643 = vadd.f32 %v1451, 0.5
        %v1644 = vadd.f32 %v1452, 0.5
        %v1645 = vadd.f32 %v1453, 0.5
        %v1646 = vadd.f32 %v1454, 0.5
        %v1647 = vadd.f32 %v1455, 0.5
        %v1648 = vadd.f32 %v1456, 0.5
        %v1649 = vadd.f32 %v1457, 0.5
        %v1650 = vadd.f32 %v1458, 0.5
        %v1651 = vadd.f32 %v1459, 0.5
        %v1652 = vadd.f32 %v1460, 0.5
        %v1653 = vadd.f32 %v1461, 0.5
        %v1654 = vadd.f32 %v1462, 0.5
        %v1655 = vadd.f32 %v1463, 0.5
        %v1656 = vadd.f32 %v1464, 0.5
        %v1657 = vadd.f32 %v1465, 0.5
        %v1658 = vadd.f32 %v1466, 0.5
        %v1659 = vadd.f32 %v1467, 0.5
        %v1660 = vadd.f32 %v1468, 0.5
        %v1661 = vmul.f32 %v1597, 0.0625
        %v1662 = vmul.f32 %v1598, 0.0625
        %v1663 = vmul.f32 %v1599, 0.0625
        %v1664 = vmul.f32 %v1600, 0.0625
        %v1665 = vmul.f32 %v1601, 0.0625
        %v1666 = vmul.f32 %v1602, 0.0625
        %v1667 = vmul.f32 %v1603, 0.0625
        %v1668 = vmul.f32 %v1604, 0.0625
        %v1669 = vmul.f32 %v1605, 0.0625
        %v1670 = vmul.f32 %v1606, 0.0625
        %v1671 = vmul.f32 %v1607, 0.0625
        %v1672 = vmul.f32 %v1608, 0.0625
        %v1673 = vmul.f32 %v1609, 0.0625
        %v1674 = vmul.f32 %v1610, 0.0625
        %v1675 = vmul.f32 %v1611, 0.0625
        %v1676 = vmul.f32 %v1612, 0.0625
        %v1677 = vmul.f32 %v1613, 0.0625
        %v1678 = vmul.f32 %v1614, 0.0625
        %v1679 = vmul.f32 %v1615, 0.0625
        %v1680 = vmul.f32 %v1616, 0.0625
        %v1681 = vmul.f32 %v1617, 0.0625
        %v1682 = vmul.f32 %v1618, 0.0625
        %v1683 = vmul.f32 %v1619, 0.0625
        %v1684 = vmul.f32 %v1620, 0.0625
        %v1685 = vmul.f32 %v1621, 0.0625
        %v1686 = vmul.f32 %v1622, 0.0625
        %v1687 = vmul.f32 %v1623, 0.0625
        %v1688 = vmul.f32 %v1624, 0.0625
        %v1689 = vmul.f32 %v1625, 0.0625
        %v1690 = vmul.f32 %v1626, 0.0625
        %v1691 = vmul.f32 %v1627, 0.0625
        %v1692 = vmul.f32 %v1628, 0.0625
        %v1693 = vmul.f32 %v1629, 0.0625
        %v1694 = vmul.f32 %v1630, 0.0625
        %v1695 = vmul.f32 %v1631, 0.0625
        %v1696 = vmul.f32 %v1632, 0.0625
        %v1697 = vmul.f32 %v1633, 0.0625
        %v1698 = vmul.f32 %v1634, 0.0625
        %v1699 = vmul.f32 %v1635, 0.0625
        %v1700 = vmul.f32 %v1636, 0.0625
        %v1701 = vmul.f32 %v1637, 0.0625
        %v1702 = vmul.f32 %v1638, 0.0625
        %v1703 = vmul.f32 %v1639, 0.0625
        %v1704 = vmul.f32 %v1640, 0.0625
        %v1705 = vmul.f32 %v1641, 0.0625
        %v1706 = vmul.f32 %v1642, 0.0625
        %v1707 = vmul.f32 %v1643, 0.0625
        %v1708 = vmul.f32 %v1644, 0.0625
        %v1709 = vmul.f32 %v1645, 0.0625
        %v1710 = vmul.f32 %v1646, 0.0625
        %v1711 = vmul.f32 %v1647, 0.0625
        %v1712 = vmul.f32 %v1648, 0.0625
        %v1713 = vmul.f32 %v1649, 0.0625
        %v1714 = vmul.f32 %v1650, 0.0625
        %v1715 = vmul.f32 %v1651, 0.0625
        %v1716 = vmul.f32 %v1652, 0.0625
        %v1717 = vmul.f32 %v1653, 0.0625
        %v1718 = vmul.f32 %v1654, 0.0625
        %v1719 = vmul.f32 %v1655, 0.0625
        %v1720 = vmul.f32 %v1656, 0.0625
        %v1721 = vmul.f32 %v1657, 0.0625
        %v1722 = vmul.f32 %v1658, 0.0625
        %v1723 = vmul.f32 %v1659, 0.0625
        %v1724 = vmul.f32 %v1660, 0.0625
        %v1725 = vfloor.f32 %v1661
        %v1726 = vfloor.f32 %v1662
        %v1727 = vfloor.f32 %v1663
        %v1728 = vfloor.f32 %v1664
        %v1729 = vfloor.f32 %v1665
        %v1730 = vfloor.f32 %v1666
        %v1731 = vfloor.f32 %v1667
        %v1732 = vfloor.f32 %v1668
        %v1733 = vfloor.f32 %v1669
        %v1734 = vfloor.f32 %v1670
        %v1735 = vfloor.f32 %v1671
        %v1736 = vfloor.f32 %v1672
        %v1737 = vfloor.f32 %v1673
        %v1738 = vfloor.f32 %v1674
        %v1739 = vfloor.f32 %v1675
        %v1740 = vfloor.f32 %v1676
        %v1741 = vfloor.f32 %v1677
        %v1742 = vfloor.f32 %v1678
        %v1743 = vfloor.f32 %v1679
        %v1744 = vfloor.f32 %v1680
        %v1745 = vfloor.f32 %v1681
        %v1746 = vfloor.f32 %v1682
        %v1747 = vfloor.f32 %v1683
        %v1748 = vfloor.f32 %v1684
        %v1749 = vfloor.f32 %v1685
        %v1750 = vfloor.f32 %v1686
        %v1751 = vfloor.f32 %v1687
        %v1752 = vfloor.f32 %v1688
        %v1753 = vfloor.f32 %v1689
        %v1754 = vfloor.f32 %v1690
        %v1755 = vfloor.f32 %v1691
        %v1756 = vfloor.f32 %v1692
        %v1757 = vfloor.f32 %v1693
        %v1758 = vfloor.f32 %v1694
        %v1759 = vfloor.f32 %v1695
        %v1760 = vfloor.f32 %v1696
        %v1761 = vfloor.f32 %v1697
        %v1762 = vfloor.f32 %v1698
        %v1763 = vfloor.f32 %v1699
        %v1764 = vfloor.f32 %v1700
        %v1765 = vfloor.f32 %v1701
        %v1766 = vfloor.f32 %v1702
        %v1767 = vfloor.f32 %v1703
        %v1768 = vfloor.f32 %v1704
        %v1769 = vfloor.f32 %v1705
        %v1770 = vfloor.f32 %v1706
        %v1771 = vfloor.f32 %v1707
        %v1772 = vfloor.f32 %v1708
        %v1773 = vfloor.f32 %v1709
        %v1774 = vfloor.f32 %v1710
        %v1775 = vfloor.f32 %v1711
        %v1776 = vfloor.f32 %v1712
        %v1777 = vfloor.f32 %v1713
        %v1778 = vfloor.f32 %v1714
        %v1779 = vfloor.f32 %v1715
        %v1780 = vfloor.f32 %v1716
        %v1781 = vfloor.f32 %v1717
        %v1782 = vfloor.f32 %v1718
        %v1783 = vfloor.f32 %v1719
        %v1784 = vfloor.f32 %v1720
        %v1785 = vfloor.f32 %v1721
        %v1786 = vfloor.f32 %v1722
        %v1787 = vfloor.f32 %v1723
        %v1788 = vfloor.f32 %v1724
        %v1789 = vmul.f32 %v1725, 16.0
        %v1790 = vmul.f32 %v1726, 16.0
        %v1791 = vmul.f32 %v1727, 16.0
        %v1792 = vmul.f32 %v1728, 16.0
        %v1793 = vmul.f32 %v1729, 16.0
        %v1794 = vmul.f32 %v1730, 16.0
        %v1795 = vmul.f32 %v1731, 16.0
        %v1796 = vmul.f32 %v1732, 16.0
        %v1797 = vmul.f32 %v1733, 16.0
        %v1798 = vmul.f32 %v1734, 16.0
        %v1799 = vmul.f32 %v1735, 16.0
        %v1800 = vmul.f32 %v1736, 16.0
        %v1801 = vmul.f32 %v1737, 16.0
        %v1802 = vmul.f32 %v1738, 16.0
        %v1803 = vmul.f32 %v1739, 16.0
        %v1804 = vmul.f32 %v1740, 16.0
        %v1805 = vmul.f32 %v1741, 16.0
        %v1806 = vmul.f32 %v1742, 16.0
        %v1807 = vmul.f32 %v1743, 16.0
        %v1808 = vmul.f32 %v1744, 16.0
        %v1809 = vmul.f32 %v1745, 16.0
        %v1810 = vmul.f32 %v1746, 16.0
        %v1811 = vmul.f32 %v1747, 16.0
        %v1812 = vmul.f32 %v1748, 16.0
        %v1813 = vmul.f32 %v1749, 16.0
        %v1814 = vmul.f32 %v1750, 16.0
        %v1815 = vmul.f32 %v1751, 16.0
        %v1816 = vmul.f32 %v1752, 16.0
        %v1817 = vmul.f32 %v1753, 16.0
        %v1818 = vmul.f32 %v1754, 16.0
        %v1819 = vmul.f32 %v1755, 16.0
        %v1820 = vmul.f32 %v1756, 16.0
        %v1821 = vmul.f32 %v1757, 16.0
        %v1822 = vmul.f32 %v1758, 16.0
        %v1823 = vmul.f32 %v1759, 16.0
        %v1824 = vmul.f32 %v1760, 16.0
        %v1825 = vmul.f32 %v1761, 16.0
        %v1826 = vmul.f32 %v1762, 16.0
        %v1827 = vmul.f32 %v1763, 16.0
        %v1828 = vmul.f32 %v1764, 16.0
        %v1829 = vmul.f32 %v1765, 16.0
        %v1830 = vmul.f32 %v1766, 16.0
        %v1831 = vmul.f32 %v1767, 16.0
        %v1832 = vmul.f32 %v1768, 16.0
        %v1833 = vmul.f32 %v1769, 16.0
        %v1834 = vmul.f32 %v1770, 16.0
        %v1835 = vmul.f32 %v1771, 16.0
        %v1836 = vmul.f32 %v1772, 16.0
        %v1837 = vmul.f32 %v1773, 16.0
        %v1838 = vmul.f32 %v1774, 16.0
        %v1839 = vmul.f32 %v1775, 16.0
        %v1840 = vmul.f32 %v1776, 16.0
        %v1841 = vmul.f32 %v1777, 16.0
        %v1842 = vmul.f32 %v1778, 16.0
        %v1843 = vmul.f32 %v1779, 16.0
        %v1844 = vmul.f32 %v1780, 16.0
        %v1845 = vmul.f32 %v1781, 16.0
        %v1846 = vmul.f32 %v1782, 16.0
        %v1847 = vmul.f32 %v1783, 16.0
        %v1848 = vmul.f32 %v1784, 16.0
        %v1849 = vmul.f32 %v1785, 16.0
        %v1850 = vmul.f32 %v1786, 16.0
        %v1851 = vmul.f32 %v1787, 16.0
        %v1852 = vmul.f32 %v1788, 16.0
        %v1853 = vsub.f32 %v1405, %v1789
        %v1854 = vsub.f32 %v1406, %v1790
        %v1855 = vsub.f32 %v1407, %v1791
        %v1856 = vsub.f32 %v1408, %v1792
        %v1857 = vsub.f32 %v1409, %v1793
        %v1858 = vsub.f32 %v1410, %v1794
        %v1859 = vsub.f32 %v1411, %v1795
        %v1860 = vsub.f32 %v1412, %v1796
        %v1861 = vsub.f32 %v1413, %v1797
        %v1862 = vsub.f32 %v1414, %v1798
        %v1863 = vsub.f32 %v1415, %v1799
        %v1864 = vsub.f32 %v1416, %v1800
        %v1865 = vsub.f32 %v1417, %v1801
        %v1866 = vsub.f32 %v1418, %v1802
        %v1867 = vsub.f32 %v1419, %v1803
        %v1868 = vsub.f32 %v1420, %v1804
        %v1869 = vsub.f32 %v1421, %v1805
        %v1870 = vsub.f32 %v1422, %v1806
        %v1871 = vsub.f32 %v1423, %v1807
        %v1872 = vsub.f32 %v1424, %v1808
        %v1873 = vsub.f32 %v1425, %v1809
        %v1874 = vsub.f32 %v1426, %v1810
        %v1875 = vsub.f32 %v1427, %v1811
        %v1876 = vsub.f32 %v1428, %v1812
        %v1877 = vsub.f32 %v1429, %v1813
        %v1878 = vsub.f32 %v1430, %v1814
        %v1879 = vsub.f32 %v1431, %v1815
        %v1880 = vsub.f32 %v1432, %v1816
        %v1881 = vsub.f32 %v1433, %v1817
        %v1882 = vsub.f32 %v1434, %v1818
        %v1883 = vsub.f32 %v1435, %v1819
        %v1884 = vsub.f32 %v1436, %v1820
        %v1885 = vsub.f32 %v1437, %v1821
        %v1886 = vsub.f32 %v1438, %v1822
        %v1887 = vsub.f32 %v1439, %v1823
        %v1888 = vsub.f32 %v1440, %v1824
        %v1889 = vsub.f32 %v1441, %v1825
        %v1890 = vsub.f32 %v1442, %v1826
        %v1891 = vsub.f32 %v1443, %v1827
        %v1892 = vsub.f32 %v1444, %v1828
        %v1893 = vsub.f32 %v1445, %v1829
        %v1894 = vsub.f32 %v1446, %v1830
        %v1895 = vsub.f32 %v1447, %v1831
        %v1896 = vsub.f32 %v1448, %v1832
        %v1897 = vsub.f32 %v1449, %v1833
        %v1898 = vsub.f32 %v1450, %v1834
        %v1899 = vsub.f32 %v1451, %v1835
        %v1900 = vsub.f32 %v1452, %v1836
        %v1901 = vsub.f32 %v1453, %v1837
        %v1902 = vsub.f32 %v1454, %v1838
        %v1903 = vsub.f32 %v1455, %v1839
        %v1904 = vsub.f32 %v1456, %v1840
        %v1905 = vsub.f32 %v1457, %v1841
        %v1906 = vsub.f32 %v1458, %v1842
        %v1907 = vsub.f32 %v1459, %v1843
        %v1908 = vsub.f32 %v1460, %v1844
        %v1909 = vsub.f32 %v1461, %v1845
        %v1910 = vsub.f32 %v1462, %v1846
        %v1911 = vsub.f32 %v1463, %v1847
        %v1912 = vsub.f32 %v1464, %v1848
        %v1913 = vsub.f32 %v1465, %v1849
        %v1914 = vsub.f32 %v1466, %v1850
        %v1915 = vsub.f32 %v1467, %v1851
        %v1916 = vsub.f32 %v1468, %v1852
        %vm1917 = vcmp.eq.f32.partialorder %v1213, 0.0
        %vm1918 = vcmp.eq.f32.partialorder %v1214, 0.0
        %vm1919 = vcmp.eq.f32.partialorder %v1215, 0.0
        %vm1920 = vcmp.eq.f32.partialorder %v1216, 0.0
        %vm1921 = vcmp.eq.f32.partialorder %v1217, 0.0
        %vm1922 = vcmp.eq.f32.partialorder %v1218, 0.0
        %vm1923 = vcmp.eq.f32.partialorder %v1219, 0.0
        %vm1924 = vcmp.eq.f32.partialorder %v1220, 0.0
        %vm1925 = vcmp.eq.f32.partialorder %v1221, 0.0
        %vm1926 = vcmp.eq.f32.partialorder %v1222, 0.0
        %vm1927 = vcmp.eq.f32.partialorder %v1223, 0.0
        %vm1928 = vcmp.eq.f32.partialorder %v1224, 0.0
        %vm1929 = vcmp.eq.f32.partialorder %v1225, 0.0
        %vm1930 = vcmp.eq.f32.partialorder %v1226, 0.0
        %vm1931 = vcmp.eq.f32.partialorder %v1227, 0.0
        %vm1932 = vcmp.eq.f32.partialorder %v1228, 0.0
        %vm1933 = vcmp.eq.f32.partialorder %v1229, 0.0
        %vm1934 = vcmp.eq.f32.partialorder %v1230, 0.0
        %vm1935 = vcmp.eq.f32.partialorder %v1231, 0.0
        %vm1936 = vcmp.eq.f32.partialorder %v1232, 0.0
        %vm1937 = vcmp.eq.f32.partialorder %v1233, 0.0
        %vm1938 = vcmp.eq.f32.partialorder %v1234, 0.0
        %vm1939 = vcmp.eq.f32.partialorder %v1235, 0.0
        %vm1940 = vcmp.eq.f32.partialorder %v1236, 0.0
        %vm1941 = vcmp.eq.f32.partialorder %v1237, 0.0
        %vm1942 = vcmp.eq.f32.partialorder %v1238, 0.0
        %vm1943 = vcmp.eq.f32.partialorder %v1239, 0.0
        %vm1944 = vcmp.eq.f32.partialorder %v1240, 0.0
        %vm1945 = vcmp.eq.f32.partialorder %v1241, 0.0
        %vm1946 = vcmp.eq.f32.partialorder %v1242, 0.0
        %vm1947 = vcmp.eq.f32.partialorder %v1243, 0.0
        %vm1948 = vcmp.eq.f32.partialorder %v1244, 0.0
        %vm1949 = vcmp.eq.f32.partialorder %v1245, 0.0
        %vm1950 = vcmp.eq.f32.partialorder %v1246, 0.0
        %vm1951 = vcmp.eq.f32.partialorder %v1247, 0.0
        %vm1952 = vcmp.eq.f32.partialorder %v1248, 0.0
        %vm1953 = vcmp.eq.f32.partialorder %v1249, 0.0
        %vm1954 = vcmp.eq.f32.partialorder %v1250, 0.0
        %vm1955 = vcmp.eq.f32.partialorder %v1251, 0.0
        %vm1956 = vcmp.eq.f32.partialorder %v1252, 0.0
        %vm1957 = vcmp.eq.f32.partialorder %v1253, 0.0
        %vm1958 = vcmp.eq.f32.partialorder %v1254, 0.0
        %vm1959 = vcmp.eq.f32.partialorder %v1255, 0.0
        %vm1960 = vcmp.eq.f32.partialorder %v1256, 0.0
        %vm1961 = vcmp.eq.f32.partialorder %v1257, 0.0
        %vm1962 = vcmp.eq.f32.partialorder %v1258, 0.0
        %vm1963 = vcmp.eq.f32.partialorder %v1259, 0.0
        %vm1964 = vcmp.eq.f32.partialorder %v1260, 0.0
        %vm1965 = vcmp.eq.f32.partialorder %v1261, 0.0
        %vm1966 = vcmp.eq.f32.partialorder %v1262, 0.0
        %vm1967 = vcmp.eq.f32.partialorder %v1263, 0.0
        %vm1968 = vcmp.eq.f32.partialorder %v1264, 0.0
        %vm1969 = vcmp.eq.f32.partialorder %v1265, 0.0
        %vm1970 = vcmp.eq.f32.partialorder %v1266, 0.0
        %vm1971 = vcmp.eq.f32.partialorder %v1267, 0.0
        %vm1972 = vcmp.eq.f32.partialorder %v1268, 0.0
        %vm1973 = vcmp.eq.f32.partialorder %v1269, 0.0
        %vm1974 = vcmp.eq.f32.partialorder %v1270, 0.0
        %vm1975 = vcmp.eq.f32.partialorder %v1271, 0.0
        %vm1976 = vcmp.eq.f32.partialorder %v1272, 0.0
        %vm1977 = vcmp.eq.f32.partialorder %v1273, 0.0
        %vm1978 = vcmp.eq.f32.partialorder %v1274, 0.0
        %vm1979 = vcmp.eq.f32.partialorder %v1275, 0.0
        %vm1980 = vcmp.eq.f32.partialorder %v1276, 0.0
        %vm1981 = vcmp.eq.f32.partialorder %v1213, 1.0
        %vm1982 = vcmp.eq.f32.partialorder %v1214, 1.0
        %vm1983 = vcmp.eq.f32.partialorder %v1215, 1.0
        %vm1984 = vcmp.eq.f32.partialorder %v1216, 1.0
        %vm1985 = vcmp.eq.f32.partialorder %v1217, 1.0
        %vm1986 = vcmp.eq.f32.partialorder %v1218, 1.0
        %vm1987 = vcmp.eq.f32.partialorder %v1219, 1.0
        %vm1988 = vcmp.eq.f32.partialorder %v1220, 1.0
        %vm1989 = vcmp.eq.f32.partialorder %v1221, 1.0
        %vm1990 = vcmp.eq.f32.partialorder %v1222, 1.0
        %vm1991 = vcmp.eq.f32.partialorder %v1223, 1.0
        %vm1992 = vcmp.eq.f32.partialorder %v1224, 1.0
        %vm1993 = vcmp.eq.f32.partialorder %v1225, 1.0
        %vm1994 = vcmp.eq.f32.partialorder %v1226, 1.0
        %vm1995 = vcmp.eq.f32.partialorder %v1227, 1.0
        %vm1996 = vcmp.eq.f32.partialorder %v1228, 1.0
        %vm1997 = vcmp.eq.f32.partialorder %v1229, 1.0
        %vm1998 = vcmp.eq.f32.partialorder %v1230, 1.0
        %vm1999 = vcmp.eq.f32.partialorder %v1231, 1.0
        %vm2000 = vcmp.eq.f32.partialorder %v1232, 1.0
        %vm2001 = vcmp.eq.f32.partialorder %v1233, 1.0
        %vm2002 = vcmp.eq.f32.partialorder %v1234, 1.0
        %vm2003 = vcmp.eq.f32.partialorder %v1235, 1.0
        %vm2004 = vcmp.eq.f32.partialorder %v1236, 1.0
        %vm2005 = vcmp.eq.f32.partialorder %v1237, 1.0
        %vm2006 = vcmp.eq.f32.partialorder %v1238, 1.0
        %vm2007 = vcmp.eq.f32.partialorder %v1239, 1.0
        %vm2008 = vcmp.eq.f32.partialorder %v1240, 1.0
        %vm2009 = vcmp.eq.f32.partialorder %v1241, 1.0
        %vm2010 = vcmp.eq.f32.partialorder %v1242, 1.0
        %vm2011 = vcmp.eq.f32.partialorder %v1243, 1.0
        %vm2012 = vcmp.eq.f32.partialorder %v1244, 1.0
        %vm2013 = vcmp.eq.f32.partialorder %v1245, 1.0
        %vm2014 = vcmp.eq.f32.partialorder %v1246, 1.0
        %vm2015 = vcmp.eq.f32.partialorder %v1247, 1.0
        %vm2016 = vcmp.eq.f32.partialorder %v1248, 1.0
        %vm2017 = vcmp.eq.f32.partialorder %v1249, 1.0
        %vm2018 = vcmp.eq.f32.partialorder %v1250, 1.0
        %vm2019 = vcmp.eq.f32.partialorder %v1251, 1.0
        %vm2020 = vcmp.eq.f32.partialorder %v1252, 1.0
        %vm2021 = vcmp.eq.f32.partialorder %v1253, 1.0
        %vm2022 = vcmp.eq.f32.partialorder %v1254, 1.0
        %vm2023 = vcmp.eq.f32.partialorder %v1255, 1.0
        %vm2024 = vcmp.eq.f32.partialorder %v1256, 1.0
        %vm2025 = vcmp.eq.f32.partialorder %v1257, 1.0
        %vm2026 = vcmp.eq.f32.partialorder %v1258, 1.0
        %vm2027 = vcmp.eq.f32.partialorder %v1259, 1.0
        %vm2028 = vcmp.eq.f32.partialorder %v1260, 1.0
        %vm2029 = vcmp.eq.f32.partialorder %v1261, 1.0
        %vm2030 = vcmp.eq.f32.partialorder %v1262, 1.0
        %vm2031 = vcmp.eq.f32.partialorder %v1263, 1.0
        %vm2032 = vcmp.eq.f32.partialorder %v1264, 1.0
        %vm2033 = vcmp.eq.f32.partialorder %v1265, 1.0
        %vm2034 = vcmp.eq.f32.partialorder %v1266, 1.0
        %vm2035 = vcmp.eq.f32.partialorder %v1267, 1.0
        %vm2036 = vcmp.eq.f32.partialorder %v1268, 1.0
        %vm2037 = vcmp.eq.f32.partialorder %v1269, 1.0
        %vm2038 = vcmp.eq.f32.partialorder %v1270, 1.0
        %vm2039 = vcmp.eq.f32.partialorder %v1271, 1.0
        %vm2040 = vcmp.eq.f32.partialorder %v1272, 1.0
        %vm2041 = vcmp.eq.f32.partialorder %v1273, 1.0
        %vm2042 = vcmp.eq.f32.partialorder %v1274, 1.0
        %vm2043 = vcmp.eq.f32.partialorder %v1275, 1.0
        %vm2044 = vcmp.eq.f32.partialorder %v1276, 1.0
        %vm2045 = vcmp.eq.f32.partialorder %v1213, 2.0
        %vm2046 = vcmp.eq.f32.partialorder %v1214, 2.0
        %vm2047 = vcmp.eq.f32.partialorder %v1215, 2.0
        %vm2048 = vcmp.eq.f32.partialorder %v1216, 2.0
        %vm2049 = vcmp.eq.f32.partialorder %v1217, 2.0
        %vm2050 = vcmp.eq.f32.partialorder %v1218, 2.0
        %vm2051 = vcmp.eq.f32.partialorder %v1219, 2.0
        %vm2052 = vcmp.eq.f32.partialorder %v1220, 2.0
        %vm2053 = vcmp.eq.f32.partialorder %v1221, 2.0
        %vm2054 = vcmp.eq.f32.partialorder %v1222, 2.0
        %vm2055 = vcmp.eq.f32.partialorder %v1223, 2.0
        %vm2056 = vcmp.eq.f32.partialorder %v1224, 2.0
        %vm2057 = vcmp.eq.f32.partialorder %v1225, 2.0
        %vm2058 = vcmp.eq.f32.partialorder %v1226, 2.0
        %vm2059 = vcmp.eq.f32.partialorder %v1227, 2.0
        %vm2060 = vcmp.eq.f32.partialorder %v1228, 2.0
        %vm2061 = vcmp.eq.f32.partialorder %v1229, 2.0
        %vm2062 = vcmp.eq.f32.partialorder %v1230, 2.0
        %vm2063 = vcmp.eq.f32.partialorder %v1231, 2.0
        %vm2064 = vcmp.eq.f32.partialorder %v1232, 2.0
        %vm2065 = vcmp.eq.f32.partialorder %v1233, 2.0
        %vm2066 = vcmp.eq.f32.partialorder %v1234, 2.0
        %vm2067 = vcmp.eq.f32.partialorder %v1235, 2.0
        %vm2068 = vcmp.eq.f32.partialorder %v1236, 2.0
        %vm2069 = vcmp.eq.f32.partialorder %v1237, 2.0
        %vm2070 = vcmp.eq.f32.partialorder %v1238, 2.0
        %vm2071 = vcmp.eq.f32.partialorder %v1239, 2.0
        %vm2072 = vcmp.eq.f32.partialorder %v1240, 2.0
        %vm2073 = vcmp.eq.f32.partialorder %v1241, 2.0
        %vm2074 = vcmp.eq.f32.partialorder %v1242, 2.0
        %vm2075 = vcmp.eq.f32.partialorder %v1243, 2.0
        %vm2076 = vcmp.eq.f32.partialorder %v1244, 2.0
        %vm2077 = vcmp.eq.f32.partialorder %v1245, 2.0
        %vm2078 = vcmp.eq.f32.partialorder %v1246, 2.0
        %vm2079 = vcmp.eq.f32.partialorder %v1247, 2.0
        %vm2080 = vcmp.eq.f32.partialorder %v1248, 2.0
        %vm2081 = vcmp.eq.f32.partialorder %v1249, 2.0
        %vm2082 = vcmp.eq.f32.partialorder %v1250, 2.0
        %vm2083 = vcmp.eq.f32.partialorder %v1251, 2.0
        %vm2084 = vcmp.eq.f32.partialorder %v1252, 2.0
        %vm2085 = vcmp.eq.f32.partialorder %v1253, 2.0
        %vm2086 = vcmp.eq.f32.partialorder %v1254, 2.0
        %vm2087 = vcmp.eq.f32.partialorder %v1255, 2.0
        %vm2088 = vcmp.eq.f32.partialorder %v1256, 2.0
        %vm2089 = vcmp.eq.f32.partialorder %v1257, 2.0
        %vm2090 = vcmp.eq.f32.partialorder %v1258, 2.0
        %vm2091 = vcmp.eq.f32.partialorder %v1259, 2.0
        %vm2092 = vcmp.eq.f32.partialorder %v1260, 2.0
        %vm2093 = vcmp.eq.f32.partialorder %v1261, 2.0
        %vm2094 = vcmp.eq.f32.partialorder %v1262, 2.0
        %vm2095 = vcmp.eq.f32.partialorder %v1263, 2.0
        %vm2096 = vcmp.eq.f32.partialorder %v1264, 2.0
        %vm2097 = vcmp.eq.f32.partialorder %v1265, 2.0
        %vm2098 = vcmp.eq.f32.partialorder %v1266, 2.0
        %vm2099 = vcmp.eq.f32.partialorder %v1267, 2.0
        %vm2100 = vcmp.eq.f32.partialorder %v1268, 2.0
        %vm2101 = vcmp.eq.f32.partialorder %v1269, 2.0
        %vm2102 = vcmp.eq.f32.partialorder %v1270, 2.0
        %vm2103 = vcmp.eq.f32.partialorder %v1271, 2.0
        %vm2104 = vcmp.eq.f32.partialorder %v1272, 2.0
        %vm2105 = vcmp.eq.f32.partialorder %v1273, 2.0
        %vm2106 = vcmp.eq.f32.partialorder %v1274, 2.0
        %vm2107 = vcmp.eq.f32.partialorder %v1275, 2.0
        %vm2108 = vcmp.eq.f32.partialorder %v1276, 2.0
        %vm2109 = vcmp.eq.f32.partialorder %v1213, 3.0
        %vm2110 = vcmp.eq.f32.partialorder %v1214, 3.0
        %vm2111 = vcmp.eq.f32.partialorder %v1215, 3.0
        %vm2112 = vcmp.eq.f32.partialorder %v1216, 3.0
        %vm2113 = vcmp.eq.f32.partialorder %v1217, 3.0
        %vm2114 = vcmp.eq.f32.partialorder %v1218, 3.0
        %vm2115 = vcmp.eq.f32.partialorder %v1219, 3.0
        %vm2116 = vcmp.eq.f32.partialorder %v1220, 3.0
        %vm2117 = vcmp.eq.f32.partialorder %v1221, 3.0
        %vm2118 = vcmp.eq.f32.partialorder %v1222, 3.0
        %vm2119 = vcmp.eq.f32.partialorder %v1223, 3.0
        %vm2120 = vcmp.eq.f32.partialorder %v1224, 3.0
        %vm2121 = vcmp.eq.f32.partialorder %v1225, 3.0
        %vm2122 = vcmp.eq.f32.partialorder %v1226, 3.0
        %vm2123 = vcmp.eq.f32.partialorder %v1227, 3.0
        %vm2124 = vcmp.eq.f32.partialorder %v1228, 3.0
        %vm2125 = vcmp.eq.f32.partialorder %v1229, 3.0
        %vm2126 = vcmp.eq.f32.partialorder %v1230, 3.0
        %vm2127 = vcmp.eq.f32.partialorder %v1231, 3.0
        %vm2128 = vcmp.eq.f32.partialorder %v1232, 3.0
        %vm2129 = vcmp.eq.f32.partialorder %v1233, 3.0
        %vm2130 = vcmp.eq.f32.partialorder %v1234, 3.0
        %vm2131 = vcmp.eq.f32.partialorder %v1235, 3.0
        %vm2132 = vcmp.eq.f32.partialorder %v1236, 3.0
        %vm2133 = vcmp.eq.f32.partialorder %v1237, 3.0
        %vm2134 = vcmp.eq.f32.partialorder %v1238, 3.0
        %vm2135 = vcmp.eq.f32.partialorder %v1239, 3.0
        %vm2136 = vcmp.eq.f32.partialorder %v1240, 3.0
        %vm2137 = vcmp.eq.f32.partialorder %v1241, 3.0
        %vm2138 = vcmp.eq.f32.partialorder %v1242, 3.0
        %vm2139 = vcmp.eq.f32.partialorder %v1243, 3.0
        %vm2140 = vcmp.eq.f32.partialorder %v1244, 3.0
        %vm2141 = vcmp.eq.f32.partialorder %v1245, 3.0
        %vm2142 = vcmp.eq.f32.partialorder %v1246, 3.0
        %vm2143 = vcmp.eq.f32.partialorder %v1247, 3.0
        %vm2144 = vcmp.eq.f32.partialorder %v1248, 3.0
        %vm2145 = vcmp.eq.f32.partialorder %v1249, 3.0
        %vm2146 = vcmp.eq.f32.partialorder %v1250, 3.0
        %vm2147 = vcmp.eq.f32.partialorder %v1251, 3.0
        %vm2148 = vcmp.eq.f32.partialorder %v1252, 3.0
        %vm2149 = vcmp.eq.f32.partialorder %v1253, 3.0
        %vm2150 = vcmp.eq.f32.partialorder %v1254, 3.0
        %vm2151 = vcmp.eq.f32.partialorder %v1255, 3.0
        %vm2152 = vcmp.eq.f32.partialorder %v1256, 3.0
        %vm2153 = vcmp.eq.f32.partialorder %v1257, 3.0
        %vm2154 = vcmp.eq.f32.partialorder %v1258, 3.0
        %vm2155 = vcmp.eq.f32.partialorder %v1259, 3.0
        %vm2156 = vcmp.eq.f32.partialorder %v1260, 3.0
        %vm2157 = vcmp.eq.f32.partialorder %v1261, 3.0
        %vm2158 = vcmp.eq.f32.partialorder %v1262, 3.0
        %vm2159 = vcmp.eq.f32.partialorder %v1263, 3.0
        %vm2160 = vcmp.eq.f32.partialorder %v1264, 3.0
        %vm2161 = vcmp.eq.f32.partialorder %v1265, 3.0
        %vm2162 = vcmp.eq.f32.partialorder %v1266, 3.0
        %vm2163 = vcmp.eq.f32.partialorder %v1267, 3.0
        %vm2164 = vcmp.eq.f32.partialorder %v1268, 3.0
        %vm2165 = vcmp.eq.f32.partialorder %v1269, 3.0
        %vm2166 = vcmp.eq.f32.partialorder %v1270, 3.0
        %vm2167 = vcmp.eq.f32.partialorder %v1271, 3.0
        %vm2168 = vcmp.eq.f32.partialorder %v1272, 3.0
        %vm2169 = vcmp.eq.f32.partialorder %v1273, 3.0
        %vm2170 = vcmp.eq.f32.partialorder %v1274, 3.0
        %vm2171 = vcmp.eq.f32.partialorder %v1275, 3.0
        %vm2172 = vcmp.eq.f32.partialorder %v1276, 3.0
        %vm2173 = vcmp.eq.f32.partialorder %v1533, 0.0
        %vm2174 = vcmp.eq.f32.partialorder %v1534, 0.0
        %vm2175 = vcmp.eq.f32.partialorder %v1535, 0.0
        %vm2176 = vcmp.eq.f32.partialorder %v1536, 0.0
        %vm2177 = vcmp.eq.f32.partialorder %v1537, 0.0
        %vm2178 = vcmp.eq.f32.partialorder %v1538, 0.0
        %vm2179 = vcmp.eq.f32.partialorder %v1539, 0.0
        %vm2180 = vcmp.eq.f32.partialorder %v1540, 0.0
        %vm2181 = vcmp.eq.f32.partialorder %v1541, 0.0
        %vm2182 = vcmp.eq.f32.partialorder %v1542, 0.0
        %vm2183 = vcmp.eq.f32.partialorder %v1543, 0.0
        %vm2184 = vcmp.eq.f32.partialorder %v1544, 0.0
        %vm2185 = vcmp.eq.f32.partialorder %v1545, 0.0
        %vm2186 = vcmp.eq.f32.partialorder %v1546, 0.0
        %vm2187 = vcmp.eq.f32.partialorder %v1547, 0.0
        %vm2188 = vcmp.eq.f32.partialorder %v1548, 0.0
        %vm2189 = vcmp.eq.f32.partialorder %v1549, 0.0
        %vm2190 = vcmp.eq.f32.partialorder %v1550, 0.0
        %vm2191 = vcmp.eq.f32.partialorder %v1551, 0.0
        %vm2192 = vcmp.eq.f32.partialorder %v1552, 0.0
        %vm2193 = vcmp.eq.f32.partialorder %v1553, 0.0
        %vm2194 = vcmp.eq.f32.partialorder %v1554, 0.0
        %vm2195 = vcmp.eq.f32.partialorder %v1555, 0.0
        %vm2196 = vcmp.eq.f32.partialorder %v1556, 0.0
        %vm2197 = vcmp.eq.f32.partialorder %v1557, 0.0
        %vm2198 = vcmp.eq.f32.partialorder %v1558, 0.0
        %vm2199 = vcmp.eq.f32.partialorder %v1559, 0.0
        %vm2200 = vcmp.eq.f32.partialorder %v1560, 0.0
        %vm2201 = vcmp.eq.f32.partialorder %v1561, 0.0
        %vm2202 = vcmp.eq.f32.partialorder %v1562, 0.0
        %vm2203 = vcmp.eq.f32.partialorder %v1563, 0.0
        %vm2204 = vcmp.eq.f32.partialorder %v1564, 0.0
        %vm2205 = vcmp.eq.f32.partialorder %v1565, 0.0
        %vm2206 = vcmp.eq.f32.partialorder %v1566, 0.0
        %vm2207 = vcmp.eq.f32.partialorder %v1567, 0.0
        %vm2208 = vcmp.eq.f32.partialorder %v1568, 0.0
        %vm2209 = vcmp.eq.f32.partialorder %v1569, 0.0
        %vm2210 = vcmp.eq.f32.partialorder %v1570, 0.0
        %vm2211 = vcmp.eq.f32.partialorder %v1571, 0.0
        %vm2212 = vcmp.eq.f32.partialorder %v1572, 0.0
        %vm2213 = vcmp.eq.f32.partialorder %v1573, 0.0
        %vm2214 = vcmp.eq.f32.partialorder %v1574, 0.0
        %vm2215 = vcmp.eq.f32.partialorder %v1575, 0.0
        %vm2216 = vcmp.eq.f32.partialorder %v1576, 0.0
        %vm2217 = vcmp.eq.f32.partialorder %v1577, 0.0
        %vm2218 = vcmp.eq.f32.partialorder %v1578, 0.0
        %vm2219 = vcmp.eq.f32.partialorder %v1579, 0.0
        %vm2220 = vcmp.eq.f32.partialorder %v1580, 0.0
        %vm2221 = vcmp.eq.f32.partialorder %v1581, 0.0
        %vm2222 = vcmp.eq.f32.partialorder %v1582, 0.0
        %vm2223 = vcmp.eq.f32.partialorder %v1583, 0.0
        %vm2224 = vcmp.eq.f32.partialorder %v1584, 0.0
        %vm2225 = vcmp.eq.f32.partialorder %v1585, 0.0
        %vm2226 = vcmp.eq.f32.partialorder %v1586, 0.0
        %vm2227 = vcmp.eq.f32.partialorder %v1587, 0.0
        %vm2228 = vcmp.eq.f32.partialorder %v1588, 0.0
        %vm2229 = vcmp.eq.f32.partialorder %v1589, 0.0
        %vm2230 = vcmp.eq.f32.partialorder %v1590, 0.0
        %vm2231 = vcmp.eq.f32.partialorder %v1591, 0.0
        %vm2232 = vcmp.eq.f32.partialorder %v1592, 0.0
        %vm2233 = vcmp.eq.f32.partialorder %v1593, 0.0
        %vm2234 = vcmp.eq.f32.partialorder %v1594, 0.0
        %vm2235 = vcmp.eq.f32.partialorder %v1595, 0.0
        %vm2236 = vcmp.eq.f32.partialorder %v1596, 0.0
        %vm2237 = vcmp.eq.f32.partialorder %v1533, 1.0
        %vm2238 = vcmp.eq.f32.partialorder %v1534, 1.0
        %vm2239 = vcmp.eq.f32.partialorder %v1535, 1.0
        %vm2240 = vcmp.eq.f32.partialorder %v1536, 1.0
        %vm2241 = vcmp.eq.f32.partialorder %v1537, 1.0
        %vm2242 = vcmp.eq.f32.partialorder %v1538, 1.0
        %vm2243 = vcmp.eq.f32.partialorder %v1539, 1.0
        %vm2244 = vcmp.eq.f32.partialorder %v1540, 1.0
        %vm2245 = vcmp.eq.f32.partialorder %v1541, 1.0
        %vm2246 = vcmp.eq.f32.partialorder %v1542, 1.0
        %vm2247 = vcmp.eq.f32.partialorder %v1543, 1.0
        %vm2248 = vcmp.eq.f32.partialorder %v1544, 1.0
        %vm2249 = vcmp.eq.f32.partialorder %v1545, 1.0
        %vm2250 = vcmp.eq.f32.partialorder %v1546, 1.0
        %vm2251 = vcmp.eq.f32.partialorder %v1547, 1.0
        %vm2252 = vcmp.eq.f32.partialorder %v1548, 1.0
        %vm2253 = vcmp.eq.f32.partialorder %v1549, 1.0
        %vm2254 = vcmp.eq.f32.partialorder %v1550, 1.0
        %vm2255 = vcmp.eq.f32.partialorder %v1551, 1.0
        %vm2256 = vcmp.eq.f32.partialorder %v1552, 1.0
        %vm2257 = vcmp.eq.f32.partialorder %v1553, 1.0
        %vm2258 = vcmp.eq.f32.partialorder %v1554, 1.0
        %vm2259 = vcmp.eq.f32.partialorder %v1555, 1.0
        %vm2260 = vcmp.eq.f32.partialorder %v1556, 1.0
        %vm2261 = vcmp.eq.f32.partialorder %v1557, 1.0
        %vm2262 = vcmp.eq.f32.partialorder %v1558, 1.0
        %vm2263 = vcmp.eq.f32.partialorder %v1559, 1.0
        %vm2264 = vcmp.eq.f32.partialorder %v1560, 1.0
        %vm2265 = vcmp.eq.f32.partialorder %v1561, 1.0
        %vm2266 = vcmp.eq.f32.partialorder %v1562, 1.0
        %vm2267 = vcmp.eq.f32.partialorder %v1563, 1.0
        %vm2268 = vcmp.eq.f32.partialorder %v1564, 1.0
        %vm2269 = vcmp.eq.f32.partialorder %v1565, 1.0
        %vm2270 = vcmp.eq.f32.partialorder %v1566, 1.0
        %vm2271 = vcmp.eq.f32.partialorder %v1567, 1.0
        %vm2272 = vcmp.eq.f32.partialorder %v1568, 1.0
        %vm2273 = vcmp.eq.f32.partialorder %v1569, 1.0
        %vm2274 = vcmp.eq.f32.partialorder %v1570, 1.0
        %vm2275 = vcmp.eq.f32.partialorder %v1571, 1.0
        %vm2276 = vcmp.eq.f32.partialorder %v1572, 1.0
        %vm2277 = vcmp.eq.f32.partialorder %v1573, 1.0
        %vm2278 = vcmp.eq.f32.partialorder %v1574, 1.0
        %vm2279 = vcmp.eq.f32.partialorder %v1575, 1.0
        %vm2280 = vcmp.eq.f32.partialorder %v1576, 1.0
        %vm2281 = vcmp.eq.f32.partialorder %v1577, 1.0
        %vm2282 = vcmp.eq.f32.partialorder %v1578, 1.0
        %vm2283 = vcmp.eq.f32.partialorder %v1579, 1.0
        %vm2284 = vcmp.eq.f32.partialorder %v1580, 1.0
        %vm2285 = vcmp.eq.f32.partialorder %v1581, 1.0
        %vm2286 = vcmp.eq.f32.partialorder %v1582, 1.0
        %vm2287 = vcmp.eq.f32.partialorder %v1583, 1.0
        %vm2288 = vcmp.eq.f32.partialorder %v1584, 1.0
        %vm2289 = vcmp.eq.f32.partialorder %v1585, 1.0
        %vm2290 = vcmp.eq.f32.partialorder %v1586, 1.0
        %vm2291 = vcmp.eq.f32.partialorder %v1587, 1.0
        %vm2292 = vcmp.eq.f32.partialorder %v1588, 1.0
        %vm2293 = vcmp.eq.f32.partialorder %v1589, 1.0
        %vm2294 = vcmp.eq.f32.partialorder %v1590, 1.0
        %vm2295 = vcmp.eq.f32.partialorder %v1591, 1.0
        %vm2296 = vcmp.eq.f32.partialorder %v1592, 1.0
        %vm2297 = vcmp.eq.f32.partialorder %v1593, 1.0
        %vm2298 = vcmp.eq.f32.partialorder %v1594, 1.0
        %vm2299 = vcmp.eq.f32.partialorder %v1595, 1.0
        %vm2300 = vcmp.eq.f32.partialorder %v1596, 1.0
        %v2301 = vsel %vm2237, 16.0, 33.0
        %v2302 = vsel %vm2238, 16.0, 33.0
        %v2303 = vsel %vm2239, 16.0, 33.0
        %v2304 = vsel %vm2240, 16.0, 33.0
        %v2305 = vsel %vm2241, 16.0, 33.0
        %v2306 = vsel %vm2242, 16.0, 33.0
        %v2307 = vsel %vm2243, 16.0, 33.0
        %v2308 = vsel %vm2244, 16.0, 33.0
        %v2309 = vsel %vm2245, 16.0, 33.0
        %v2310 = vsel %vm2246, 16.0, 33.0
        %v2311 = vsel %vm2247, 16.0, 33.0
        %v2312 = vsel %vm2248, 16.0, 33.0
        %v2313 = vsel %vm2249, 16.0, 33.0
        %v2314 = vsel %vm2250, 16.0, 33.0
        %v2315 = vsel %vm2251, 16.0, 33.0
        %v2316 = vsel %vm2252, 16.0, 33.0
        %v2317 = vsel %vm2253, 16.0, 33.0
        %v2318 = vsel %vm2254, 16.0, 33.0
        %v2319 = vsel %vm2255, 16.0, 33.0
        %v2320 = vsel %vm2256, 16.0, 33.0
        %v2321 = vsel %vm2257, 16.0, 33.0
        %v2322 = vsel %vm2258, 16.0, 33.0
        %v2323 = vsel %vm2259, 16.0, 33.0
        %v2324 = vsel %vm2260, 16.0, 33.0
        %v2325 = vsel %vm2261, 16.0, 33.0
        %v2326 = vsel %vm2262, 16.0, 33.0
        %v2327 = vsel %vm2263, 16.0, 33.0
        %v2328 = vsel %vm2264, 16.0, 33.0
        %v2329 = vsel %vm2265, 16.0, 33.0
        %v2330 = vsel %vm2266, 16.0, 33.0
        %v2331 = vsel %vm2267, 16.0, 33.0
        %v2332 = vsel %vm2268, 16.0, 33.0
        %v2333 = vsel %vm2269, 16.0, 33.0
        %v2334 = vsel %vm2270, 16.0, 33.0
        %v2335 = vsel %vm2271, 16.0, 33.0
        %v2336 = vsel %vm2272, 16.0, 33.0
        %v2337 = vsel %vm2273, 16.0, 33.0
        %v2338 = vsel %vm2274, 16.0, 33.0
        %v2339 = vsel %vm2275, 16.0, 33.0
        %v2340 = vsel %vm2276, 16.0, 33.0
        %v2341 = vsel %vm2277, 16.0, 33.0
        %v2342 = vsel %vm2278, 16.0, 33.0
        %v2343 = vsel %vm2279, 16.0, 33.0
        %v2344 = vsel %vm2280, 16.0, 33.0
        %v2345 = vsel %vm2281, 16.0, 33.0
        %v2346 = vsel %vm2282, 16.0, 33.0
        %v2347 = vsel %vm2283, 16.0, 33.0
        %v2348 = vsel %vm2284, 16.0, 33.0
        %v2349 = vsel %vm2285, 16.0, 33.0
        %v2350 = vsel %vm2286, 16.0, 33.0
        %v2351 = vsel %vm2287, 16.0, 33.0
        %v2352 = vsel %vm2288, 16.0, 33.0
        %v2353 = vsel %vm2289, 16.0, 33.0
        %v2354 = vsel %vm2290, 16.0, 33.0
        %v2355 = vsel %vm2291, 16.0, 33.0
        %v2356 = vsel %vm2292, 16.0, 33.0
        %v2357 = vsel %vm2293, 16.0, 33.0
        %v2358 = vsel %vm2294, 16.0, 33.0
        %v2359 = vsel %vm2295, 16.0, 33.0
        %v2360 = vsel %vm2296, 16.0, 33.0
        %v2361 = vsel %vm2297, 16.0, 33.0
        %v2362 = vsel %vm2298, 16.0, 33.0
        %v2363 = vsel %vm2299, 16.0, 33.0
        %v2364 = vsel %vm2300, 16.0, 33.0
        %v2365 = vsel %vm2173, 10.0, %v2301
        %v2366 = vsel %vm2174, 10.0, %v2302
        %v2367 = vsel %vm2175, 10.0, %v2303
        %v2368 = vsel %vm2176, 10.0, %v2304
        %v2369 = vsel %vm2177, 10.0, %v2305
        %v2370 = vsel %vm2178, 10.0, %v2306
        %v2371 = vsel %vm2179, 10.0, %v2307
        %v2372 = vsel %vm2180, 10.0, %v2308
        %v2373 = vsel %vm2181, 10.0, %v2309
        %v2374 = vsel %vm2182, 10.0, %v2310
        %v2375 = vsel %vm2183, 10.0, %v2311
        %v2376 = vsel %vm2184, 10.0, %v2312
        %v2377 = vsel %vm2185, 10.0, %v2313
        %v2378 = vsel %vm2186, 10.0, %v2314
        %v2379 = vsel %vm2187, 10.0, %v2315
        %v2380 = vsel %vm2188, 10.0, %v2316
        %v2381 = vsel %vm2189, 10.0, %v2317
        %v2382 = vsel %vm2190, 10.0, %v2318
        %v2383 = vsel %vm2191, 10.0, %v2319
        %v2384 = vsel %vm2192, 10.0, %v2320
        %v2385 = vsel %vm2193, 10.0, %v2321
        %v2386 = vsel %vm2194, 10.0, %v2322
        %v2387 = vsel %vm2195, 10.0, %v2323
        %v2388 = vsel %vm2196, 10.0, %v2324
        %v2389 = vsel %vm2197, 10.0, %v2325
        %v2390 = vsel %vm2198, 10.0, %v2326
        %v2391 = vsel %vm2199, 10.0, %v2327
        %v2392 = vsel %vm2200, 10.0, %v2328
        %v2393 = vsel %vm2201, 10.0, %v2329
        %v2394 = vsel %vm2202, 10.0, %v2330
        %v2395 = vsel %vm2203, 10.0, %v2331
        %v2396 = vsel %vm2204, 10.0, %v2332
        %v2397 = vsel %vm2205, 10.0, %v2333
        %v2398 = vsel %vm2206, 10.0, %v2334
        %v2399 = vsel %vm2207, 10.0, %v2335
        %v2400 = vsel %vm2208, 10.0, %v2336
        %v2401 = vsel %vm2209, 10.0, %v2337
        %v2402 = vsel %vm2210, 10.0, %v2338
        %v2403 = vsel %vm2211, 10.0, %v2339
        %v2404 = vsel %vm2212, 10.0, %v2340
        %v2405 = vsel %vm2213, 10.0, %v2341
        %v2406 = vsel %vm2214, 10.0, %v2342
        %v2407 = vsel %vm2215, 10.0, %v2343
        %v2408 = vsel %vm2216, 10.0, %v2344
        %v2409 = vsel %vm2217, 10.0, %v2345
        %v2410 = vsel %vm2218, 10.0, %v2346
        %v2411 = vsel %vm2219, 10.0, %v2347
        %v2412 = vsel %vm2220, 10.0, %v2348
        %v2413 = vsel %vm2221, 10.0, %v2349
        %v2414 = vsel %vm2222, 10.0, %v2350
        %v2415 = vsel %vm2223, 10.0, %v2351
        %v2416 = vsel %vm2224, 10.0, %v2352
        %v2417 = vsel %vm2225, 10.0, %v2353
        %v2418 = vsel %vm2226, 10.0, %v2354
        %v2419 = vsel %vm2227, 10.0, %v2355
        %v2420 = vsel %vm2228, 10.0, %v2356
        %v2421 = vsel %vm2229, 10.0, %v2357
        %v2422 = vsel %vm2230, 10.0, %v2358
        %v2423 = vsel %vm2231, 10.0, %v2359
        %v2424 = vsel %vm2232, 10.0, %v2360
        %v2425 = vsel %vm2233, 10.0, %v2361
        %v2426 = vsel %vm2234, 10.0, %v2362
        %v2427 = vsel %vm2235, 10.0, %v2363
        %v2428 = vsel %vm2236, 10.0, %v2364
        %v2429 = vsel %vm2237, 30.0, 23.0
        %v2430 = vsel %vm2238, 30.0, 23.0
        %v2431 = vsel %vm2239, 30.0, 23.0
        %v2432 = vsel %vm2240, 30.0, 23.0
        %v2433 = vsel %vm2241, 30.0, 23.0
        %v2434 = vsel %vm2242, 30.0, 23.0
        %v2435 = vsel %vm2243, 30.0, 23.0
        %v2436 = vsel %vm2244, 30.0, 23.0
        %v2437 = vsel %vm2245, 30.0, 23.0
        %v2438 = vsel %vm2246, 30.0, 23.0
        %v2439 = vsel %vm2247, 30.0, 23.0
        %v2440 = vsel %vm2248, 30.0, 23.0
        %v2441 = vsel %vm2249, 30.0, 23.0
        %v2442 = vsel %vm2250, 30.0, 23.0
        %v2443 = vsel %vm2251, 30.0, 23.0
        %v2444 = vsel %vm2252, 30.0, 23.0
        %v2445 = vsel %vm2253, 30.0, 23.0
        %v2446 = vsel %vm2254, 30.0, 23.0
        %v2447 = vsel %vm2255, 30.0, 23.0
        %v2448 = vsel %vm2256, 30.0, 23.0
        %v2449 = vsel %vm2257, 30.0, 23.0
        %v2450 = vsel %vm2258, 30.0, 23.0
        %v2451 = vsel %vm2259, 30.0, 23.0
        %v2452 = vsel %vm2260, 30.0, 23.0
        %v2453 = vsel %vm2261, 30.0, 23.0
        %v2454 = vsel %vm2262, 30.0, 23.0
        %v2455 = vsel %vm2263, 30.0, 23.0
        %v2456 = vsel %vm2264, 30.0, 23.0
        %v2457 = vsel %vm2265, 30.0, 23.0
        %v2458 = vsel %vm2266, 30.0, 23.0
        %v2459 = vsel %vm2267, 30.0, 23.0
        %v2460 = vsel %vm2268, 30.0, 23.0
        %v2461 = vsel %vm2269, 30.0, 23.0
        %v2462 = vsel %vm2270, 30.0, 23.0
        %v2463 = vsel %vm2271, 30.0, 23.0
        %v2464 = vsel %vm2272, 30.0, 23.0
        %v2465 = vsel %vm2273, 30.0, 23.0
        %v2466 = vsel %vm2274, 30.0, 23.0
        %v2467 = vsel %vm2275, 30.0, 23.0
        %v2468 = vsel %vm2276, 30.0, 23.0
        %v2469 = vsel %vm2277, 30.0, 23.0
        %v2470 = vsel %vm2278, 30.0, 23.0
        %v2471 = vsel %vm2279, 30.0, 23.0
        %v2472 = vsel %vm2280, 30.0, 23.0
        %v2473 = vsel %vm2281, 30.0, 23.0
        %v2474 = vsel %vm2282, 30.0, 23.0
        %v2475 = vsel %vm2283, 30.0, 23.0
        %v2476 = vsel %vm2284, 30.0, 23.0
        %v2477 = vsel %vm2285, 30.0, 23.0
        %v2478 = vsel %vm2286, 30.0, 23.0
        %v2479 = vsel %vm2287, 30.0, 23.0
        %v2480 = vsel %vm2288, 30.0, 23.0
        %v2481 = vsel %vm2289, 30.0, 23.0
        %v2482 = vsel %vm2290, 30.0, 23.0
        %v2483 = vsel %vm2291, 30.0, 23.0
        %v2484 = vsel %vm2292, 30.0, 23.0
        %v2485 = vsel %vm2293, 30.0, 23.0
        %v2486 = vsel %vm2294, 30.0, 23.0
        %v2487 = vsel %vm2295, 30.0, 23.0
        %v2488 = vsel %vm2296, 30.0, 23.0
        %v2489 = vsel %vm2297, 30.0, 23.0
        %v2490 = vsel %vm2298, 30.0, 23.0
        %v2491 = vsel %vm2299, 30.0, 23.0
        %v2492 = vsel %vm2300, 30.0, 23.0
        %v2493 = vsel %vm2173, 13.0, %v2429
        %v2494 = vsel %vm2174, 13.0, %v2430
        %v2495 = vsel %vm2175, 13.0, %v2431
        %v2496 = vsel %vm2176, 13.0, %v2432
        %v2497 = vsel %vm2177, 13.0, %v2433
        %v2498 = vsel %vm2178, 13.0, %v2434
        %v2499 = vsel %vm2179, 13.0, %v2435
        %v2500 = vsel %vm2180, 13.0, %v2436
        %v2501 = vsel %vm2181, 13.0, %v2437
        %v2502 = vsel %vm2182, 13.0, %v2438
        %v2503 = vsel %vm2183, 13.0, %v2439
        %v2504 = vsel %vm2184, 13.0, %v2440
        %v2505 = vsel %vm2185, 13.0, %v2441
        %v2506 = vsel %vm2186, 13.0, %v2442
        %v2507 = vsel %vm2187, 13.0, %v2443
        %v2508 = vsel %vm2188, 13.0, %v2444
        %v2509 = vsel %vm2189, 13.0, %v2445
        %v2510 = vsel %vm2190, 13.0, %v2446
        %v2511 = vsel %vm2191, 13.0, %v2447
        %v2512 = vsel %vm2192, 13.0, %v2448
        %v2513 = vsel %vm2193, 13.0, %v2449
        %v2514 = vsel %vm2194, 13.0, %v2450
        %v2515 = vsel %vm2195, 13.0, %v2451
        %v2516 = vsel %vm2196, 13.0, %v2452
        %v2517 = vsel %vm2197, 13.0, %v2453
        %v2518 = vsel %vm2198, 13.0, %v2454
        %v2519 = vsel %vm2199, 13.0, %v2455
        %v2520 = vsel %vm2200, 13.0, %v2456
        %v2521 = vsel %vm2201, 13.0, %v2457
        %v2522 = vsel %vm2202, 13.0, %v2458
        %v2523 = vsel %vm2203, 13.0, %v2459
        %v2524 = vsel %vm2204, 13.0, %v2460
        %v2525 = vsel %vm2205, 13.0, %v2461
        %v2526 = vsel %vm2206, 13.0, %v2462
        %v2527 = vsel %vm2207, 13.0, %v2463
        %v2528 = vsel %vm2208, 13.0, %v2464
        %v2529 = vsel %vm2209, 13.0, %v2465
        %v2530 = vsel %vm2210, 13.0, %v2466
        %v2531 = vsel %vm2211, 13.0, %v2467
        %v2532 = vsel %vm2212, 13.0, %v2468
        %v2533 = vsel %vm2213, 13.0, %v2469
        %v2534 = vsel %vm2214, 13.0, %v2470
        %v2535 = vsel %vm2215, 13.0, %v2471
        %v2536 = vsel %vm2216, 13.0, %v2472
        %v2537 = vsel %vm2217, 13.0, %v2473
        %v2538 = vsel %vm2218, 13.0, %v2474
        %v2539 = vsel %vm2219, 13.0, %v2475
        %v2540 = vsel %vm2220, 13.0, %v2476
        %v2541 = vsel %vm2221, 13.0, %v2477
        %v2542 = vsel %vm2222, 13.0, %v2478
        %v2543 = vsel %vm2223, 13.0, %v2479
        %v2544 = vsel %vm2224, 13.0, %v2480
        %v2545 = vsel %vm2225, 13.0, %v2481
        %v2546 = vsel %vm2226, 13.0, %v2482
        %v2547 = vsel %vm2227, 13.0, %v2483
        %v2548 = vsel %vm2228, 13.0, %v2484
        %v2549 = vsel %vm2229, 13.0, %v2485
        %v2550 = vsel %vm2230, 13.0, %v2486
        %v2551 = vsel %vm2231, 13.0, %v2487
        %v2552 = vsel %vm2232, 13.0, %v2488
        %v2553 = vsel %vm2233, 13.0, %v2489
        %v2554 = vsel %vm2234, 13.0, %v2490
        %v2555 = vsel %vm2235, 13.0, %v2491
        %v2556 = vsel %vm2236, 13.0, %v2492
        %v2557 = vsel %vm2109, %v2493, 1.0
        %v2558 = vsel %vm2110, %v2494, 1.0
        %v2559 = vsel %vm2111, %v2495, 1.0
        %v2560 = vsel %vm2112, %v2496, 1.0
        %v2561 = vsel %vm2113, %v2497, 1.0
        %v2562 = vsel %vm2114, %v2498, 1.0
        %v2563 = vsel %vm2115, %v2499, 1.0
        %v2564 = vsel %vm2116, %v2500, 1.0
        %v2565 = vsel %vm2117, %v2501, 1.0
        %v2566 = vsel %vm2118, %v2502, 1.0
        %v2567 = vsel %vm2119, %v2503, 1.0
        %v2568 = vsel %vm2120, %v2504, 1.0
        %v2569 = vsel %vm2121, %v2505, 1.0
        %v2570 = vsel %vm2122, %v2506, 1.0
        %v2571 = vsel %vm2123, %v2507, 1.0
        %v2572 = vsel %vm2124, %v2508, 1.0
        %v2573 = vsel %vm2125, %v2509, 1.0
        %v2574 = vsel %vm2126, %v2510, 1.0
        %v2575 = vsel %vm2127, %v2511, 1.0
        %v2576 = vsel %vm2128, %v2512, 1.0
        %v2577 = vsel %vm2129, %v2513, 1.0
        %v2578 = vsel %vm2130, %v2514, 1.0
        %v2579 = vsel %vm2131, %v2515, 1.0
        %v2580 = vsel %vm2132, %v2516, 1.0
        %v2581 = vsel %vm2133, %v2517, 1.0
        %v2582 = vsel %vm2134, %v2518, 1.0
        %v2583 = vsel %vm2135, %v2519, 1.0
        %v2584 = vsel %vm2136, %v2520, 1.0
        %v2585 = vsel %vm2137, %v2521, 1.0
        %v2586 = vsel %vm2138, %v2522, 1.0
        %v2587 = vsel %vm2139, %v2523, 1.0
        %v2588 = vsel %vm2140, %v2524, 1.0
        %v2589 = vsel %vm2141, %v2525, 1.0
        %v2590 = vsel %vm2142, %v2526, 1.0
        %v2591 = vsel %vm2143, %v2527, 1.0
        %v2592 = vsel %vm2144, %v2528, 1.0
        %v2593 = vsel %vm2145, %v2529, 1.0
        %v2594 = vsel %vm2146, %v2530, 1.0
        %v2595 = vsel %vm2147, %v2531, 1.0
        %v2596 = vsel %vm2148, %v2532, 1.0
        %v2597 = vsel %vm2149, %v2533, 1.0
        %v2598 = vsel %vm2150, %v2534, 1.0
        %v2599 = vsel %vm2151, %v2535, 1.0
        %v2600 = vsel %vm2152, %v2536, 1.0
        %v2601 = vsel %vm2153, %v2537, 1.0
        %v2602 = vsel %vm2154, %v2538, 1.0
        %v2603 = vsel %vm2155, %v2539, 1.0
        %v2604 = vsel %vm2156, %v2540, 1.0
        %v2605 = vsel %vm2157, %v2541, 1.0
        %v2606 = vsel %vm2158, %v2542, 1.0
        %v2607 = vsel %vm2159, %v2543, 1.0
        %v2608 = vsel %vm2160, %v2544, 1.0
        %v2609 = vsel %vm2161, %v2545, 1.0
        %v2610 = vsel %vm2162, %v2546, 1.0
        %v2611 = vsel %vm2163, %v2547, 1.0
        %v2612 = vsel %vm2164, %v2548, 1.0
        %v2613 = vsel %vm2165, %v2549, 1.0
        %v2614 = vsel %vm2166, %v2550, 1.0
        %v2615 = vsel %vm2167, %v2551, 1.0
        %v2616 = vsel %vm2168, %v2552, 1.0
        %v2617 = vsel %vm2169, %v2553, 1.0
        %v2618 = vsel %vm2170, %v2554, 1.0
        %v2619 = vsel %vm2171, %v2555, 1.0
        %v2620 = vsel %vm2172, %v2556, 1.0
        %v2621 = vsel %vm2045, %v2365, %v2557
        %v2622 = vsel %vm2046, %v2366, %v2558
        %v2623 = vsel %vm2047, %v2367, %v2559
        %v2624 = vsel %vm2048, %v2368, %v2560
        %v2625 = vsel %vm2049, %v2369, %v2561
        %v2626 = vsel %vm2050, %v2370, %v2562
        %v2627 = vsel %vm2051, %v2371, %v2563
        %v2628 = vsel %vm2052, %v2372, %v2564
        %v2629 = vsel %vm2053, %v2373, %v2565
        %v2630 = vsel %vm2054, %v2374, %v2566
        %v2631 = vsel %vm2055, %v2375, %v2567
        %v2632 = vsel %vm2056, %v2376, %v2568
        %v2633 = vsel %vm2057, %v2377, %v2569
        %v2634 = vsel %vm2058, %v2378, %v2570
        %v2635 = vsel %vm2059, %v2379, %v2571
        %v2636 = vsel %vm2060, %v2380, %v2572
        %v2637 = vsel %vm2061, %v2381, %v2573
        %v2638 = vsel %vm2062, %v2382, %v2574
        %v2639 = vsel %vm2063, %v2383, %v2575
        %v2640 = vsel %vm2064, %v2384, %v2576
        %v2641 = vsel %vm2065, %v2385, %v2577
        %v2642 = vsel %vm2066, %v2386, %v2578
        %v2643 = vsel %vm2067, %v2387, %v2579
        %v2644 = vsel %vm2068, %v2388, %v2580
        %v2645 = vsel %vm2069, %v2389, %v2581
        %v2646 = vsel %vm2070, %v2390, %v2582
        %v2647 = vsel %vm2071, %v2391, %v2583
        %v2648 = vsel %vm2072, %v2392, %v2584
        %v2649 = vsel %vm2073, %v2393, %v2585
        %v2650 = vsel %vm2074, %v2394, %v2586
        %v2651 = vsel %vm2075, %v2395, %v2587
        %v2652 = vsel %vm2076, %v2396, %v2588
        %v2653 = vsel %vm2077, %v2397, %v2589
        %v2654 = vsel %vm2078, %v2398, %v2590
        %v2655 = vsel %vm2079, %v2399, %v2591
        %v2656 = vsel %vm2080, %v2400, %v2592
        %v2657 = vsel %vm2081, %v2401, %v2593
        %v2658 = vsel %vm2082, %v2402, %v2594
        %v2659 = vsel %vm2083, %v2403, %v2595
        %v2660 = vsel %vm2084, %v2404, %v2596
        %v2661 = vsel %vm2085, %v2405, %v2597
        %v2662 = vsel %vm2086, %v2406, %v2598
        %v2663 = vsel %vm2087, %v2407, %v2599
        %v2664 = vsel %vm2088, %v2408, %v2600
        %v2665 = vsel %vm2089, %v2409, %v2601
        %v2666 = vsel %vm2090, %v2410, %v2602
        %v2667 = vsel %vm2091, %v2411, %v2603
        %v2668 = vsel %vm2092, %v2412, %v2604
        %v2669 = vsel %vm2093, %v2413, %v2605
        %v2670 = vsel %vm2094, %v2414, %v2606
        %v2671 = vsel %vm2095, %v2415, %v2607
        %v2672 = vsel %vm2096, %v2416, %v2608
        %v2673 = vsel %vm2097, %v2417, %v2609
        %v2674 = vsel %vm2098, %v2418, %v2610
        %v2675 = vsel %vm2099, %v2419, %v2611
        %v2676 = vsel %vm2100, %v2420, %v2612
        %v2677 = vsel %vm2101, %v2421, %v2613
        %v2678 = vsel %vm2102, %v2422, %v2614
        %v2679 = vsel %vm2103, %v2423, %v2615
        %v2680 = vsel %vm2104, %v2424, %v2616
        %v2681 = vsel %vm2105, %v2425, %v2617
        %v2682 = vsel %vm2106, %v2426, %v2618
        %v2683 = vsel %vm2107, %v2427, %v2619
        %v2684 = vsel %vm2108, %v2428, %v2620
        %v2685 = vsel %vm1981, 26.0, %v2621
        %v2686 = vsel %vm1982, 26.0, %v2622
        %v2687 = vsel %vm1983, 26.0, %v2623
        %v2688 = vsel %vm1984, 26.0, %v2624
        %v2689 = vsel %vm1985, 26.0, %v2625
        %v2690 = vsel %vm1986, 26.0, %v2626
        %v2691 = vsel %vm1987, 26.0, %v2627
        %v2692 = vsel %vm1988, 26.0, %v2628
        %v2693 = vsel %vm1989, 26.0, %v2629
        %v2694 = vsel %vm1990, 26.0, %v2630
        %v2695 = vsel %vm1991, 26.0, %v2631
        %v2696 = vsel %vm1992, 26.0, %v2632
        %v2697 = vsel %vm1993, 26.0, %v2633
        %v2698 = vsel %vm1994, 26.0, %v2634
        %v2699 = vsel %vm1995, 26.0, %v2635
        %v2700 = vsel %vm1996, 26.0, %v2636
        %v2701 = vsel %vm1997, 26.0, %v2637
        %v2702 = vsel %vm1998, 26.0, %v2638
        %v2703 = vsel %vm1999, 26.0, %v2639
        %v2704 = vsel %vm2000, 26.0, %v2640
        %v2705 = vsel %vm2001, 26.0, %v2641
        %v2706 = vsel %vm2002, 26.0, %v2642
        %v2707 = vsel %vm2003, 26.0, %v2643
        %v2708 = vsel %vm2004, 26.0, %v2644
        %v2709 = vsel %vm2005, 26.0, %v2645
        %v2710 = vsel %vm2006, 26.0, %v2646
        %v2711 = vsel %vm2007, 26.0, %v2647
        %v2712 = vsel %vm2008, 26.0, %v2648
        %v2713 = vsel %vm2009, 26.0, %v2649
        %v2714 = vsel %vm2010, 26.0, %v2650
        %v2715 = vsel %vm2011, 26.0, %v2651
        %v2716 = vsel %vm2012, 26.0, %v2652
        %v2717 = vsel %vm2013, 26.0, %v2653
        %v2718 = vsel %vm2014, 26.0, %v2654
        %v2719 = vsel %vm2015, 26.0, %v2655
        %v2720 = vsel %vm2016, 26.0, %v2656
        %v2721 = vsel %vm2017, 26.0, %v2657
        %v2722 = vsel %vm2018, 26.0, %v2658
        %v2723 = vsel %vm2019, 26.0, %v2659
        %v2724 = vsel %vm2020, 26.0, %v2660
        %v2725 = vsel %vm2021, 26.0, %v2661
        %v2726 = vsel %vm2022, 26.0, %v2662
        %v2727 = vsel %vm2023, 26.0, %v2663
        %v2728 = vsel %vm2024, 26.0, %v2664
        %v2729 = vsel %vm2025, 26.0, %v2665
        %v2730 = vsel %vm2026, 26.0, %v2666
        %v2731 = vsel %vm2027, 26.0, %v2667
        %v2732 = vsel %vm2028, 26.0, %v2668
        %v2733 = vsel %vm2029, 26.0, %v2669
        %v2734 = vsel %vm2030, 26.0, %v2670
        %v2735 = vsel %vm2031, 26.0, %v2671
        %v2736 = vsel %vm2032, 26.0, %v2672
        %v2737 = vsel %vm2033, 26.0, %v2673
        %v2738 = vsel %vm2034, 26.0, %v2674
        %v2739 = vsel %vm2035, 26.0, %v2675
        %v2740 = vsel %vm2036, 26.0, %v2676
        %v2741 = vsel %vm2037, 26.0, %v2677
        %v2742 = vsel %vm2038, 26.0, %v2678
        %v2743 = vsel %vm2039, 26.0, %v2679
        %v2744 = vsel %vm2040, 26.0, %v2680
        %v2745 = vsel %vm2041, 26.0, %v2681
        %v2746 = vsel %vm2042, 26.0, %v2682
        %v2747 = vsel %vm2043, 26.0, %v2683
        %v2748 = vsel %vm2044, 26.0, %v2684
        %v2749 = vsel %vm1917, 26.0, %v2685
        %v2750 = vsel %vm1918, 26.0, %v2686
        %v2751 = vsel %vm1919, 26.0, %v2687
        %v2752 = vsel %vm1920, 26.0, %v2688
        %v2753 = vsel %vm1921, 26.0, %v2689
        %v2754 = vsel %vm1922, 26.0, %v2690
        %v2755 = vsel %vm1923, 26.0, %v2691
        %v2756 = vsel %vm1924, 26.0, %v2692
        %v2757 = vsel %vm1925, 26.0, %v2693
        %v2758 = vsel %vm1926, 26.0, %v2694
        %v2759 = vsel %vm1927, 26.0, %v2695
        %v2760 = vsel %vm1928, 26.0, %v2696
        %v2761 = vsel %vm1929, 26.0, %v2697
        %v2762 = vsel %vm1930, 26.0, %v2698
        %v2763 = vsel %vm1931, 26.0, %v2699
        %v2764 = vsel %vm1932, 26.0, %v2700
        %v2765 = vsel %vm1933, 26.0, %v2701
        %v2766 = vsel %vm1934, 26.0, %v2702
        %v2767 = vsel %vm1935, 26.0, %v2703
        %v2768 = vsel %vm1936, 26.0, %v2704
        %v2769 = vsel %vm1937, 26.0, %v2705
        %v2770 = vsel %vm1938, 26.0, %v2706
        %v2771 = vsel %vm1939, 26.0, %v2707
        %v2772 = vsel %vm1940, 26.0, %v2708
        %v2773 = vsel %vm1941, 26.0, %v2709
        %v2774 = vsel %vm1942, 26.0, %v2710
        %v2775 = vsel %vm1943, 26.0, %v2711
        %v2776 = vsel %vm1944, 26.0, %v2712
        %v2777 = vsel %vm1945, 26.0, %v2713
        %v2778 = vsel %vm1946, 26.0, %v2714
        %v2779 = vsel %vm1947, 26.0, %v2715
        %v2780 = vsel %vm1948, 26.0, %v2716
        %v2781 = vsel %vm1949, 26.0, %v2717
        %v2782 = vsel %vm1950, 26.0, %v2718
        %v2783 = vsel %vm1951, 26.0, %v2719
        %v2784 = vsel %vm1952, 26.0, %v2720
        %v2785 = vsel %vm1953, 26.0, %v2721
        %v2786 = vsel %vm1954, 26.0, %v2722
        %v2787 = vsel %vm1955, 26.0, %v2723
        %v2788 = vsel %vm1956, 26.0, %v2724
        %v2789 = vsel %vm1957, 26.0, %v2725
        %v2790 = vsel %vm1958, 26.0, %v2726
        %v2791 = vsel %vm1959, 26.0, %v2727
        %v2792 = vsel %vm1960, 26.0, %v2728
        %v2793 = vsel %vm1961, 26.0, %v2729
        %v2794 = vsel %vm1962, 26.0, %v2730
        %v2795 = vsel %vm1963, 26.0, %v2731
        %v2796 = vsel %vm1964, 26.0, %v2732
        %v2797 = vsel %vm1965, 26.0, %v2733
        %v2798 = vsel %vm1966, 26.0, %v2734
        %v2799 = vsel %vm1967, 26.0, %v2735
        %v2800 = vsel %vm1968, 26.0, %v2736
        %v2801 = vsel %vm1969, 26.0, %v2737
        %v2802 = vsel %vm1970, 26.0, %v2738
        %v2803 = vsel %vm1971, 26.0, %v2739
        %v2804 = vsel %vm1972, 26.0, %v2740
        %v2805 = vsel %vm1973, 26.0, %v2741
        %v2806 = vsel %vm1974, 26.0, %v2742
        %v2807 = vsel %vm1975, 26.0, %v2743
        %v2808 = vsel %vm1976, 26.0, %v2744
        %v2809 = vsel %vm1977, 26.0, %v2745
        %v2810 = vsel %vm1978, 26.0, %v2746
        %v2811 = vsel %vm1979, 26.0, %v2747
        %v2812 = vsel %vm1980, 26.0, %v2748
        %v2813 = vmul.f32 %v1725, 26.0
        %v2814 = vmul.f32 %v1726, 26.0
        %v2815 = vmul.f32 %v1727, 26.0
        %v2816 = vmul.f32 %v1728, 26.0
        %v2817 = vmul.f32 %v1729, 26.0
        %v2818 = vmul.f32 %v1730, 26.0
        %v2819 = vmul.f32 %v1731, 26.0
        %v2820 = vmul.f32 %v1732, 26.0
        %v2821 = vmul.f32 %v1733, 26.0
        %v2822 = vmul.f32 %v1734, 26.0
        %v2823 = vmul.f32 %v1735, 26.0
        %v2824 = vmul.f32 %v1736, 26.0
        %v2825 = vmul.f32 %v1737, 26.0
        %v2826 = vmul.f32 %v1738, 26.0
        %v2827 = vmul.f32 %v1739, 26.0
        %v2828 = vmul.f32 %v1740, 26.0
        %v2829 = vmul.f32 %v1741, 26.0
        %v2830 = vmul.f32 %v1742, 26.0
        %v2831 = vmul.f32 %v1743, 26.0
        %v2832 = vmul.f32 %v1744, 26.0
        %v2833 = vmul.f32 %v1745, 26.0
        %v2834 = vmul.f32 %v1746, 26.0
        %v2835 = vmul.f32 %v1747, 26.0
        %v2836 = vmul.f32 %v1748, 26.0
        %v2837 = vmul.f32 %v1749, 26.0
        %v2838 = vmul.f32 %v1750, 26.0
        %v2839 = vmul.f32 %v1751, 26.0
        %v2840 = vmul.f32 %v1752, 26.0
        %v2841 = vmul.f32 %v1753, 26.0
        %v2842 = vmul.f32 %v1754, 26.0
        %v2843 = vmul.f32 %v1755, 26.0
        %v2844 = vmul.f32 %v1756, 26.0
        %v2845 = vmul.f32 %v1757, 26.0
        %v2846 = vmul.f32 %v1758, 26.0
        %v2847 = vmul.f32 %v1759, 26.0
        %v2848 = vmul.f32 %v1760, 26.0
        %v2849 = vmul.f32 %v1761, 26.0
        %v2850 = vmul.f32 %v1762, 26.0
        %v2851 = vmul.f32 %v1763, 26.0
        %v2852 = vmul.f32 %v1764, 26.0
        %v2853 = vmul.f32 %v1765, 26.0
        %v2854 = vmul.f32 %v1766, 26.0
        %v2855 = vmul.f32 %v1767, 26.0
        %v2856 = vmul.f32 %v1768, 26.0
        %v2857 = vmul.f32 %v1769, 26.0
        %v2858 = vmul.f32 %v1770, 26.0
        %v2859 = vmul.f32 %v1771, 26.0
        %v2860 = vmul.f32 %v1772, 26.0
        %v2861 = vmul.f32 %v1773, 26.0
        %v2862 = vmul.f32 %v1774, 26.0
        %v2863 = vmul.f32 %v1775, 26.0
        %v2864 = vmul.f32 %v1776, 26.0
        %v2865 = vmul.f32 %v1777, 26.0
        %v2866 = vmul.f32 %v1778, 26.0
        %v2867 = vmul.f32 %v1779, 26.0
        %v2868 = vmul.f32 %v1780, 26.0
        %v2869 = vmul.f32 %v1781, 26.0
        %v2870 = vmul.f32 %v1782, 26.0
        %v2871 = vmul.f32 %v1783, 26.0
        %v2872 = vmul.f32 %v1784, 26.0
        %v2873 = vmul.f32 %v1785, 26.0
        %v2874 = vmul.f32 %v1786, 26.0
        %v2875 = vmul.f32 %v1787, 26.0
        %v2876 = vmul.f32 %v1788, 26.0
        %v2877 = vmul.f32 %v1853, 26.0
        %v2878 = vmul.f32 %v1854, 26.0
        %v2879 = vmul.f32 %v1855, 26.0
        %v2880 = vmul.f32 %v1856, 26.0
        %v2881 = vmul.f32 %v1857, 26.0
        %v2882 = vmul.f32 %v1858, 26.0
        %v2883 = vmul.f32 %v1859, 26.0
        %v2884 = vmul.f32 %v1860, 26.0
        %v2885 = vmul.f32 %v1861, 26.0
        %v2886 = vmul.f32 %v1862, 26.0
        %v2887 = vmul.f32 %v1863, 26.0
        %v2888 = vmul.f32 %v1864, 26.0
        %v2889 = vmul.f32 %v1865, 26.0
        %v2890 = vmul.f32 %v1866, 26.0
        %v2891 = vmul.f32 %v1867, 26.0
        %v2892 = vmul.f32 %v1868, 26.0
        %v2893 = vmul.f32 %v1869, 26.0
        %v2894 = vmul.f32 %v1870, 26.0
        %v2895 = vmul.f32 %v1871, 26.0
        %v2896 = vmul.f32 %v1872, 26.0
        %v2897 = vmul.f32 %v1873, 26.0
        %v2898 = vmul.f32 %v1874, 26.0
        %v2899 = vmul.f32 %v1875, 26.0
        %v2900 = vmul.f32 %v1876, 26.0
        %v2901 = vmul.f32 %v1877, 26.0
        %v2902 = vmul.f32 %v1878, 26.0
        %v2903 = vmul.f32 %v1879, 26.0
        %v2904 = vmul.f32 %v1880, 26.0
        %v2905 = vmul.f32 %v1881, 26.0
        %v2906 = vmul.f32 %v1882, 26.0
        %v2907 = vmul.f32 %v1883, 26.0
        %v2908 = vmul.f32 %v1884, 26.0
        %v2909 = vmul.f32 %v1885, 26.0
        %v2910 = vmul.f32 %v1886, 26.0
        %v2911 = vmul.f32 %v1887, 26.0
        %v2912 = vmul.f32 %v1888, 26.0
        %v2913 = vmul.f32 %v1889, 26.0
        %v2914 = vmul.f32 %v1890, 26.0
        %v2915 = vmul.f32 %v1891, 26.0
        %v2916 = vmul.f32 %v1892, 26.0
        %v2917 = vmul.f32 %v1893, 26.0
        %v2918 = vmul.f32 %v1894, 26.0
        %v2919 = vmul.f32 %v1895, 26.0
        %v2920 = vmul.f32 %v1896, 26.0
        %v2921 = vmul.f32 %v1897, 26.0
        %v2922 = vmul.f32 %v1898, 26.0
        %v2923 = vmul.f32 %v1899, 26.0
        %v2924 = vmul.f32 %v1900, 26.0
        %v2925 = vmul.f32 %v1901, 26.0
        %v2926 = vmul.f32 %v1902, 26.0
        %v2927 = vmul.f32 %v1903, 26.0
        %v2928 = vmul.f32 %v1904, 26.0
        %v2929 = vmul.f32 %v1905, 26.0
        %v2930 = vmul.f32 %v1906, 26.0
        %v2931 = vmul.f32 %v1907, 26.0
        %v2932 = vmul.f32 %v1908, 26.0
        %v2933 = vmul.f32 %v1909, 26.0
        %v2934 = vmul.f32 %v1910, 26.0
        %v2935 = vmul.f32 %v1911, 26.0
        %v2936 = vmul.f32 %v1912, 26.0
        %v2937 = vmul.f32 %v1913, 26.0
        %v2938 = vmul.f32 %v1914, 26.0
        %v2939 = vmul.f32 %v1915, 26.0
        %v2940 = vmul.f32 %v1916, 26.0
        %v2941 = vsel %vm1981, %v2877, 0.0
        %v2942 = vsel %vm1982, %v2878, 0.0
        %v2943 = vsel %vm1983, %v2879, 0.0
        %v2944 = vsel %vm1984, %v2880, 0.0
        %v2945 = vsel %vm1985, %v2881, 0.0
        %v2946 = vsel %vm1986, %v2882, 0.0
        %v2947 = vsel %vm1987, %v2883, 0.0
        %v2948 = vsel %vm1988, %v2884, 0.0
        %v2949 = vsel %vm1989, %v2885, 0.0
        %v2950 = vsel %vm1990, %v2886, 0.0
        %v2951 = vsel %vm1991, %v2887, 0.0
        %v2952 = vsel %vm1992, %v2888, 0.0
        %v2953 = vsel %vm1993, %v2889, 0.0
        %v2954 = vsel %vm1994, %v2890, 0.0
        %v2955 = vsel %vm1995, %v2891, 0.0
        %v2956 = vsel %vm1996, %v2892, 0.0
        %v2957 = vsel %vm1997, %v2893, 0.0
        %v2958 = vsel %vm1998, %v2894, 0.0
        %v2959 = vsel %vm1999, %v2895, 0.0
        %v2960 = vsel %vm2000, %v2896, 0.0
        %v2961 = vsel %vm2001, %v2897, 0.0
        %v2962 = vsel %vm2002, %v2898, 0.0
        %v2963 = vsel %vm2003, %v2899, 0.0
        %v2964 = vsel %vm2004, %v2900, 0.0
        %v2965 = vsel %vm2005, %v2901, 0.0
        %v2966 = vsel %vm2006, %v2902, 0.0
        %v2967 = vsel %vm2007, %v2903, 0.0
        %v2968 = vsel %vm2008, %v2904, 0.0
        %v2969 = vsel %vm2009, %v2905, 0.0
        %v2970 = vsel %vm2010, %v2906, 0.0
        %v2971 = vsel %vm2011, %v2907, 0.0
        %v2972 = vsel %vm2012, %v2908, 0.0
        %v2973 = vsel %vm2013, %v2909, 0.0
        %v2974 = vsel %vm2014, %v2910, 0.0
        %v2975 = vsel %vm2015, %v2911, 0.0
        %v2976 = vsel %vm2016, %v2912, 0.0
        %v2977 = vsel %vm2017, %v2913, 0.0
        %v2978 = vsel %vm2018, %v2914, 0.0
        %v2979 = vsel %vm2019, %v2915, 0.0
        %v2980 = vsel %vm2020, %v2916, 0.0
        %v2981 = vsel %vm2021, %v2917, 0.0
        %v2982 = vsel %vm2022, %v2918, 0.0
        %v2983 = vsel %vm2023, %v2919, 0.0
        %v2984 = vsel %vm2024, %v2920, 0.0
        %v2985 = vsel %vm2025, %v2921, 0.0
        %v2986 = vsel %vm2026, %v2922, 0.0
        %v2987 = vsel %vm2027, %v2923, 0.0
        %v2988 = vsel %vm2028, %v2924, 0.0
        %v2989 = vsel %vm2029, %v2925, 0.0
        %v2990 = vsel %vm2030, %v2926, 0.0
        %v2991 = vsel %vm2031, %v2927, 0.0
        %v2992 = vsel %vm2032, %v2928, 0.0
        %v2993 = vsel %vm2033, %v2929, 0.0
        %v2994 = vsel %vm2034, %v2930, 0.0
        %v2995 = vsel %vm2035, %v2931, 0.0
        %v2996 = vsel %vm2036, %v2932, 0.0
        %v2997 = vsel %vm2037, %v2933, 0.0
        %v2998 = vsel %vm2038, %v2934, 0.0
        %v2999 = vsel %vm2039, %v2935, 0.0
        %v3000 = vsel %vm2040, %v2936, 0.0
        %v3001 = vsel %vm2041, %v2937, 0.0
        %v3002 = vsel %vm2042, %v2938, 0.0
        %v3003 = vsel %vm2043, %v2939, 0.0
        %v3004 = vsel %vm2044, %v2940, 0.0
        %v3005 = vsel %vm1917, %v2813, %v2941
        %v3006 = vsel %vm1918, %v2814, %v2942
        %v3007 = vsel %vm1919, %v2815, %v2943
        %v3008 = vsel %vm1920, %v2816, %v2944
        %v3009 = vsel %vm1921, %v2817, %v2945
        %v3010 = vsel %vm1922, %v2818, %v2946
        %v3011 = vsel %vm1923, %v2819, %v2947
        %v3012 = vsel %vm1924, %v2820, %v2948
        %v3013 = vsel %vm1925, %v2821, %v2949
        %v3014 = vsel %vm1926, %v2822, %v2950
        %v3015 = vsel %vm1927, %v2823, %v2951
        %v3016 = vsel %vm1928, %v2824, %v2952
        %v3017 = vsel %vm1929, %v2825, %v2953
        %v3018 = vsel %vm1930, %v2826, %v2954
        %v3019 = vsel %vm1931, %v2827, %v2955
        %v3020 = vsel %vm1932, %v2828, %v2956
        %v3021 = vsel %vm1933, %v2829, %v2957
        %v3022 = vsel %vm1934, %v2830, %v2958
        %v3023 = vsel %vm1935, %v2831, %v2959
        %v3024 = vsel %vm1936, %v2832, %v2960
        %v3025 = vsel %vm1937, %v2833, %v2961
        %v3026 = vsel %vm1938, %v2834, %v2962
        %v3027 = vsel %vm1939, %v2835, %v2963
        %v3028 = vsel %vm1940, %v2836, %v2964
        %v3029 = vsel %vm1941, %v2837, %v2965
        %v3030 = vsel %vm1942, %v2838, %v2966
        %v3031 = vsel %vm1943, %v2839, %v2967
        %v3032 = vsel %vm1944, %v2840, %v2968
        %v3033 = vsel %vm1945, %v2841, %v2969
        %v3034 = vsel %vm1946, %v2842, %v2970
        %v3035 = vsel %vm1947, %v2843, %v2971
        %v3036 = vsel %vm1948, %v2844, %v2972
        %v3037 = vsel %vm1949, %v2845, %v2973
        %v3038 = vsel %vm1950, %v2846, %v2974
        %v3039 = vsel %vm1951, %v2847, %v2975
        %v3040 = vsel %vm1952, %v2848, %v2976
        %v3041 = vsel %vm1953, %v2849, %v2977
        %v3042 = vsel %vm1954, %v2850, %v2978
        %v3043 = vsel %vm1955, %v2851, %v2979
        %v3044 = vsel %vm1956, %v2852, %v2980
        %v3045 = vsel %vm1957, %v2853, %v2981
        %v3046 = vsel %vm1958, %v2854, %v2982
        %v3047 = vsel %vm1959, %v2855, %v2983
        %v3048 = vsel %vm1960, %v2856, %v2984
        %v3049 = vsel %vm1961, %v2857, %v2985
        %v3050 = vsel %vm1962, %v2858, %v2986
        %v3051 = vsel %vm1963, %v2859, %v2987
        %v3052 = vsel %vm1964, %v2860, %v2988
        %v3053 = vsel %vm1965, %v2861, %v2989
        %v3054 = vsel %vm1966, %v2862, %v2990
        %v3055 = vsel %vm1967, %v2863, %v2991
        %v3056 = vsel %vm1968, %v2864, %v2992
        %v3057 = vsel %vm1969, %v2865, %v2993
        %v3058 = vsel %vm1970, %v2866, %v2994
        %v3059 = vsel %vm1971, %v2867, %v2995
        %v3060 = vsel %vm1972, %v2868, %v2996
        %v3061 = vsel %vm1973, %v2869, %v2997
        %v3062 = vsel %vm1974, %v2870, %v2998
        %v3063 = vsel %vm1975, %v2871, %v2999
        %v3064 = vsel %vm1976, %v2872, %v3000
        %v3065 = vsel %vm1977, %v2873, %v3001
        %v3066 = vsel %vm1978, %v2874, %v3002
        %v3067 = vsel %vm1979, %v2875, %v3003
        %v3068 = vsel %vm1980, %v2876, %v3004
        %vm3069 = vmor %vm2045, %vm2109
        %vm3070 = vmor %vm2046, %vm2110
        %vm3071 = vmor %vm2047, %vm2111
        %vm3072 = vmor %vm2048, %vm2112
        %vm3073 = vmor %vm2049, %vm2113
        %vm3074 = vmor %vm2050, %vm2114
        %vm3075 = vmor %vm2051, %vm2115
        %vm3076 = vmor %vm2052, %vm2116
        %vm3077 = vmor %vm2053, %vm2117
        %vm3078 = vmor %vm2054, %vm2118
        %vm3079 = vmor %vm2055, %vm2119
        %vm3080 = vmor %vm2056, %vm2120
        %vm3081 = vmor %vm2057, %vm2121
        %vm3082 = vmor %vm2058, %vm2122
        %vm3083 = vmor %vm2059, %vm2123
        %vm3084 = vmor %vm2060, %vm2124
        %vm3085 = vmor %vm2061, %vm2125
        %vm3086 = vmor %vm2062, %vm2126
        %vm3087 = vmor %vm2063, %vm2127
        %vm3088 = vmor %vm2064, %vm2128
        %vm3089 = vmor %vm2065, %vm2129
        %vm3090 = vmor %vm2066, %vm2130
        %vm3091 = vmor %vm2067, %vm2131
        %vm3092 = vmor %vm2068, %vm2132
        %vm3093 = vmor %vm2069, %vm2133
        %vm3094 = vmor %vm2070, %vm2134
        %vm3095 = vmor %vm2071, %vm2135
        %vm3096 = vmor %vm2072, %vm2136
        %vm3097 = vmor %vm2073, %vm2137
        %vm3098 = vmor %vm2074, %vm2138
        %vm3099 = vmor %vm2075, %vm2139
        %vm3100 = vmor %vm2076, %vm2140
        %vm3101 = vmor %vm2077, %vm2141
        %vm3102 = vmor %vm2078, %vm2142
        %vm3103 = vmor %vm2079, %vm2143
        %vm3104 = vmor %vm2080, %vm2144
        %vm3105 = vmor %vm2081, %vm2145
        %vm3106 = vmor %vm2082, %vm2146
        %vm3107 = vmor %vm2083, %vm2147
        %vm3108 = vmor %vm2084, %vm2148
        %vm3109 = vmor %vm2085, %vm2149
        %vm3110 = vmor %vm2086, %vm2150
        %vm3111 = vmor %vm2087, %vm2151
        %vm3112 = vmor %vm2088, %vm2152
        %vm3113 = vmor %vm2089, %vm2153
        %vm3114 = vmor %vm2090, %vm2154
        %vm3115 = vmor %vm2091, %vm2155
        %vm3116 = vmor %vm2092, %vm2156
        %vm3117 = vmor %vm2093, %vm2157
        %vm3118 = vmor %vm2094, %vm2158
        %vm3119 = vmor %vm2095, %vm2159
        %vm3120 = vmor %vm2096, %vm2160
        %vm3121 = vmor %vm2097, %vm2161
        %vm3122 = vmor %vm2098, %vm2162
        %vm3123 = vmor %vm2099, %vm2163
        %vm3124 = vmor %vm2100, %vm2164
        %vm3125 = vmor %vm2101, %vm2165
        %vm3126 = vmor %vm2102, %vm2166
        %vm3127 = vmor %vm2103, %vm2167
        %vm3128 = vmor %vm2104, %vm2168
        %vm3129 = vmor %vm2105, %vm2169
        %vm3130 = vmor %vm2106, %vm2170
        %vm3131 = vmor %vm2107, %vm2171
        %vm3132 = vmor %vm2108, %vm2172
        %v3133 = vsub.f32 0.0, %v596
        %v3134 = vsub.f32 0.0, %v598
        %v3135 = vsub.f32 0.0, %v602
        %v3136 = vsub.f32 0.0, %v604
        %v3137 = vsub.f32 0.0, %v608
        %v3138 = vsub.f32 0.0, %v610
        %v3139 = vsub.f32 0.0, %v614
        %v3140 = vsub.f32 0.0, %v616
        %v3141 = vsub.f32 0.0, %v620
        %v3142 = vsub.f32 0.0, %v622
        %v3143 = vsub.f32 0.0, %v626
        %v3144 = vsub.f32 0.0, %v628
        %v3145 = vsub.f32 0.0, %v632
        %v3146 = vsub.f32 0.0, %v634
        %v3147 = vsub.f32 0.0, %v638
        %v3148 = vsub.f32 0.0, %v640
        %v3149 = vsub.f32 0.0, %v644
        %v3150 = vsub.f32 0.0, %v646
        %v3151 = vsub.f32 0.0, %v650
        %v3152 = vsub.f32 0.0, %v652
        %v3153 = vsub.f32 0.0, %v656
        %v3154 = vsub.f32 0.0, %v658
        %v3155 = vsub.f32 0.0, %v662
        %v3156 = vsub.f32 0.0, %v664
        %v3157 = vsub.f32 0.0, %v668
        %v3158 = vsub.f32 0.0, %v670
        %v3159 = vsub.f32 0.0, %v674
        %v3160 = vsub.f32 0.0, %v676
        %v3161 = vsub.f32 0.0, %v680
        %v3162 = vsub.f32 0.0, %v682
        %v3163 = vsub.f32 0.0, %v686
        %v3164 = vsub.f32 0.0, %v688
        %v3165 = vsub.f32 0.0, %v692
        %v3166 = vsub.f32 0.0, %v694
        %v3167 = vsub.f32 0.0, %v698
        %v3168 = vsub.f32 0.0, %v700
        %v3169 = vsub.f32 0.0, %v704
        %v3170 = vsub.f32 0.0, %v706
        %v3171 = vsub.f32 0.0, %v710
        %v3172 = vsub.f32 0.0, %v712
        %v3173 = vsub.f32 0.0, %v716
        %v3174 = vsub.f32 0.0, %v718
        %v3175 = vsub.f32 0.0, %v722
        %v3176 = vsub.f32 0.0, %v724
        %v3177 = vsub.f32 0.0, %v728
        %v3178 = vsub.f32 0.0, %v730
        %v3179 = vsub.f32 0.0, %v734
        %v3180 = vsub.f32 0.0, %v736
        %v3181 = vsub.f32 0.0, %v740
        %v3182 = vsub.f32 0.0, %v742
        %v3183 = vsub.f32 0.0, %v746
        %v3184 = vsub.f32 0.0, %v748
        %v3185 = vsub.f32 0.0, %v752
        %v3186 = vsub.f32 0.0, %v754
        %v3187 = vsub.f32 0.0, %v758
        %v3188 = vsub.f32 0.0, %v760
        %v3189 = vsub.f32 0.0, %v764
        %v3190 = vsub.f32 0.0, %v766
        %v3191 = vsub.f32 0.0, %v770
        %v3192 = vsub.f32 0.0, %v772
        %v3193 = vsub.f32 0.0, %v776
        %v3194 = vsub.f32 0.0, %v778
        %v3195 = vsub.f32 0.0, %v782
        %v3196 = vsub.f32 0.0, %v784
        %v3197 = vmul.f32 %v3133, 1.442695
        %v3198 = vpow.pop %v3197
        %v3199 = vmul.f32 %v3134, 1.442695
        %v3200 = vpow.pop %v3199
        %v3201 = vmul.f32 %v3135, 1.442695
        %v3202 = vpow.pop %v3201
        %v3203 = vmul.f32 %v3136, 1.442695
        %v3204 = vpow.pop %v3203
        %v3205 = vmul.f32 %v3137, 1.442695
        %v3206 = vpow.pop %v3205
        %v3207 = vmul.f32 %v3138, 1.442695
        %v3208 = vpow.pop %v3207
        %v3209 = vmul.f32 %v3139, 1.442695
        %v3210 = vpow.pop %v3209
        %v3211 = vmul.f32 %v3140, 1.442695
        %v3212 = vpow.pop %v3211
        %v3213 = vmul.f32 %v3141, 1.442695
        %v3214 = vpow.pop %v3213
        %v3215 = vmul.f32 %v3142, 1.442695
        %v3216 = vpow.pop %v3215
        %v3217 = vmul.f32 %v3143, 1.442695
        %v3218 = vpow.pop %v3217
        %v3219 = vmul.f32 %v3144, 1.442695
        %v3220 = vpow.pop %v3219
        %v3221 = vmul.f32 %v3145, 1.442695
        %v3222 = vpow.pop %v3221
        %v3223 = vmul.f32 %v3146, 1.442695
        %v3224 = vpow.pop %v3223
        %v3225 = vmul.f32 %v3147, 1.442695
        %v3226 = vpow.pop %v3225
        %v3227 = vmul.f32 %v3148, 1.442695
        %v3228 = vpow.pop %v3227
        %v3229 = vmul.f32 %v3149, 1.442695
        %v3230 = vpow.pop %v3229
        %v3231 = vmul.f32 %v3150, 1.442695
        %v3232 = vpow.pop %v3231
        %v3233 = vmul.f32 %v3151, 1.442695
        %v3234 = vpow.pop %v3233
        %v3235 = vmul.f32 %v3152, 1.442695
        %v3236 = vpow.pop %v3235
        %v3237 = vmul.f32 %v3153, 1.442695
        %v3238 = vpow.pop %v3237
        %v3239 = vmul.f32 %v3154, 1.442695
        %v3240 = vpow.pop %v3239
        %v3241 = vmul.f32 %v3155, 1.442695
        %v3242 = vpow.pop %v3241
        %v3243 = vmul.f32 %v3156, 1.442695
        %v3244 = vpow.pop %v3243
        %v3245 = vmul.f32 %v3157, 1.442695
        %v3246 = vpow.pop %v3245
        %v3247 = vmul.f32 %v3158, 1.442695
        %v3248 = vpow.pop %v3247
        %v3249 = vmul.f32 %v3159, 1.442695
        %v3250 = vpow.pop %v3249
        %v3251 = vmul.f32 %v3160, 1.442695
        %v3252 = vpow.pop %v3251
        %v3253 = vmul.f32 %v3161, 1.442695
        %v3254 = vpow.pop %v3253
        %v3255 = vmul.f32 %v3162, 1.442695
        %v3256 = vpow.pop %v3255
        %v3257 = vmul.f32 %v3163, 1.442695
        %v3258 = vpow.pop %v3257
        %v3259 = vmul.f32 %v3164, 1.442695
        %v3260 = vpow.pop %v3259
        %v3261 = vmul.f32 %v3165, 1.442695
        %v3262 = vpow.pop %v3261
        %v3263 = vmul.f32 %v3166, 1.442695
        %v3264 = vpow.pop %v3263
        %v3265 = vmul.f32 %v3167, 1.442695
        %v3266 = vpow.pop %v3265
        %v3267 = vmul.f32 %v3168, 1.442695
        %v3268 = vpow.pop %v3267
        %v3269 = vmul.f32 %v3169, 1.442695
        %v3270 = vpow.pop %v3269
        %v3271 = vmul.f32 %v3170, 1.442695
        %v3272 = vpow.pop %v3271
        %v3273 = vmul.f32 %v3171, 1.442695
        %v3274 = vpow.pop %v3273
        %v3275 = vmul.f32 %v3172, 1.442695
        %v3276 = vpow.pop %v3275
        %v3277 = vmul.f32 %v3173, 1.442695
        %v3278 = vpow.pop %v3277
        %v3279 = vmul.f32 %v3174, 1.442695
        %v3280 = vpow.pop %v3279
        %v3281 = vmul.f32 %v3175, 1.442695
        %v3282 = vpow.pop %v3281
        %v3283 = vmul.f32 %v3176, 1.442695
        %v3284 = vpow.pop %v3283
        %v3285 = vmul.f32 %v3177, 1.442695
        %v3286 = vpow.pop %v3285
        %v3287 = vmul.f32 %v3178, 1.442695
        %v3288 = vpow.pop %v3287
        %v3289 = vmul.f32 %v3179, 1.442695
        %v3290 = vpow.pop %v3289
        %v3291 = vmul.f32 %v3180, 1.442695
        %v3292 = vpow.pop %v3291
        %v3293 = vmul.f32 %v3181, 1.442695
        %v3294 = vpow.pop %v3293
        %v3295 = vmul.f32 %v3182, 1.442695
        %v3296 = vpow.pop %v3295
        %v3297 = vmul.f32 %v3183, 1.442695
        %v3298 = vpow.pop %v3297
        %v3299 = vmul.f32 %v3184, 1.442695
        %v3300 = vpow.pop %v3299
        %v3301 = vmul.f32 %v3185, 1.442695
        %v3302 = vpow.pop %v3301
        %v3303 = vmul.f32 %v3186, 1.442695
        %v3304 = vpow.pop %v3303
        %v3305 = vmul.f32 %v3187, 1.442695
        %v3306 = vpow.pop %v3305
        %v3307 = vmul.f32 %v3188, 1.442695
        %v3308 = vpow.pop %v3307
        %v3309 = vmul.f32 %v3189, 1.442695
        %v3310 = vpow.pop %v3309
        %v3311 = vmul.f32 %v3190, 1.442695
        %v3312 = vpow.pop %v3311
        %v3313 = vmul.f32 %v3191, 1.442695
        %v3314 = vpow.pop %v3313
        %v3315 = vmul.f32 %v3192, 1.442695
        %v3316 = vpow.pop %v3315
        %v3317 = vmul.f32 %v3193, 1.442695
        %v3318 = vpow.pop %v3317
        %v3319 = vmul.f32 %v3194, 1.442695
        %v3320 = vpow.pop %v3319
        %v3321 = vmul.f32 %v3195, 1.442695
        %v3322 = vpow.pop %v3321
        %v3323 = vmul.f32 %v3196, 1.442695
        %v3324 = vpow.pop %v3323
        %v3325 = vadd.f32 %v3198, 1.0
        %v3326 = vadd.f32 %v3200, 1.0
        %v3327 = vadd.f32 %v3202, 1.0
        %v3328 = vadd.f32 %v3204, 1.0
        %v3329 = vadd.f32 %v3206, 1.0
        %v3330 = vadd.f32 %v3208, 1.0
        %v3331 = vadd.f32 %v3210, 1.0
        %v3332 = vadd.f32 %v3212, 1.0
        %v3333 = vadd.f32 %v3214, 1.0
        %v3334 = vadd.f32 %v3216, 1.0
        %v3335 = vadd.f32 %v3218, 1.0
        %v3336 = vadd.f32 %v3220, 1.0
        %v3337 = vadd.f32 %v3222, 1.0
        %v3338 = vadd.f32 %v3224, 1.0
        %v3339 = vadd.f32 %v3226, 1.0
        %v3340 = vadd.f32 %v3228, 1.0
        %v3341 = vadd.f32 %v3230, 1.0
        %v3342 = vadd.f32 %v3232, 1.0
        %v3343 = vadd.f32 %v3234, 1.0
        %v3344 = vadd.f32 %v3236, 1.0
        %v3345 = vadd.f32 %v3238, 1.0
        %v3346 = vadd.f32 %v3240, 1.0
        %v3347 = vadd.f32 %v3242, 1.0
        %v3348 = vadd.f32 %v3244, 1.0
        %v3349 = vadd.f32 %v3246, 1.0
        %v3350 = vadd.f32 %v3248, 1.0
        %v3351 = vadd.f32 %v3250, 1.0
        %v3352 = vadd.f32 %v3252, 1.0
        %v3353 = vadd.f32 %v3254, 1.0
        %v3354 = vadd.f32 %v3256, 1.0
        %v3355 = vadd.f32 %v3258, 1.0
        %v3356 = vadd.f32 %v3260, 1.0
        %v3357 = vadd.f32 %v3262, 1.0
        %v3358 = vadd.f32 %v3264, 1.0
        %v3359 = vadd.f32 %v3266, 1.0
        %v3360 = vadd.f32 %v3268, 1.0
        %v3361 = vadd.f32 %v3270, 1.0
        %v3362 = vadd.f32 %v3272, 1.0
        %v3363 = vadd.f32 %v3274, 1.0
        %v3364 = vadd.f32 %v3276, 1.0
        %v3365 = vadd.f32 %v3278, 1.0
        %v3366 = vadd.f32 %v3280, 1.0
        %v3367 = vadd.f32 %v3282, 1.0
        %v3368 = vadd.f32 %v3284, 1.0
        %v3369 = vadd.f32 %v3286, 1.0
        %v3370 = vadd.f32 %v3288, 1.0
        %v3371 = vadd.f32 %v3290, 1.0
        %v3372 = vadd.f32 %v3292, 1.0
        %v3373 = vadd.f32 %v3294, 1.0
        %v3374 = vadd.f32 %v3296, 1.0
        %v3375 = vadd.f32 %v3298, 1.0
        %v3376 = vadd.f32 %v3300, 1.0
        %v3377 = vadd.f32 %v3302, 1.0
        %v3378 = vadd.f32 %v3304, 1.0
        %v3379 = vadd.f32 %v3306, 1.0
        %v3380 = vadd.f32 %v3308, 1.0
        %v3381 = vadd.f32 %v3310, 1.0
        %v3382 = vadd.f32 %v3312, 1.0
        %v3383 = vadd.f32 %v3314, 1.0
        %v3384 = vadd.f32 %v3316, 1.0
        %v3385 = vadd.f32 %v3318, 1.0
        %v3386 = vadd.f32 %v3320, 1.0
        %v3387 = vadd.f32 %v3322, 1.0
        %v3388 = vadd.f32 %v3324, 1.0
        %v3389 = vsel %vm3069, %v3198, %v3325
        %v3390 = vsel %vm3070, %v3200, %v3326
        %v3391 = vsel %vm3071, %v3202, %v3327
        %v3392 = vsel %vm3072, %v3204, %v3328
        %v3393 = vsel %vm3073, %v3206, %v3329
        %v3394 = vsel %vm3074, %v3208, %v3330
        %v3395 = vsel %vm3075, %v3210, %v3331
        %v3396 = vsel %vm3076, %v3212, %v3332
        %v3397 = vsel %vm3077, %v3214, %v3333
        %v3398 = vsel %vm3078, %v3216, %v3334
        %v3399 = vsel %vm3079, %v3218, %v3335
        %v3400 = vsel %vm3080, %v3220, %v3336
        %v3401 = vsel %vm3081, %v3222, %v3337
        %v3402 = vsel %vm3082, %v3224, %v3338
        %v3403 = vsel %vm3083, %v3226, %v3339
        %v3404 = vsel %vm3084, %v3228, %v3340
        %v3405 = vsel %vm3085, %v3230, %v3341
        %v3406 = vsel %vm3086, %v3232, %v3342
        %v3407 = vsel %vm3087, %v3234, %v3343
        %v3408 = vsel %vm3088, %v3236, %v3344
        %v3409 = vsel %vm3089, %v3238, %v3345
        %v3410 = vsel %vm3090, %v3240, %v3346
        %v3411 = vsel %vm3091, %v3242, %v3347
        %v3412 = vsel %vm3092, %v3244, %v3348
        %v3413 = vsel %vm3093, %v3246, %v3349
        %v3414 = vsel %vm3094, %v3248, %v3350
        %v3415 = vsel %vm3095, %v3250, %v3351
        %v3416 = vsel %vm3096, %v3252, %v3352
        %v3417 = vsel %vm3097, %v3254, %v3353
        %v3418 = vsel %vm3098, %v3256, %v3354
        %v3419 = vsel %vm3099, %v3258, %v3355
        %v3420 = vsel %vm3100, %v3260, %v3356
        %v3421 = vsel %vm3101, %v3262, %v3357
        %v3422 = vsel %vm3102, %v3264, %v3358
        %v3423 = vsel %vm3103, %v3266, %v3359
        %v3424 = vsel %vm3104, %v3268, %v3360
        %v3425 = vsel %vm3105, %v3270, %v3361
        %v3426 = vsel %vm3106, %v3272, %v3362
        %v3427 = vsel %vm3107, %v3274, %v3363
        %v3428 = vsel %vm3108, %v3276, %v3364
        %v3429 = vsel %vm3109, %v3278, %v3365
        %v3430 = vsel %vm3110, %v3280, %v3366
        %v3431 = vsel %vm3111, %v3282, %v3367
        %v3432 = vsel %vm3112, %v3284, %v3368
        %v3433 = vsel %vm3113, %v3286, %v3369
        %v3434 = vsel %vm3114, %v3288, %v3370
        %v3435 = vsel %vm3115, %v3290, %v3371
        %v3436 = vsel %vm3116, %v3292, %v3372
        %v3437 = vsel %vm3117, %v3294, %v3373
        %v3438 = vsel %vm3118, %v3296, %v3374
        %v3439 = vsel %vm3119, %v3298, %v3375
        %v3440 = vsel %vm3120, %v3300, %v3376
        %v3441 = vsel %vm3121, %v3302, %v3377
        %v3442 = vsel %vm3122, %v3304, %v3378
        %v3443 = vsel %vm3123, %v3306, %v3379
        %v3444 = vsel %vm3124, %v3308, %v3380
        %v3445 = vsel %vm3125, %v3310, %v3381
        %v3446 = vsel %vm3126, %v3312, %v3382
        %v3447 = vsel %vm3127, %v3314, %v3383
        %v3448 = vsel %vm3128, %v3316, %v3384
        %v3449 = vsel %vm3129, %v3318, %v3385
        %v3450 = vsel %vm3130, %v3320, %v3386
        %v3451 = vsel %vm3131, %v3322, %v3387
        %v3452 = vsel %vm3132, %v3324, %v3388
        %v3453 = vrcp.pop %v3389
        %v3454 = vrcp.pop %v3390
        %v3455 = vrcp.pop %v3391
        %v3456 = vrcp.pop %v3392
        %v3457 = vrcp.pop %v3393
        %v3458 = vrcp.pop %v3394
        %v3459 = vrcp.pop %v3395
        %v3460 = vrcp.pop %v3396
        %v3461 = vrcp.pop %v3397
        %v3462 = vrcp.pop %v3398
        %v3463 = vrcp.pop %v3399
        %v3464 = vrcp.pop %v3400
        %v3465 = vrcp.pop %v3401
        %v3466 = vrcp.pop %v3402
        %v3467 = vrcp.pop %v3403
        %v3468 = vrcp.pop %v3404
        %v3469 = vrcp.pop %v3405
        %v3470 = vrcp.pop %v3406
        %v3471 = vrcp.pop %v3407
        %v3472 = vrcp.pop %v3408
        %v3473 = vrcp.pop %v3409
        %v3474 = vrcp.pop %v3410
        %v3475 = vrcp.pop %v3411
        %v3476 = vrcp.pop %v3412
        %v3477 = vrcp.pop %v3413
        %v3478 = vrcp.pop %v3414
        %v3479 = vrcp.pop %v3415
        %v3480 = vrcp.pop %v3416
        %v3481 = vrcp.pop %v3417
        %v3482 = vrcp.pop %v3418
        %v3483 = vrcp.pop %v3419
        %v3484 = vrcp.pop %v3420
        %v3485 = vrcp.pop %v3421
        %v3486 = vrcp.pop %v3422
        %v3487 = vrcp.pop %v3423
        %v3488 = vrcp.pop %v3424
        %v3489 = vrcp.pop %v3425
        %v3490 = vrcp.pop %v3426
        %v3491 = vrcp.pop %v3427
        %v3492 = vrcp.pop %v3428
        %v3493 = vrcp.pop %v3429
        %v3494 = vrcp.pop %v3430
        %v3495 = vrcp.pop %v3431
        %v3496 = vrcp.pop %v3432
        %v3497 = vrcp.pop %v3433
        %v3498 = vrcp.pop %v3434
        %v3499 = vrcp.pop %v3435
        %v3500 = vrcp.pop %v3436
        %v3501 = vrcp.pop %v3437
        %v3502 = vrcp.pop %v3438
        %v3503 = vrcp.pop %v3439
        %v3504 = vrcp.pop %v3440
        %v3505 = vrcp.pop %v3441
        %v3506 = vrcp.pop %v3442
        %v3507 = vrcp.pop %v3443
        %v3508 = vrcp.pop %v3444
        %v3509 = vrcp.pop %v3445
        %v3510 = vrcp.pop %v3446
        %v3511 = vrcp.pop %v3447
        %v3512 = vrcp.pop %v3448
        %v3513 = vrcp.pop %v3449
        %v3514 = vrcp.pop %v3450
        %v3515 = vrcp.pop %v3451
        %v3516 = vrcp.pop %v3452
        %v3517 = vmul.f32 %v3453, %v2749
        %v3518 = vmul.f32 %v3454, %v2750
        %v3519 = vmul.f32 %v3455, %v2751
        %v3520 = vmul.f32 %v3456, %v2752
        %v3521 = vmul.f32 %v3457, %v2753
        %v3522 = vmul.f32 %v3458, %v2754
        %v3523 = vmul.f32 %v3459, %v2755
        %v3524 = vmul.f32 %v3460, %v2756
        %v3525 = vmul.f32 %v3461, %v2757
        %v3526 = vmul.f32 %v3462, %v2758
        %v3527 = vmul.f32 %v3463, %v2759
        %v3528 = vmul.f32 %v3464, %v2760
        %v3529 = vmul.f32 %v3465, %v2761
        %v3530 = vmul.f32 %v3466, %v2762
        %v3531 = vmul.f32 %v3467, %v2763
        %v3532 = vmul.f32 %v3468, %v2764
        %v3533 = vmul.f32 %v3469, %v2765
        %v3534 = vmul.f32 %v3470, %v2766
        %v3535 = vmul.f32 %v3471, %v2767
        %v3536 = vmul.f32 %v3472, %v2768
        %v3537 = vmul.f32 %v3473, %v2769
        %v3538 = vmul.f32 %v3474, %v2770
        %v3539 = vmul.f32 %v3475, %v2771
        %v3540 = vmul.f32 %v3476, %v2772
        %v3541 = vmul.f32 %v3477, %v2773
        %v3542 = vmul.f32 %v3478, %v2774
        %v3543 = vmul.f32 %v3479, %v2775
        %v3544 = vmul.f32 %v3480, %v2776
        %v3545 = vmul.f32 %v3481, %v2777
        %v3546 = vmul.f32 %v3482, %v2778
        %v3547 = vmul.f32 %v3483, %v2779
        %v3548 = vmul.f32 %v3484, %v2780
        %v3549 = vmul.f32 %v3485, %v2781
        %v3550 = vmul.f32 %v3486, %v2782
        %v3551 = vmul.f32 %v3487, %v2783
        %v3552 = vmul.f32 %v3488, %v2784
        %v3553 = vmul.f32 %v3489, %v2785
        %v3554 = vmul.f32 %v3490, %v2786
        %v3555 = vmul.f32 %v3491, %v2787
        %v3556 = vmul.f32 %v3492, %v2788
        %v3557 = vmul.f32 %v3493, %v2789
        %v3558 = vmul.f32 %v3494, %v2790
        %v3559 = vmul.f32 %v3495, %v2791
        %v3560 = vmul.f32 %v3496, %v2792
        %v3561 = vmul.f32 %v3497, %v2793
        %v3562 = vmul.f32 %v3498, %v2794
        %v3563 = vmul.f32 %v3499, %v2795
        %v3564 = vmul.f32 %v3500, %v2796
        %v3565 = vmul.f32 %v3501, %v2797
        %v3566 = vmul.f32 %v3502, %v2798
        %v3567 = vmul.f32 %v3503, %v2799
        %v3568 = vmul.f32 %v3504, %v2800
        %v3569 = vmul.f32 %v3505, %v2801
        %v3570 = vmul.f32 %v3506, %v2802
        %v3571 = vmul.f32 %v3507, %v2803
        %v3572 = vmul.f32 %v3508, %v2804
        %v3573 = vmul.f32 %v3509, %v2805
        %v3574 = vmul.f32 %v3510, %v2806
        %v3575 = vmul.f32 %v3511, %v2807
        %v3576 = vmul.f32 %v3512, %v2808
        %v3577 = vmul.f32 %v3513, %v2809
        %v3578 = vmul.f32 %v3514, %v2810
        %v3579 = vmul.f32 %v3515, %v2811
        %v3580 = vmul.f32 %v3516, %v2812
        %v3581 = vadd.f32 %v3517, %v3005
        %v3582 = vadd.f32 %v3518, %v3006
        %v3583 = vadd.f32 %v3519, %v3007
        %v3584 = vadd.f32 %v3520, %v3008
        %v3585 = vadd.f32 %v3521, %v3009
        %v3586 = vadd.f32 %v3522, %v3010
        %v3587 = vadd.f32 %v3523, %v3011
        %v3588 = vadd.f32 %v3524, %v3012
        %v3589 = vadd.f32 %v3525, %v3013
        %v3590 = vadd.f32 %v3526, %v3014
        %v3591 = vadd.f32 %v3527, %v3015
        %v3592 = vadd.f32 %v3528, %v3016
        %v3593 = vadd.f32 %v3529, %v3017
        %v3594 = vadd.f32 %v3530, %v3018
        %v3595 = vadd.f32 %v3531, %v3019
        %v3596 = vadd.f32 %v3532, %v3020
        %v3597 = vadd.f32 %v3533, %v3021
        %v3598 = vadd.f32 %v3534, %v3022
        %v3599 = vadd.f32 %v3535, %v3023
        %v3600 = vadd.f32 %v3536, %v3024
        %v3601 = vadd.f32 %v3537, %v3025
        %v3602 = vadd.f32 %v3538, %v3026
        %v3603 = vadd.f32 %v3539, %v3027
        %v3604 = vadd.f32 %v3540, %v3028
        %v3605 = vadd.f32 %v3541, %v3029
        %v3606 = vadd.f32 %v3542, %v3030
        %v3607 = vadd.f32 %v3543, %v3031
        %v3608 = vadd.f32 %v3544, %v3032
        %v3609 = vadd.f32 %v3545, %v3033
        %v3610 = vadd.f32 %v3546, %v3034
        %v3611 = vadd.f32 %v3547, %v3035
        %v3612 = vadd.f32 %v3548, %v3036
        %v3613 = vadd.f32 %v3549, %v3037
        %v3614 = vadd.f32 %v3550, %v3038
        %v3615 = vadd.f32 %v3551, %v3039
        %v3616 = vadd.f32 %v3552, %v3040
        %v3617 = vadd.f32 %v3553, %v3041
        %v3618 = vadd.f32 %v3554, %v3042
        %v3619 = vadd.f32 %v3555, %v3043
        %v3620 = vadd.f32 %v3556, %v3044
        %v3621 = vadd.f32 %v3557, %v3045
        %v3622 = vadd.f32 %v3558, %v3046
        %v3623 = vadd.f32 %v3559, %v3047
        %v3624 = vadd.f32 %v3560, %v3048
        %v3625 = vadd.f32 %v3561, %v3049
        %v3626 = vadd.f32 %v3562, %v3050
        %v3627 = vadd.f32 %v3563, %v3051
        %v3628 = vadd.f32 %v3564, %v3052
        %v3629 = vadd.f32 %v3565, %v3053
        %v3630 = vadd.f32 %v3566, %v3054
        %v3631 = vadd.f32 %v3567, %v3055
        %v3632 = vadd.f32 %v3568, %v3056
        %v3633 = vadd.f32 %v3569, %v3057
        %v3634 = vadd.f32 %v3570, %v3058
        %v3635 = vadd.f32 %v3571, %v3059
        %v3636 = vadd.f32 %v3572, %v3060
        %v3637 = vadd.f32 %v3573, %v3061
        %v3638 = vadd.f32 %v3574, %v3062
        %v3639 = vadd.f32 %v3575, %v3063
        %v3640 = vadd.f32 %v3576, %v3064
        %v3641 = vadd.f32 %v3577, %v3065
        %v3642 = vadd.f32 %v3578, %v3066
        %v3643 = vadd.f32 %v3579, %v3067
        %v3644 = vadd.f32 %v3580, %v3068
        %3645 = vst [vmem:[%s188] sm:$0xff] %v3581
        %3646 = vst [vmem:[%s188 + $0x8] sm:$0xff] %v3582
        %3647 = vst [vmem:[%s188 + $0x10] sm:$0xff] %v3583
        %3648 = vst [vmem:[%s188 + $0x18] sm:$0xff] %v3584
        %3649 = vst [vmem:[%s188 + $0x20] sm:$0xff] %v3585
        %3650 = vst [vmem:[%s188 + $0x28] sm:$0xff] %v3586
        %3651 = vst [vmem:[%s188 + $0x30] sm:$0xff] %v3587
        %3652 = vst [vmem:[%s188 + $0x38] sm:$0xff] %v3588
        %3653 = vst [vmem:[%s188 + $0x40] sm:$0xff] %v3589
        %3654 = vst [vmem:[%s188 + $0x48] sm:$0xff] %v3590
        %3655 = vst [vmem:[%s188 + $0x50] sm:$0xff] %v3591
        %3656 = vst [vmem:[%s188 + $0x58] sm:$0xff] %v3592
        %3657 = vst [vmem:[%s188 + $0x60] sm:$0xff] %v3593
        %3658 = vst [vmem:[%s188 + $0x68] sm:$0xff] %v3594
        %3659 = vst [vmem:[%s188 + $0x70] sm:$0xff] %v3595
        %3660 = vst [vmem:[%s188 + $0x78] sm:$0xff] %v3596
        %3661 = vst [vmem:[%s188 + $0x80] sm:$0xff] %v3597
        %3662 = vst [vmem:[%s188 + $0x88] sm:$0xff] %v3598
        %3663 = vst [vmem:[%s188 + $0x90] sm:$0xff] %v3599
        %3664 = vst [vmem:[%s188 + $0x98] sm:$0xff] %v3600
        %3665 = vst [vmem:[%s188 + $0xa0] sm:$0xff] %v3601
        %3666 = vst [vmem:[%s188 + $0xa8] sm:$0xff] %v3602
        %3667 = vst [vmem:[%s188 + $0xb0] sm:$0xff] %v3603
        %3668 = vst [vmem:[%s188 + $0xb8] sm:$0xff] %v3604
        %3669 = vst [vmem:[%s188 + $0xc0] sm:$0xff] %v3605
        %3670 = vst [vmem:[%s188 + $0xc8] sm:$0xff] %v3606
        %3671 = vst [vmem:[%s188 + $0xd0] sm:$0xff] %v3607
        %3672 = vst [vmem:[%s188 + $0xd8] sm:$0xff] %v3608
        %3673 = vst [vmem:[%s188 + $0xe0] sm:$0xff] %v3609
        %3674 = vst [vmem:[%s188 + $0xe8] sm:$0xff] %v3610
        %3675 = vst [vmem:[%s188 + $0xf0] sm:$0xff] %v3611
        %3676 = vst [vmem:[%s188 + $0xf8] sm:$0xff] %v3612
        %3677 = vst [vmem:[%s188 + $0x100] sm:$0xff] %v3613
        %3678 = vst [vmem:[%s188 + $0x108] sm:$0xff] %v3614
        %3679 = vst [vmem:[%s188 + $0x110] sm:$0xff] %v3615
        %3680 = vst [vmem:[%s188 + $0x118] sm:$0xff] %v3616
        %3681 = vst [vmem:[%s188 + $0x120] sm:$0xff] %v3617
        %3682 = vst [vmem:[%s188 + $0x128] sm:$0xff] %v3618
        %3683 = vst [vmem:[%s188 + $0x130] sm:$0xff] %v3619
        %3684 = vst [vmem:[%s188 + $0x138] sm:$0xff] %v3620
        %3685 = vst [vmem:[%s188 + $0x140] sm:$0xff] %v3621
        %3686 = vst [vmem:[%s188 + $0x148] sm:$0xff] %v3622
        %3687 = vst [vmem:[%s188 + $0x150] sm:$0xff] %v3623
        %3688 = vst [vmem:[%s188 + $0x158] sm:$0xff] %v3624
        %3689 = vst [vmem:[%s188 + $0x160] sm:$0xff] %v3625
        %3690 = vst [vmem:[%s188 + $0x168] sm:$0xff] %v3626
        %3691 = vst [vmem:[%s188 + $0x170] sm:$0xff] %v3627
        %3692 = vst [vmem:[%s188 + $0x178] sm:$0xff] %v3628
        %3693 = vst [vmem:[%s188 + $0x180] sm:$0xff] %v3629
        %3694 = vst [vmem:[%s188 + $0x188] sm:$0xff] %v3630
        %3695 = vst [vmem:[%s188 + $0x190] sm:$0xff] %v3631
        %3696 = vst [vmem:[%s188 + $0x198] sm:$0xff] %v3632
        %3697 = vst [vmem:[%s188 + $0x1a0] sm:$0xff] %v3633
        %3698 = vst [vmem:[%s188 + $0x1a8] sm:$0xff] %v3634
        %3699 = vst [vmem:[%s188 + $0x1b0] sm:$0xff] %v3635
        %3700 = vst [vmem:[%s188 + $0x1b8] sm:$0xff] %v3636
        %3701 = vst [vmem:[%s188 + $0x1c0] sm:$0xff] %v3637
        %3702 = vst [vmem:[%s188 + $0x1c8] sm:$0xff] %v3638
        %3703 = vst [vmem:[%s188 + $0x1d0] sm:$0xff] %v3639
        %3704 = vst [vmem:[%s188 + $0x1d8] sm:$0xff] %v3640
        %3705 = vst [vmem:[%s188 + $0x1e0] sm:$0xff] %v3641
        %3706 = vst [vmem:[%s188 + $0x1e8] sm:$0xff] %v3642
        %3707 = vst [vmem:[%s188 + $0x1f0] sm:$0xff] %v3643
        %3708 = vst [vmem:[%s188 + $0x1f8] sm:$0xff] %v3644
        %s3709 = sand.u32 %s109, 1
        %s3710 = scalar_lea.sflag [#allocation3], %s3709
        %s3711 = sand.u32 %s109, 1
        %s3712 = smul.addr %s3711, 512
        %s3713 = scalar_lea.vmem [#allocation2], %s3712
        // Predicated region
        $region33: #{tpu_custom_call.1} parent=31 // pred_check
          %p3714 = pneg %p119
        $region34: #{tpu_custom_call.1} parent=31 // pred_check_branch
          %3716 = sbr.rel (%p3714) target = $region36
        $region35: #{tpu_custom_call.1} parent=31 // pred_region
          %s3717 = smul.u32 2, %s22
          %s3719 = ssub.s32 8192, 8192
          %3720 = vsyncadd %s3710, %s3719
          %s3721 = smul.addr %s21, 64
          %s3722 = sadd.s32 %s3717, %s3721
          %s3723 = smul.addr %s3722, 128
          %s3724 = scalar_lea.hbm %s3, %s3723
          %s3725 = sshll.u32 %s3713, 4
          %s3726 = int_to_ptr.vmem [resolvable:$true] %s3725
          %3731 = dma.vmem_to_hbm [thread:$0]  %s3726, 8192, %s3724, %s3710, 256, 256, 16
        $region36: #{tpu_custom_call.1} parent=31 // pred_fallthru
          _
      $region32: #{tpu_custom_call.1} parent=5 // pred_fallthru
        _
      %p3732 = scmp.le.s32.totalorder 2, %s12
      // Predicated region
      $region37: #{tpu_custom_call.1} parent=5 // pred_check
        %p3733 = pneg %p3732
      $region38: #{tpu_custom_call.1} parent=5 // pred_check_branch
        %3735 = sbr.rel (%p3733) target = $region40
      $region39: #{tpu_custom_call.1} parent=5 // pred_region
        %s3736 = ssub.s32 %s12, 2
        // Predicated region
        $region41: #{tpu_custom_call.1} parent=39 // pred_check
          %p3737 = pneg %p125
        $region42: #{tpu_custom_call.1} parent=39 // pred_check_branch
          %3739 = sbr.rel (%p3737) target = $region44
        $region43: #{tpu_custom_call.1} parent=39 // pred_region
          %s3740 = sand.u32 %s110, 1
          %s3741 = scalar_lea.sflag [#allocation3], %s3740
          %s3742 = sand.u32 %s110, 1
          %s3743 = smul.addr %s3742, 512
          %s3744 = scalar_lea.vmem [#allocation2], %s3743
          %3745 = dma.done %s3741, 8192
        $region44: #{tpu_custom_call.1} parent=39 // pred_fallthru
          _
      $region40: #{tpu_custom_call.1} parent=5 // pred_fallthru
        _
    $region6: #{tpu_custom_call.1} parent=1 // loop_footer
      %s16 = sadd.s32 1, %s12
    $region7: #{tpu_custom_call.1} parent=1 // loop_footer_branch
      %11 = sbr.rel target = $region3
    $region8: #{tpu_custom_call.1} parent=1 // loop_exit
      _
    %3746 = vsyncpa [#allocation3], 1
    %s3747 = scalar_lea.sflag [#allocation3], 1
    %3748 = vsyncpa %s3747, 1

</llo_original>
